<compile_context>
chip_gen: v5e
topology: v5e:2x2
jax: 0.10.0
libtpu: 0.0.40
codegen_flags: <defaults>
</compile_context>

<pallas_src>
import jax
import jax.numpy as jnp
from jax import lax
from jax.experimental import pallas as pl
from jax.experimental.pallas import tpu as pltpu


# ---------------------------------------------------------------------------
# Host-side constant helpers (passed to the kernel as tiny inputs)
# ---------------------------------------------------------------------------

def _interleave_mats(l_in):
    """0/1 permutation matrices interleaving even/odd deconv phases (bf16, exact)."""
    r = jnp.arange(2 * l_in, dtype=jnp.int32)[:, None]
    c = jnp.arange(l_in, dtype=jnp.int32)[None, :]
    return ((r == 2 * c).astype(jnp.bfloat16),
            (r == 2 * c + 1).astype(jnp.bfloat16))


def _group_mats(c_out, groups=4):
    """GroupNorm group reduce / broadcast indicator matrices over [even|odd] cols."""
    gs = c_out // groups
    ch = jnp.arange(2 * c_out, dtype=jnp.int32) % c_out
    gm = (ch[:, None] // gs == jnp.arange(groups, dtype=jnp.int32)[None, :])
    gm = gm.astype(jnp.float32)
    return gm, gm.T


def _flip_mat(t):
    """(T,T) time-reversal permutation (bf16, exact): (flip @ v)[r] = v[T-1-r]."""
    i = jnp.arange(t, dtype=jnp.int32)
    return (i[None, :] == (t - 1 - i)[:, None]).astype(jnp.bfloat16)


def _bcast_spec(shape):
    nd = len(shape)
    return pl.BlockSpec(shape, lambda b, _nd=nd: (0,) * _nd)


# ---------------------------------------------------------------------------
# In-kernel helper: ConvTranspose1d(k=4,s=2,p=1) + GroupNorm(4) + ReLU, in place
# on the zero-haloed activation scratch (input rows 1..l_in -> output rows 1..2*l_in)
# ---------------------------------------------------------------------------

def _deconv_gn_relu(act_ref, l_in, w_ref, b2_ref, g2_ref, a2_ref,
                    gm_ref, gt_ref, pe_ref, po_ref, eps=1e-5):
    c_in = w_ref.shape[0] // 3
    c2 = w_ref.shape[1]
    c_out = c2 // 2
    groups = gm_ref.shape[1]
    gs = c_out // groups

    # x[m-1] / x[m] / x[m+1] are plain offset ref loads from the zero-haloed scratch
    # (row 0 and row l_in+1 are guaranteed zero) -- no in-register sublane shifts.
    prev = act_ref[pl.ds(0, l_in), 0:c_in].astype(jnp.bfloat16)
    cur = act_ref[pl.ds(1, l_in), 0:c_in].astype(jnp.bfloat16)
    nxt = act_ref[pl.ds(2, l_in), 0:c_in].astype(jnp.bfloat16)
    # y = [even | odd] output phases, three accumulated bf16 MXU dots against the
    # packed tap row-blocks (y_even = x@W1 + x_prev@W3 ; y_odd = x@W2 + x_next@W0).
    y = (jnp.dot(prev, w_ref[0:c_in, :], preferred_element_type=jnp.float32)
         + jnp.dot(cur, w_ref[c_in:2 * c_in, :], preferred_element_type=jnp.float32)
         + jnp.dot(nxt, w_ref[2 * c_in:3 * c_in, :], preferred_element_type=jnp.float32)
         + b2_ref[...])                                               # (l_in, 2*c_out)

    # GroupNorm: joint statistics over both phase streams == stats of the interleaved
    # sequence.  Group reduce/broadcast via tiny precomputed 0/1 indicator matmuls
    # (single cross-sublane reduction, no per-group lane slicing); two-pass variance.
    n = 2.0 * l_in * gs
    gm = gm_ref[...]
    gt = gt_ref[...]
    mu_c = jnp.dot(jnp.dot(jnp.sum(y, axis=0, keepdims=True), gm) / n, gt)
    d = y - mu_c
    var_g = jnp.dot(jnp.sum(d * d, axis=0, keepdims=True), gm) / n
    inv_c = jnp.dot(lax.rsqrt(var_g + eps), gt)
    yn = jnp.maximum(d * inv_c * g2_ref[...] + a2_ref[...], 0.0).astype(jnp.bfloat16)

    # Interleave phases (z[2m]=even[m], z[2m+1]=odd[m]) with bf16 0/1 permutation
    # matmuls (exact, single-pass MXU), then store the layer output back into the
    # haloed scratch for the next stage.
    z = (jnp.dot(pe_ref[...], yn[:, 0:c_out], preferred_element_type=jnp.float32)
         + jnp.dot(po_ref[...], yn[:, c_out:c2], preferred_element_type=jnp.float32))
    act_ref[pl.ds(1, 2 * l_in), 0:c_out] = z
    return 2 * l_in, c_out


# ---------------------------------------------------------------------------
# The fused kernel (one grid step == one sample)
# ---------------------------------------------------------------------------

def heimdall_kernel(x_ref, wih_ref, bias_ref, whh_ref, flip_ref,
                    w1_ref, b1_ref, g1_ref, a1_ref, gm1_ref, gt1_ref, pe1_ref, po1_ref,
                    w2_ref, b2_ref, g2_ref, a2_ref, gm2_ref, gt2_ref, pe2_ref, po2_ref,
                    w3_ref, b3_ref, g3_ref, a3_ref, gm3_ref, gt3_ref, pe3_ref, po3_ref,
                    wfin_ref, bfin_ref,
                    out_ref,
                    xp_ref, hrec_ref, act_ref):
    T, F = x_ref.shape[1], x_ref.shape[2]
    H = F // 2                      # per-direction hidden size
    H2 = 2 * H                      # fused (fwd || bwd) carry width (== F)
    G8 = 8 * H                      # gate-spread width per direction block
    lout = out_ref.shape[2]         # lane-padded output length (multiple of 128)

    # Zero the haloed activation scratch every grid step (the scratch persists across
    # grid iterations and its halo / padding rows must be zero).
    act_ref[...] = jnp.zeros_like(act_ref)

    # ---- 1. Fused bulk LSTM input projection, both directions in ONE bf16 dot ----
    # Column layout: cols [0,8H) fwd gates, cols [8H,16H) bwd gates, each half in the
    # spread order [i_f,i_b,f_f,f_b,g_f,g_b,o_f,o_b] with its direction's slots filled.
    xb = x_ref[0].astype(jnp.bfloat16)                                       # (T, F)
    xp_ref[...] = (jnp.dot(xb, wih_ref[...], preferred_element_type=jnp.float32)
                   + bias_ref[...])

    # ---- 2. Fused fwd+bwd recurrence: one block-diagonal bf16 matmul per step, ----
    #         sliced transcendentals, ONE contiguous carry store per step.
    whh = whh_ref[...]                                                       # (2H, 8H) bf16
    hc = jnp.zeros((1, H2), jnp.float32)                                     # [h_f | h_b]
    cc = jnp.zeros((1, H2), jnp.float32)                                     # [c_f | c_b]
    for t in range(T):                                                       # static unroll
        gates = (xp_ref[pl.ds(t, 1), 0:G8]
                 + xp_ref[pl.ds(T - 1 - t, 1), G8:2 * G8]
                 + jnp.dot(hc.astype(jnp.bfloat16), whh,
                           preferred_element_type=jnp.float32))              # (1, 8H)
        ifg = jax.nn.sigmoid(gates[:, 0:2 * H2])       # [i_f,i_b | f_f,f_b]
        gg = jnp.tanh(gates[:, 2 * H2:3 * H2])         # [g_f,g_b]
        og = jax.nn.sigmoid(gates[:, 3 * H2:4 * H2])   # [o_f,o_b]
        cc = ifg[:, H2:2 * H2] * cc + ifg[:, 0:H2] * gg
        hc = og * jnp.tanh(cc)
        hrec_ref[pl.ds(t, 1), :] = hc                  # single time-major carry store

    # ---- 3. BiLSTM output sequence into haloed scratch rows 1..T: fwd half copied
    #         directly, bwd half time-reversed with one bf16 flip permutation matmul.
    act_ref[pl.ds(1, T), 0:H] = hrec_ref[:, 0:H]
    act_ref[pl.ds(1, T), H:H2] = jnp.dot(
        flip_ref[...], hrec_ref[:, H:H2].astype(jnp.bfloat16),
        preferred_element_type=jnp.float32)

    # ---- 4. Deconv stack, fully VMEM-resident, in place on the haloed scratch ----
    l1, _ = _deconv_gn_relu(act_ref, T, w1_ref, b1_ref, g1_ref, a1_ref,
                            gm1_ref, gt1_ref, pe1_ref, po1_ref)
    l2, _ = _deconv_gn_relu(act_ref, l1, w2_ref, b2_ref, g2_ref, a2_ref,
                            gm2_ref, gt2_ref, pe2_ref, po2_ref)
    l3, cfin = _deconv_gn_relu(act_ref, l2, w3_ref, b3_ref, g3_ref, a3_ref,
                               gm3_ref, gt3_ref, pe3_ref, po3_ref)

    # ---- 5. Final Conv1d(k=12) + sigmoid gating, emitted channels-major (3, lout) ----
    # 12 accumulated trans-B bf16 dots; every window is an offset ref load from the
    # zero-padded scratch, so the lane-padding tail positions (>= 8T-11) are harmless
    # and get cropped in the wrapper.  The HBM store is an unmasked lane-dense (3,128).
    kfin = wfin_ref.shape[0]
    o = jnp.zeros((out_ref.shape[1], lout), jnp.float32) + bfin_ref[...]
    for k in range(kfin):
        wk = wfin_ref[k]                                                     # (3, Cin) bf16
        win = act_ref[pl.ds(1 + k, lout), 0:cfin].astype(jnp.bfloat16)       # (lout, Cin)
        o = o + lax.dot_general(wk, win, (((1,), (1,)), ((), ())),
                                preferred_element_type=jnp.float32)
    sg = jax.nn.sigmoid(o)
    det = sg[0:1, :]
    out_ref[0] = jnp.concatenate([det, sg[1:2, :] * det, sg[2:3, :] * det], axis=0)


# ---------------------------------------------------------------------------
# pallas_call wrapper
# ---------------------------------------------------------------------------

def heimdall_detector_picker(x, params, output_features):
    """x: [B, hidden_features, T'] (NCW, like PyTorch). Returns [B, 3, output_features]."""
    B, F, T = x.shape
    K = 12
    if not (8 * T - K + 1 > output_features):
        raise ValueError('Final shape is shorter than output ... check model!')

    w1, b1, g1, a1 = params['layer1']
    w2, b2, g2, a2 = params['layer2']
    w3, b3, g3, a3 = params['layer3']
    c1 = w1.shape[1] // 2
    c2 = w2.shape[1] // 2
    c3 = w3.shape[1] // 2

    lout_pad = max(128, -(-output_features // 128) * 128)            # lane-dense output
    act_rows = -(-(max(8 * T, lout_pad + K - 1) + 2) // 8) * 8       # data + zero halo/pad
    act_cols = max(128, -(-F // 128) * 128)

    # Constant 0/1 matrices (computed outside the kernel, folded by XLA).
    flip = _flip_mat(T)
    gm1, gt1 = _group_mats(c1); pe1, po1 = _interleave_mats(T)
    gm2, gt2 = _group_mats(c2); pe2, po2 = _interleave_mats(2 * T)
    gm3, gt3 = _group_mats(c3); pe3, po3 = _interleave_mats(4 * T)

    xt = jnp.transpose(x, (0, 2, 1))   # [B, T, F]; only remaining XLA glue (~KBs)

    args = (xt, *params['lstm'], flip,
            w1, b1, g1, a1, gm1, gt1, pe1, po1,
            w2, b2, g2, a2, gm2, gt2, pe2, po2,
            w3, b3, g3, a3, gm3, gt3, pe3, po3,
            params['final_w'], params['final_b'])

    in_specs = [pl.BlockSpec((1, T, F), lambda b: (b, 0, 0))]
    in_specs += [_bcast_spec(a.shape) for a in args[1:]]

    grid_spec = pltpu.PrefetchScalarGridSpec(
        num_scalar_prefetch=0,
        grid=(B,),                                                   # parallel over batch
        in_specs=in_specs,
        out_specs=pl.BlockSpec((1, 3, lout_pad), lambda b: (b, 0, 0)),
        scratch_shapes=[pltpu.VMEM((T, 8 * F), jnp.float32),    # fused gate pre-acts (16H)
                        pltpu.VMEM((T, F), jnp.float32),         # per-step carry (2H)
                        pltpu.VMEM((act_rows, act_cols), jnp.float32)])  # haloed activations

    out = pl.pallas_call(
        heimdall_kernel,
        out_shape=jax.ShapeDtypeStruct((B, 3, lout_pad), jnp.float32),
        grid_spec=grid_spec,
        compiler_params=pltpu.CompilerParams(dimension_semantics=("parallel",)),
    )(*args)
    return out[:, :, :output_features]   # PyTorch crops from the start


# ---------------------------------------------------------------------------
# Deterministic synthetic parameters (mirror PyTorch shapes, pre-packed for the
# kernel's fused layouts).  Real checkpoints must transpose weight_ih/weight_hh and
# pre-sum b_ih + b_hh into the single bias used here.
# ---------------------------------------------------------------------------

def init_params(key, hidden_features, cnn_temporal_dim):
    F = hidden_features
    H = F // 2
    Ct = cnn_temporal_dim
    keys = iter(jax.random.split(key, 32))

    def nrm(shape, scale=0.2):
        return scale * jax.random.normal(next(keys), shape, dtype=jnp.float32)

    # ---- LSTM (PyTorch gate order i,f,g,o; stored transposed for x @ W) ----------
    wih_f = nrm((F, 4 * H)); whh_f = nrm((H, 4 * H)); b_f = nrm((1, 4 * H), 0.1)
    wih_b = nrm((F, 4 * H)); whh_b = nrm((H, 4 * H)); b_b = nrm((1, 4 * H), 0.1)

    def spread(w4, direction):
        # interleaved gate layout [i_f,i_b,f_f,f_b,g_f,g_b,o_f,o_b]
        parts = []
        for q in range(4):
            blk = w4[:, q * H:(q + 1) * H]
            z = jnp.zeros_like(blk)
            parts.extend([blk, z] if direction == 0 else [z, blk])
        return jnp.concatenate(parts, axis=1)

    wih_cat = jnp.concatenate([spread(wih_f, 0), spread(wih_b, 1)],
                              axis=1).astype(jnp.bfloat16)                  # (F, 16H)
    bias_cat = jnp.concatenate([spread(b_f, 0), spread(b_b, 1)], axis=1)    # (1, 16H) f32
    whh_cat = jnp.concatenate([spread(whh_f, 0), spread(whh_b, 1)],
                              axis=0).astype(jnp.bfloat16)                  # (2H, 8H)

    def deconv_layer(cin, cout):
        w = nrm((cin, cout, 4))                    # PyTorch ConvTranspose1d layout
        taps = jnp.transpose(w, (2, 0, 1))         # (K, Cin, Cout)
        z = jnp.zeros((cin, cout), jnp.float32)
        # rows: [x[m-1] | x[m] | x[m+1]] blocks, cols: [even | odd] phases
        wcat = jnp.concatenate([
            jnp.concatenate([taps[3], z], axis=1),
            jnp.concatenate([taps[1], taps[2]], axis=1),
            jnp.concatenate([z, taps[0]], axis=1),
        ], axis=0).astype(jnp.bfloat16)            # (3Cin, 2Cout)
        bias = nrm((1, cout), 0.1)
        gamma = 1.0 + nrm((1, cout), 0.1)
        beta = nrm((1, cout), 0.1)
        dup = lambda v: jnp.concatenate([v, v], axis=1)   # phase-duplicated (1, 2Cout)
        return (wcat, dup(bias), dup(gamma), dup(beta))

    layer1 = deconv_layer(F, F // 2)
    layer2 = deconv_layer(F // 2, Ct)
    layer3 = deconv_layer(Ct, Ct // 2)

    wf = nrm((3, Ct // 2, 12))                           # PyTorch Conv1d (Cout, Cin, K)
    final_w = jnp.transpose(wf, (2, 0, 1)).astype(jnp.bfloat16)   # (K, 3, Cin)
    final_b = nrm((3, 1), 0.1)

    return dict(lstm=(wih_cat, bias_cat, whh_cat), layer1=layer1, layer2=layer2,
                layer3=layer3, final_w=final_w, final_b=final_b)


# ---------------------------------------------------------------------------

if __name__ == "__main__":
    B = 2
    hidden_features = 32      # divisible by 8 (GroupNorm(4, hidden//2))
    cnn_temporal_dim = 16     # encoder temporal dim == channels of transconv2
    output_channels = 3
    output_features = 100     # < 8*T' - 11 = 117, as the module requires
    T = cnn_temporal_dim      # input temporal length T'

    key = jax.random.PRNGKey(0)
    kp, kx = jax.random.split(key)
    params = init_params(kp, hidden_features, cnn_temporal_dim)
    x = 0.5 * jax.random.normal(kx, (B, hidden_features, T), dtype=jnp.float32)

    fwd = jax.jit(heimdall_detector_picker, static_argnums=2)
    out = jax.block_until_ready(fwd(x, params, output_features))
    assert out.shape == (B, output_channels, output_features), out.shape
    assert bool(jnp.all(jnp.isfinite(out)))
    assert bool(jnp.all((out >= 0.0) & (out <= 1.0)))  # sigmoid-gated outputs
    print("KERNEL_OK")
</pallas_src>

<mosaic_0001>
module attributes {stable_mosaic.version = 11 : i64} {
  func.func @heimdall_kernel(%arg0: i32, %arg1: memref<1x16x32xf32, #tpu.memory_space<vmem>>, %arg2: memref<32x256xbf16, #tpu.memory_space<vmem>>, %arg3: memref<1x256xf32, #tpu.memory_space<vmem>>, %arg4: memref<32x128xbf16, #tpu.memory_space<vmem>>, %arg5: memref<16x16xbf16, #tpu.memory_space<vmem>>, %arg6: memref<96x32xbf16, #tpu.memory_space<vmem>>, %arg7: memref<1x32xf32, #tpu.memory_space<vmem>>, %arg8: memref<1x32xf32, #tpu.memory_space<vmem>>, %arg9: memref<1x32xf32, #tpu.memory_space<vmem>>, %arg10: memref<32x4xf32, #tpu.memory_space<vmem>>, %arg11: memref<4x32xf32, #tpu.memory_space<vmem>>, %arg12: memref<32x16xbf16, #tpu.memory_space<vmem>>, %arg13: memref<32x16xbf16, #tpu.memory_space<vmem>>, %arg14: memref<48x32xbf16, #tpu.memory_space<vmem>>, %arg15: memref<1x32xf32, #tpu.memory_space<vmem>>, %arg16: memref<1x32xf32, #tpu.memory_space<vmem>>, %arg17: memref<1x32xf32, #tpu.memory_space<vmem>>, %arg18: memref<32x4xf32, #tpu.memory_space<vmem>>, %arg19: memref<4x32xf32, #tpu.memory_space<vmem>>, %arg20: memref<64x32xbf16, #tpu.memory_space<vmem>>, %arg21: memref<64x32xbf16, #tpu.memory_space<vmem>>, %arg22: memref<48x16xbf16, #tpu.memory_space<vmem>>, %arg23: memref<1x16xf32, #tpu.memory_space<vmem>>, %arg24: memref<1x16xf32, #tpu.memory_space<vmem>>, %arg25: memref<1x16xf32, #tpu.memory_space<vmem>>, %arg26: memref<16x4xf32, #tpu.memory_space<vmem>>, %arg27: memref<4x16xf32, #tpu.memory_space<vmem>>, %arg28: memref<128x64xbf16, #tpu.memory_space<vmem>>, %arg29: memref<128x64xbf16, #tpu.memory_space<vmem>>, %arg30: memref<12x3x8xbf16, #tpu.memory_space<vmem>>, %arg31: memref<3x1xf32, #tpu.memory_space<vmem>>, %arg32: memref<1x3x128xf32, #tpu.memory_space<vmem>>, %arg33: memref<16x256xf32, #tpu.memory_space<vmem>>, %arg34: memref<16x32xf32, #tpu.memory_space<vmem>>, %arg35: memref<144x128xf32, #tpu.memory_space<vmem>>) attributes {dimension_semantics = [#tpu.dimension_semantics<parallel>], iteration_bounds = array<i64: 2>, scalar_prefetch = 0 : i64, scratch_operands = 3 : i64, tpu.core_type = #tpu.core_type<tc>, window_params = [{transform_indices = @transform_0, window_bounds = array<i64: 1, 16, 32>}, {pipeline_mode = #tpu.pipeline_mode<synchronous>, transform_indices = @transform_1, window_bounds = array<i64: 32, 256>}, {pipeline_mode = #tpu.pipeline_mode<synchronous>, transform_indices = @transform_2, window_bounds = array<i64: 1, 256>}, {pipeline_mode = #tpu.pipeline_mode<synchronous>, transform_indices = @transform_3, window_bounds = array<i64: 32, 128>}, {pipeline_mode = #tpu.pipeline_mode<synchronous>, transform_indices = @transform_4, window_bounds = array<i64: 16, 16>}, {pipeline_mode = #tpu.pipeline_mode<synchronous>, transform_indices = @transform_5, window_bounds = array<i64: 96, 32>}, {pipeline_mode = #tpu.pipeline_mode<synchronous>, transform_indices = @transform_6, window_bounds = array<i64: 1, 32>}, {pipeline_mode = #tpu.pipeline_mode<synchronous>, transform_indices = @transform_7, window_bounds = array<i64: 1, 32>}, {pipeline_mode = #tpu.pipeline_mode<synchronous>, transform_indices = @transform_8, window_bounds = array<i64: 1, 32>}, {pipeline_mode = #tpu.pipeline_mode<synchronous>, transform_indices = @transform_9, window_bounds = array<i64: 32, 4>}, {pipeline_mode = #tpu.pipeline_mode<synchronous>, transform_indices = @transform_10, window_bounds = array<i64: 4, 32>}, {pipeline_mode = #tpu.pipeline_mode<synchronous>, transform_indices = @transform_11, window_bounds = array<i64: 32, 16>}, {pipeline_mode = #tpu.pipeline_mode<synchronous>, transform_indices = @transform_12, window_bounds = array<i64: 32, 16>}, {pipeline_mode = #tpu.pipeline_mode<synchronous>, transform_indices = @transform_13, window_bounds = array<i64: 48, 32>}, {pipeline_mode = #tpu.pipeline_mode<synchronous>, transform_indices = @transform_14, window_bounds = array<i64: 1, 32>}, {pipeline_mode = #tpu.pipeline_mode<synchronous>, transform_indices = @transform_15, window_bounds = array<i64: 1, 32>}, {pipeline_mode = #tpu.pipeline_mode<synchronous>, transform_indices = @transform_16, window_bounds = array<i64: 1, 32>}, {pipeline_mode = #tpu.pipeline_mode<synchronous>, transform_indices = @transform_17, window_bounds = array<i64: 32, 4>}, {pipeline_mode = #tpu.pipeline_mode<synchronous>, transform_indices = @transform_18, window_bounds = array<i64: 4, 32>}, {pipeline_mode = #tpu.pipeline_mode<synchronous>, transform_indices = @transform_19, window_bounds = array<i64: 64, 32>}, {pipeline_mode = #tpu.pipeline_mode<synchronous>, transform_indices = @transform_20, window_bounds = array<i64: 64, 32>}, {pipeline_mode = #tpu.pipeline_mode<synchronous>, transform_indices = @transform_21, window_bounds = array<i64: 48, 16>}, {pipeline_mode = #tpu.pipeline_mode<synchronous>, transform_indices = @transform_22, window_bounds = array<i64: 1, 16>}, {pipeline_mode = #tpu.pipeline_mode<synchronous>, transform_indices = @transform_23, window_bounds = array<i64: 1, 16>}, {pipeline_mode = #tpu.pipeline_mode<synchronous>, transform_indices = @transform_24, window_bounds = array<i64: 1, 16>}, {pipeline_mode = #tpu.pipeline_mode<synchronous>, transform_indices = @transform_25, window_bounds = array<i64: 16, 4>}, {pipeline_mode = #tpu.pipeline_mode<synchronous>, transform_indices = @transform_26, window_bounds = array<i64: 4, 16>}, {pipeline_mode = #tpu.pipeline_mode<synchronous>, transform_indices = @transform_27, window_bounds = array<i64: 128, 64>}, {pipeline_mode = #tpu.pipeline_mode<synchronous>, transform_indices = @transform_28, window_bounds = array<i64: 128, 64>}, {pipeline_mode = #tpu.pipeline_mode<synchronous>, transform_indices = @transform_29, window_bounds = array<i64: 12, 3, 8>}, {pipeline_mode = #tpu.pipeline_mode<synchronous>, transform_indices = @transform_30, window_bounds = array<i64: 3, 1>}, {transform_indices = @transform_31, window_bounds = array<i64: 1, 3, 128>}]} {
    %cst = arith.constant 0.000000e+00 : f32
    %0 = vector.broadcast %cst : f32 to vector<144x128xf32>
    %c0 = arith.constant 0 : index
    %c0_0 = arith.constant 0 : index
    %1 = vector.load %arg35[%c0, %c0_0] : memref<144x128xf32, #tpu.memory_space<vmem>>, vector<144x128xf32>
    tpu.vector_store %arg35[%c0, %c0_0], %0 {strides = array<i32>} : memref<144x128xf32, #tpu.memory_space<vmem>>, vector<144x128xf32>,
    %c0_1 = arith.constant 0 : index
    %c0_2 = arith.constant 0 : index
    %c0_3 = arith.constant 0 : index
    %2 = vector.load %arg1[%c0_1, %c0_2, %c0_3] : memref<1x16x32xf32, #tpu.memory_space<vmem>>, vector<1x16x32xf32>
    %3 = vector.shape_cast %2 : vector<1x16x32xf32> to vector<16x32xf32>
    %4 = arith.truncf %3 : vector<16x32xf32> to vector<16x32xbf16>
    %c0_4 = arith.constant 0 : index
    %c0_5 = arith.constant 0 : index
    %5 = vector.load %arg2[%c0_4, %c0_5] : memref<32x256xbf16, #tpu.memory_space<vmem>>, vector<32x256xbf16>
    %cst_6 = arith.constant dense<0.000000e+00> : vector<16x256xf32>
    %6 = tpu.matmul %4, %5, %cst_6 {dimension_numbers = #tpu.dot_dimension_numbers<[1], [0], [0], [1], [0, 0, 1, 1], [], []>} : vector<16x32xbf16>, vector<32x256xbf16>, vector<16x256xf32> -> vector<16x256xf32>
    %c0_7 = arith.constant 0 : index
    %c0_8 = arith.constant 0 : index
    %7 = vector.load %arg3[%c0_7, %c0_8] : memref<1x256xf32, #tpu.memory_space<vmem>>, vector<1x256xf32>
    %8 = vector.broadcast %7 : vector<1x256xf32> to vector<16x256xf32>
    %9 = arith.addf %6, %8 : vector<16x256xf32>
    %c0_9 = arith.constant 0 : index
    %c0_10 = arith.constant 0 : index
    %10 = vector.load %arg33[%c0_9, %c0_10] : memref<16x256xf32, #tpu.memory_space<vmem>>, vector<16x256xf32>
    tpu.vector_store %arg33[%c0_9, %c0_10], %9 {strides = array<i32>} : memref<16x256xf32, #tpu.memory_space<vmem>>, vector<16x256xf32>,
    %c0_11 = arith.constant 0 : index
    %c0_12 = arith.constant 0 : index
    %11 = vector.load %arg4[%c0_11, %c0_12] : memref<32x128xbf16, #tpu.memory_space<vmem>>, vector<32x128xbf16>
    %cst_13 = arith.constant 0.000000e+00 : f32
    %12 = vector.broadcast %cst_13 : f32 to vector<1x32xf32>
    %cst_14 = arith.constant 0.000000e+00 : f32
    %13 = vector.broadcast %cst_14 : f32 to vector<1x32xf32>
    %c0_15 = arith.constant 0 : index
    %c0_16 = arith.constant 0 : index
    %14 = vector.load %arg33[%c0_15, %c0_16] : memref<16x256xf32, #tpu.memory_space<vmem>>, vector<1x128xf32>
    %c15 = arith.constant 15 : index
    %c128 = arith.constant 128 : index
    %15 = vector.load %arg33[%c15, %c128] : memref<16x256xf32, #tpu.memory_space<vmem>>, vector<1x128xf32>
    %16 = arith.addf %14, %15 : vector<1x128xf32>
    %17 = arith.truncf %12 : vector<1x32xf32> to vector<1x32xbf16>
    %cst_17 = arith.constant dense<0.000000e+00> : vector<1x128xf32>
    %18 = tpu.matmul %17, %11, %cst_17 {dimension_numbers = #tpu.dot_dimension_numbers<[1], [0], [0], [1], [0, 0, 1, 1], [], []>} : vector<1x32xbf16>, vector<32x128xbf16>, vector<1x128xf32> -> vector<1x128xf32>
    %19 = arith.addf %16, %18 : vector<1x128xf32>
    %20 = vector.extract_strided_slice %19 {offsets = [0, 0], sizes = [1, 64], strides = [1, 1]} : vector<1x128xf32> to vector<1x64xf32>
    %21 = arith.negf %20 : vector<1x64xf32>
    %22 = math.exp %21 : vector<1x64xf32>
    %cst_18 = arith.constant 1.000000e+00 : f32
    %23 = vector.broadcast %cst_18 : f32 to vector<1x64xf32>
    %24 = arith.addf %23, %22 : vector<1x64xf32>
    %25 = arith.divf %23, %24 : vector<1x64xf32>
    %26 = vector.extract_strided_slice %19 {offsets = [0, 64], sizes = [1, 32], strides = [1, 1]} : vector<1x128xf32> to vector<1x32xf32>
    %27 = math.tanh %26 : vector<1x32xf32>
    %28 = vector.extract_strided_slice %19 {offsets = [0, 96], sizes = [1, 32], strides = [1, 1]} : vector<1x128xf32> to vector<1x32xf32>
    %29 = arith.negf %28 : vector<1x32xf32>
    %30 = math.exp %29 : vector<1x32xf32>
    %cst_19 = arith.constant 1.000000e+00 : f32
    %31 = vector.broadcast %cst_19 : f32 to vector<1x32xf32>
    %32 = arith.addf %31, %30 : vector<1x32xf32>
    %33 = arith.divf %31, %32 : vector<1x32xf32>
    %34 = vector.extract_strided_slice %25 {offsets = [0, 32], sizes = [1, 32], strides = [1, 1]} : vector<1x64xf32> to vector<1x32xf32>
    %35 = arith.mulf %34, %13 : vector<1x32xf32>
    %36 = vector.extract_strided_slice %25 {offsets = [0, 0], sizes = [1, 32], strides = [1, 1]} : vector<1x64xf32> to vector<1x32xf32>
    %37 = arith.mulf %36, %27 : vector<1x32xf32>
    %38 = arith.addf %35, %37 : vector<1x32xf32>
    %39 = math.tanh %38 : vector<1x32xf32>
    %40 = arith.mulf %33, %39 : vector<1x32xf32>
    %c0_20 = arith.constant 0 : index
    %c0_21 = arith.constant 0 : index
    %41 = vector.load %arg34[%c0_20, %c0_21] : memref<16x32xf32, #tpu.memory_space<vmem>>, vector<1x32xf32>
    tpu.vector_store %arg34[%c0_20, %c0_21], %40 {strides = array<i32>} : memref<16x32xf32, #tpu.memory_space<vmem>>, vector<1x32xf32>,
    %c1 = arith.constant 1 : index
    %c0_22 = arith.constant 0 : index
    %42 = vector.load %arg33[%c1, %c0_22] : memref<16x256xf32, #tpu.memory_space<vmem>>, vector<1x128xf32>
    %c14 = arith.constant 14 : index
    %c128_23 = arith.constant 128 : index
    %43 = vector.load %arg33[%c14, %c128_23] : memref<16x256xf32, #tpu.memory_space<vmem>>, vector<1x128xf32>
    %44 = arith.addf %42, %43 : vector<1x128xf32>
    %45 = arith.truncf %40 : vector<1x32xf32> to vector<1x32xbf16>
    %cst_24 = arith.constant dense<0.000000e+00> : vector<1x128xf32>
    %46 = tpu.matmul %45, %11, %cst_24 {dimension_numbers = #tpu.dot_dimension_numbers<[1], [0], [0], [1], [0, 0, 1, 1], [], []>} : vector<1x32xbf16>, vector<32x128xbf16>, vector<1x128xf32> -> vector<1x128xf32>
    %47 = arith.addf %44, %46 : vector<1x128xf32>
    %48 = vector.extract_strided_slice %47 {offsets = [0, 0], sizes = [1, 64], strides = [1, 1]} : vector<1x128xf32> to vector<1x64xf32>
    %49 = arith.negf %48 : vector<1x64xf32>
    %50 = math.exp %49 : vector<1x64xf32>
    %cst_25 = arith.constant 1.000000e+00 : f32
    %51 = vector.broadcast %cst_25 : f32 to vector<1x64xf32>
    %52 = arith.addf %51, %50 : vector<1x64xf32>
    %53 = arith.divf %51, %52 : vector<1x64xf32>
    %54 = vector.extract_strided_slice %47 {offsets = [0, 64], sizes = [1, 32], strides = [1, 1]} : vector<1x128xf32> to vector<1x32xf32>
    %55 = math.tanh %54 : vector<1x32xf32>
    %56 = vector.extract_strided_slice %47 {offsets = [0, 96], sizes = [1, 32], strides = [1, 1]} : vector<1x128xf32> to vector<1x32xf32>
    %57 = arith.negf %56 : vector<1x32xf32>
    %58 = math.exp %57 : vector<1x32xf32>
    %cst_26 = arith.constant 1.000000e+00 : f32
    %59 = vector.broadcast %cst_26 : f32 to vector<1x32xf32>
    %60 = arith.addf %59, %58 : vector<1x32xf32>
    %61 = arith.divf %59, %60 : vector<1x32xf32>
    %62 = vector.extract_strided_slice %53 {offsets = [0, 32], sizes = [1, 32], strides = [1, 1]} : vector<1x64xf32> to vector<1x32xf32>
    %63 = arith.mulf %62, %38 : vector<1x32xf32>
    %64 = vector.extract_strided_slice %53 {offsets = [0, 0], sizes = [1, 32], strides = [1, 1]} : vector<1x64xf32> to vector<1x32xf32>
    %65 = arith.mulf %64, %55 : vector<1x32xf32>
    %66 = arith.addf %63, %65 : vector<1x32xf32>
    %67 = math.tanh %66 : vector<1x32xf32>
    %68 = arith.mulf %61, %67 : vector<1x32xf32>
    %c1_27 = arith.constant 1 : index
    %c0_28 = arith.constant 0 : index
    %69 = vector.load %arg34[%c1_27, %c0_28] : memref<16x32xf32, #tpu.memory_space<vmem>>, vector<1x32xf32>
    tpu.vector_store %arg34[%c1_27, %c0_28], %68 {strides = array<i32>} : memref<16x32xf32, #tpu.memory_space<vmem>>, vector<1x32xf32>,
    %c2 = arith.constant 2 : index
    %c0_29 = arith.constant 0 : index
    %70 = vector.load %arg33[%c2, %c0_29] : memref<16x256xf32, #tpu.memory_space<vmem>>, vector<1x128xf32>
    %c13 = arith.constant 13 : index
    %c128_30 = arith.constant 128 : index
    %71 = vector.load %arg33[%c13, %c128_30] : memref<16x256xf32, #tpu.memory_space<vmem>>, vector<1x128xf32>
    %72 = arith.addf %70, %71 : vector<1x128xf32>
    %73 = arith.truncf %68 : vector<1x32xf32> to vector<1x32xbf16>
    %cst_31 = arith.constant dense<0.000000e+00> : vector<1x128xf32>
    %74 = tpu.matmul %73, %11, %cst_31 {dimension_numbers = #tpu.dot_dimension_numbers<[1], [0], [0], [1], [0, 0, 1, 1], [], []>} : vector<1x32xbf16>, vector<32x128xbf16>, vector<1x128xf32> -> vector<1x128xf32>
    %75 = arith.addf %72, %74 : vector<1x128xf32>
    %76 = vector.extract_strided_slice %75 {offsets = [0, 0], sizes = [1, 64], strides = [1, 1]} : vector<1x128xf32> to vector<1x64xf32>
    %77 = arith.negf %76 : vector<1x64xf32>
    %78 = math.exp %77 : vector<1x64xf32>
    %cst_32 = arith.constant 1.000000e+00 : f32
    %79 = vector.broadcast %cst_32 : f32 to vector<1x64xf32>
    %80 = arith.addf %79, %78 : vector<1x64xf32>
    %81 = arith.divf %79, %80 : vector<1x64xf32>
    %82 = vector.extract_strided_slice %75 {offsets = [0, 64], sizes = [1, 32], strides = [1, 1]} : vector<1x128xf32> to vector<1x32xf32>
    %83 = math.tanh %82 : vector<1x32xf32>
    %84 = vector.extract_strided_slice %75 {offsets = [0, 96], sizes = [1, 32], strides = [1, 1]} : vector<1x128xf32> to vector<1x32xf32>
    %85 = arith.negf %84 : vector<1x32xf32>
    %86 = math.exp %85 : vector<1x32xf32>
    %cst_33 = arith.constant 1.000000e+00 : f32
    %87 = vector.broadcast %cst_33 : f32 to vector<1x32xf32>
    %88 = arith.addf %87, %86 : vector<1x32xf32>
    %89 = arith.divf %87, %88 : vector<1x32xf32>
    %90 = vector.extract_strided_slice %81 {offsets = [0, 32], sizes = [1, 32], strides = [1, 1]} : vector<1x64xf32> to vector<1x32xf32>
    %91 = arith.mulf %90, %66 : vector<1x32xf32>
    %92 = vector.extract_strided_slice %81 {offsets = [0, 0], sizes = [1, 32], strides = [1, 1]} : vector<1x64xf32> to vector<1x32xf32>
    %93 = arith.mulf %92, %83 : vector<1x32xf32>
    %94 = arith.addf %91, %93 : vector<1x32xf32>
    %95 = math.tanh %94 : vector<1x32xf32>
    %96 = arith.mulf %89, %95 : vector<1x32xf32>
    %c2_34 = arith.constant 2 : index
    %c0_35 = arith.constant 0 : index
    %97 = vector.load %arg34[%c2_34, %c0_35] : memref<16x32xf32, #tpu.memory_space<vmem>>, vector<1x32xf32>
    tpu.vector_store %arg34[%c2_34, %c0_35], %96 {strides = array<i32>} : memref<16x32xf32, #tpu.memory_space<vmem>>, vector<1x32xf32>,
    %c3 = arith.constant 3 : index
    %c0_36 = arith.constant 0 : index
    %98 = vector.load %arg33[%c3, %c0_36] : memref<16x256xf32, #tpu.memory_space<vmem>>, vector<1x128xf32>
    %c12 = arith.constant 12 : index
    %c128_37 = arith.constant 128 : index
    %99 = vector.load %arg33[%c12, %c128_37] : memref<16x256xf32, #tpu.memory_space<vmem>>, vector<1x128xf32>
    %100 = arith.addf %98, %99 : vector<1x128xf32>
    %101 = arith.truncf %96 : vector<1x32xf32> to vector<1x32xbf16>
    %cst_38 = arith.constant dense<0.000000e+00> : vector<1x128xf32>
    %102 = tpu.matmul %101, %11, %cst_38 {dimension_numbers = #tpu.dot_dimension_numbers<[1], [0], [0], [1], [0, 0, 1, 1], [], []>} : vector<1x32xbf16>, vector<32x128xbf16>, vector<1x128xf32> -> vector<1x128xf32>
    %103 = arith.addf %100, %102 : vector<1x128xf32>
    %104 = vector.extract_strided_slice %103 {offsets = [0, 0], sizes = [1, 64], strides = [1, 1]} : vector<1x128xf32> to vector<1x64xf32>
    %105 = arith.negf %104 : vector<1x64xf32>
    %106 = math.exp %105 : vector<1x64xf32>
    %cst_39 = arith.constant 1.000000e+00 : f32
    %107 = vector.broadcast %cst_39 : f32 to vector<1x64xf32>
    %108 = arith.addf %107, %106 : vector<1x64xf32>
    %109 = arith.divf %107, %108 : vector<1x64xf32>
    %110 = vector.extract_strided_slice %103 {offsets = [0, 64], sizes = [1, 32], strides = [1, 1]} : vector<1x128xf32> to vector<1x32xf32>
    %111 = math.tanh %110 : vector<1x32xf32>
    %112 = vector.extract_strided_slice %103 {offsets = [0, 96], sizes = [1, 32], strides = [1, 1]} : vector<1x128xf32> to vector<1x32xf32>
    %113 = arith.negf %112 : vector<1x32xf32>
    %114 = math.exp %113 : vector<1x32xf32>
    %cst_40 = arith.constant 1.000000e+00 : f32
    %115 = vector.broadcast %cst_40 : f32 to vector<1x32xf32>
    %116 = arith.addf %115, %114 : vector<1x32xf32>
    %117 = arith.divf %115, %116 : vector<1x32xf32>
    %118 = vector.extract_strided_slice %109 {offsets = [0, 32], sizes = [1, 32], strides = [1, 1]} : vector<1x64xf32> to vector<1x32xf32>
    %119 = arith.mulf %118, %94 : vector<1x32xf32>
    %120 = vector.extract_strided_slice %109 {offsets = [0, 0], sizes = [1, 32], strides = [1, 1]} : vector<1x64xf32> to vector<1x32xf32>
    %121 = arith.mulf %120, %111 : vector<1x32xf32>
    %122 = arith.addf %119, %121 : vector<1x32xf32>
    %123 = math.tanh %122 : vector<1x32xf32>
    %124 = arith.mulf %117, %123 : vector<1x32xf32>
    %c3_41 = arith.constant 3 : index
    %c0_42 = arith.constant 0 : index
    %125 = vector.load %arg34[%c3_41, %c0_42] : memref<16x32xf32, #tpu.memory_space<vmem>>, vector<1x32xf32>
    tpu.vector_store %arg34[%c3_41, %c0_42], %124 {strides = array<i32>} : memref<16x32xf32, #tpu.memory_space<vmem>>, vector<1x32xf32>,
    %c4 = arith.constant 4 : index
    %c0_43 = arith.constant 0 : index
    %126 = vector.load %arg33[%c4, %c0_43] : memref<16x256xf32, #tpu.memory_space<vmem>>, vector<1x128xf32>
    %c11 = arith.constant 11 : index
    %c128_44 = arith.constant 128 : index
    %127 = vector.load %arg33[%c11, %c128_44] : memref<16x256xf32, #tpu.memory_space<vmem>>, vector<1x128xf32>
    %128 = arith.addf %126, %127 : vector<1x128xf32>
    %129 = arith.truncf %124 : vector<1x32xf32> to vector<1x32xbf16>
    %cst_45 = arith.constant dense<0.000000e+00> : vector<1x128xf32>
    %130 = tpu.matmul %129, %11, %cst_45 {dimension_numbers = #tpu.dot_dimension_numbers<[1], [0], [0], [1], [0, 0, 1, 1], [], []>} : vector<1x32xbf16>, vector<32x128xbf16>, vector<1x128xf32> -> vector<1x128xf32>
    %131 = arith.addf %128, %130 : vector<1x128xf32>
    %132 = vector.extract_strided_slice %131 {offsets = [0, 0], sizes = [1, 64], strides = [1, 1]} : vector<1x128xf32> to vector<1x64xf32>
    %133 = arith.negf %132 : vector<1x64xf32>
    %134 = math.exp %133 : vector<1x64xf32>
    %cst_46 = arith.constant 1.000000e+00 : f32
    %135 = vector.broadcast %cst_46 : f32 to vector<1x64xf32>
    %136 = arith.addf %135, %134 : vector<1x64xf32>
    %137 = arith.divf %135, %136 : vector<1x64xf32>
    %138 = vector.extract_strided_slice %131 {offsets = [0, 64], sizes = [1, 32], strides = [1, 1]} : vector<1x128xf32> to vector<1x32xf32>
    %139 = math.tanh %138 : vector<1x32xf32>
    %140 = vector.extract_strided_slice %131 {offsets = [0, 96], sizes = [1, 32], strides = [1, 1]} : vector<1x128xf32> to vector<1x32xf32>
    %141 = arith.negf %140 : vector<1x32xf32>
    %142 = math.exp %141 : vector<1x32xf32>
    %cst_47 = arith.constant 1.000000e+00 : f32
    %143 = vector.broadcast %cst_47 : f32 to vector<1x32xf32>
    %144 = arith.addf %143, %142 : vector<1x32xf32>
    %145 = arith.divf %143, %144 : vector<1x32xf32>
    %146 = vector.extract_strided_slice %137 {offsets = [0, 32], sizes = [1, 32], strides = [1, 1]} : vector<1x64xf32> to vector<1x32xf32>
    %147 = arith.mulf %146, %122 : vector<1x32xf32>
    %148 = vector.extract_strided_slice %137 {offsets = [0, 0], sizes = [1, 32], strides = [1, 1]} : vector<1x64xf32> to vector<1x32xf32>
    %149 = arith.mulf %148, %139 : vector<1x32xf32>
    %150 = arith.addf %147, %149 : vector<1x32xf32>
    %151 = math.tanh %150 : vector<1x32xf32>
    %152 = arith.mulf %145, %151 : vector<1x32xf32>
    %c4_48 = arith.constant 4 : index
    %c0_49 = arith.constant 0 : index
    %153 = vector.load %arg34[%c4_48, %c0_49] : memref<16x32xf32, #tpu.memory_space<vmem>>, vector<1x32xf32>
    tpu.vector_store %arg34[%c4_48, %c0_49], %152 {strides = array<i32>} : memref<16x32xf32, #tpu.memory_space<vmem>>, vector<1x32xf32>,
    %c5 = arith.constant 5 : index
    %c0_50 = arith.constant 0 : index
    %154 = vector.load %arg33[%c5, %c0_50] : memref<16x256xf32, #tpu.memory_space<vmem>>, vector<1x128xf32>
    %c10 = arith.constant 10 : index
    %c128_51 = arith.constant 128 : index
    %155 = vector.load %arg33[%c10, %c128_51] : memref<16x256xf32, #tpu.memory_space<vmem>>, vector<1x128xf32>
    %156 = arith.addf %154, %155 : vector<1x128xf32>
    %157 = arith.truncf %152 : vector<1x32xf32> to vector<1x32xbf16>
    %cst_52 = arith.constant dense<0.000000e+00> : vector<1x128xf32>
    %158 = tpu.matmul %157, %11, %cst_52 {dimension_numbers = #tpu.dot_dimension_numbers<[1], [0], [0], [1], [0, 0, 1, 1], [], []>} : vector<1x32xbf16>, vector<32x128xbf16>, vector<1x128xf32> -> vector<1x128xf32>
    %159 = arith.addf %156, %158 : vector<1x128xf32>
    %160 = vector.extract_strided_slice %159 {offsets = [0, 0], sizes = [1, 64], strides = [1, 1]} : vector<1x128xf32> to vector<1x64xf32>
    %161 = arith.negf %160 : vector<1x64xf32>
    %162 = math.exp %161 : vector<1x64xf32>
    %cst_53 = arith.constant 1.000000e+00 : f32
    %163 = vector.broadcast %cst_53 : f32 to vector<1x64xf32>
    %164 = arith.addf %163, %162 : vector<1x64xf32>
    %165 = arith.divf %163, %164 : vector<1x64xf32>
    %166 = vector.extract_strided_slice %159 {offsets = [0, 64], sizes = [1, 32], strides = [1, 1]} : vector<1x128xf32> to vector<1x32xf32>
    %167 = math.tanh %166 : vector<1x32xf32>
    %168 = vector.extract_strided_slice %159 {offsets = [0, 96], sizes = [1, 32], strides = [1, 1]} : vector<1x128xf32> to vector<1x32xf32>
    %169 = arith.negf %168 : vector<1x32xf32>
    %170 = math.exp %169 : vector<1x32xf32>
    %cst_54 = arith.constant 1.000000e+00 : f32
    %171 = vector.broadcast %cst_54 : f32 to vector<1x32xf32>
    %172 = arith.addf %171, %170 : vector<1x32xf32>
    %173 = arith.divf %171, %172 : vector<1x32xf32>
    %174 = vector.extract_strided_slice %165 {offsets = [0, 32], sizes = [1, 32], strides = [1, 1]} : vector<1x64xf32> to vector<1x32xf32>
    %175 = arith.mulf %174, %150 : vector<1x32xf32>
    %176 = vector.extract_strided_slice %165 {offsets = [0, 0], sizes = [1, 32], strides = [1, 1]} : vector<1x64xf32> to vector<1x32xf32>
    %177 = arith.mulf %176, %167 : vector<1x32xf32>
    %178 = arith.addf %175, %177 : vector<1x32xf32>
    %179 = math.tanh %178 : vector<1x32xf32>
    %180 = arith.mulf %173, %179 : vector<1x32xf32>
    %c5_55 = arith.constant 5 : index
    %c0_56 = arith.constant 0 : index
    %181 = vector.load %arg34[%c5_55, %c0_56] : memref<16x32xf32, #tpu.memory_space<vmem>>, vector<1x32xf32>
    tpu.vector_store %arg34[%c5_55, %c0_56], %180 {strides = array<i32>} : memref<16x32xf32, #tpu.memory_space<vmem>>, vector<1x32xf32>,
    %c6 = arith.constant 6 : index
    %c0_57 = arith.constant 0 : index
    %182 = vector.load %arg33[%c6, %c0_57] : memref<16x256xf32, #tpu.memory_space<vmem>>, vector<1x128xf32>
    %c9 = arith.constant 9 : index
    %c128_58 = arith.constant 128 : index
    %183 = vector.load %arg33[%c9, %c128_58] : memref<16x256xf32, #tpu.memory_space<vmem>>, vector<1x128xf32>
    %184 = arith.addf %182, %183 : vector<1x128xf32>
    %185 = arith.truncf %180 : vector<1x32xf32> to vector<1x32xbf16>
    %cst_59 = arith.constant dense<0.000000e+00> : vector<1x128xf32>
    %186 = tpu.matmul %185, %11, %cst_59 {dimension_numbers = #tpu.dot_dimension_numbers<[1], [0], [0], [1], [0, 0, 1, 1], [], []>} : vector<1x32xbf16>, vector<32x128xbf16>, vector<1x128xf32> -> vector<1x128xf32>
    %187 = arith.addf %184, %186 : vector<1x128xf32>
    %188 = vector.extract_strided_slice %187 {offsets = [0, 0], sizes = [1, 64], strides = [1, 1]} : vector<1x128xf32> to vector<1x64xf32>
    %189 = arith.negf %188 : vector<1x64xf32>
    %190 = math.exp %189 : vector<1x64xf32>
    %cst_60 = arith.constant 1.000000e+00 : f32
    %191 = vector.broadcast %cst_60 : f32 to vector<1x64xf32>
    %192 = arith.addf %191, %190 : vector<1x64xf32>
    %193 = arith.divf %191, %192 : vector<1x64xf32>
    %194 = vector.extract_strided_slice %187 {offsets = [0, 64], sizes = [1, 32], strides = [1, 1]} : vector<1x128xf32> to vector<1x32xf32>
    %195 = math.tanh %194 : vector<1x32xf32>
    %196 = vector.extract_strided_slice %187 {offsets = [0, 96], sizes = [1, 32], strides = [1, 1]} : vector<1x128xf32> to vector<1x32xf32>
    %197 = arith.negf %196 : vector<1x32xf32>
    %198 = math.exp %197 : vector<1x32xf32>
    %cst_61 = arith.constant 1.000000e+00 : f32
    %199 = vector.broadcast %cst_61 : f32 to vector<1x32xf32>
    %200 = arith.addf %199, %198 : vector<1x32xf32>
    %201 = arith.divf %199, %200 : vector<1x32xf32>
    %202 = vector.extract_strided_slice %193 {offsets = [0, 32], sizes = [1, 32], strides = [1, 1]} : vector<1x64xf32> to vector<1x32xf32>
    %203 = arith.mulf %202, %178 : vector<1x32xf32>
    %204 = vector.extract_strided_slice %193 {offsets = [0, 0], sizes = [1, 32], strides = [1, 1]} : vector<1x64xf32> to vector<1x32xf32>
    %205 = arith.mulf %204, %195 : vector<1x32xf32>
    %206 = arith.addf %203, %205 : vector<1x32xf32>
    %207 = math.tanh %206 : vector<1x32xf32>
    %208 = arith.mulf %201, %207 : vector<1x32xf32>
    %c6_62 = arith.constant 6 : index
    %c0_63 = arith.constant 0 : index
    %209 = vector.load %arg34[%c6_62, %c0_63] : memref<16x32xf32, #tpu.memory_space<vmem>>, vector<1x32xf32>
    tpu.vector_store %arg34[%c6_62, %c0_63], %208 {strides = array<i32>} : memref<16x32xf32, #tpu.memory_space<vmem>>, vector<1x32xf32>,
    %c7 = arith.constant 7 : index
    %c0_64 = arith.constant 0 : index
    %210 = vector.load %arg33[%c7, %c0_64] : memref<16x256xf32, #tpu.memory_space<vmem>>, vector<1x128xf32>
    %c8 = arith.constant 8 : index
    %c128_65 = arith.constant 128 : index
    %211 = vector.load %arg33[%c8, %c128_65] : memref<16x256xf32, #tpu.memory_space<vmem>>, vector<1x128xf32>
    %212 = arith.addf %210, %211 : vector<1x128xf32>
    %213 = arith.truncf %208 : vector<1x32xf32> to vector<1x32xbf16>
    %cst_66 = arith.constant dense<0.000000e+00> : vector<1x128xf32>
    %214 = tpu.matmul %213, %11, %cst_66 {dimension_numbers = #tpu.dot_dimension_numbers<[1], [0], [0], [1], [0, 0, 1, 1], [], []>} : vector<1x32xbf16>, vector<32x128xbf16>, vector<1x128xf32> -> vector<1x128xf32>
    %215 = arith.addf %212, %214 : vector<1x128xf32>
    %216 = vector.extract_strided_slice %215 {offsets = [0, 0], sizes = [1, 64], strides = [1, 1]} : vector<1x128xf32> to vector<1x64xf32>
    %217 = arith.negf %216 : vector<1x64xf32>
    %218 = math.exp %217 : vector<1x64xf32>
    %cst_67 = arith.constant 1.000000e+00 : f32
    %219 = vector.broadcast %cst_67 : f32 to vector<1x64xf32>
    %220 = arith.addf %219, %218 : vector<1x64xf32>
    %221 = arith.divf %219, %220 : vector<1x64xf32>
    %222 = vector.extract_strided_slice %215 {offsets = [0, 64], sizes = [1, 32], strides = [1, 1]} : vector<1x128xf32> to vector<1x32xf32>
    %223 = math.tanh %222 : vector<1x32xf32>
    %224 = vector.extract_strided_slice %215 {offsets = [0, 96], sizes = [1, 32], strides = [1, 1]} : vector<1x128xf32> to vector<1x32xf32>
    %225 = arith.negf %224 : vector<1x32xf32>
    %226 = math.exp %225 : vector<1x32xf32>
    %cst_68 = arith.constant 1.000000e+00 : f32
    %227 = vector.broadcast %cst_68 : f32 to vector<1x32xf32>
    %228 = arith.addf %227, %226 : vector<1x32xf32>
    %229 = arith.divf %227, %228 : vector<1x32xf32>
    %230 = vector.extract_strided_slice %221 {offsets = [0, 32], sizes = [1, 32], strides = [1, 1]} : vector<1x64xf32> to vector<1x32xf32>
    %231 = arith.mulf %230, %206 : vector<1x32xf32>
    %232 = vector.extract_strided_slice %221 {offsets = [0, 0], sizes = [1, 32], strides = [1, 1]} : vector<1x64xf32> to vector<1x32xf32>
    %233 = arith.mulf %232, %223 : vector<1x32xf32>
    %234 = arith.addf %231, %233 : vector<1x32xf32>
    %235 = math.tanh %234 : vector<1x32xf32>
    %236 = arith.mulf %229, %235 : vector<1x32xf32>
    %c7_69 = arith.constant 7 : index
    %c0_70 = arith.constant 0 : index
    %237 = vector.load %arg34[%c7_69, %c0_70] : memref<16x32xf32, #tpu.memory_space<vmem>>, vector<1x32xf32>
    tpu.vector_store %arg34[%c7_69, %c0_70], %236 {strides = array<i32>} : memref<16x32xf32, #tpu.memory_space<vmem>>, vector<1x32xf32>,
    %c8_71 = arith.constant 8 : index
    %c0_72 = arith.constant 0 : index
    %238 = vector.load %arg33[%c8_71, %c0_72] : memref<16x256xf32, #tpu.memory_space<vmem>>, vector<1x128xf32>
    %c7_73 = arith.constant 7 : index
    %c128_74 = arith.constant 128 : index
    %239 = vector.load %arg33[%c7_73, %c128_74] : memref<16x256xf32, #tpu.memory_space<vmem>>, vector<1x128xf32>
    %240 = arith.addf %238, %239 : vector<1x128xf32>
    %241 = arith.truncf %236 : vector<1x32xf32> to vector<1x32xbf16>
    %cst_75 = arith.constant dense<0.000000e+00> : vector<1x128xf32>
    %242 = tpu.matmul %241, %11, %cst_75 {dimension_numbers = #tpu.dot_dimension_numbers<[1], [0], [0], [1], [0, 0, 1, 1], [], []>} : vector<1x32xbf16>, vector<32x128xbf16>, vector<1x128xf32> -> vector<1x128xf32>
    %243 = arith.addf %240, %242 : vector<1x128xf32>
    %244 = vector.extract_strided_slice %243 {offsets = [0, 0], sizes = [1, 64], strides = [1, 1]} : vector<1x128xf32> to vector<1x64xf32>
    %245 = arith.negf %244 : vector<1x64xf32>
    %246 = math.exp %245 : vector<1x64xf32>
    %cst_76 = arith.constant 1.000000e+00 : f32
    %247 = vector.broadcast %cst_76 : f32 to vector<1x64xf32>
    %248 = arith.addf %247, %246 : vector<1x64xf32>
    %249 = arith.divf %247, %248 : vector<1x64xf32>
    %250 = vector.extract_strided_slice %243 {offsets = [0, 64], sizes = [1, 32], strides = [1, 1]} : vector<1x128xf32> to vector<1x32xf32>
    %251 = math.tanh %250 : vector<1x32xf32>
    %252 = vector.extract_strided_slice %243 {offsets = [0, 96], sizes = [1, 32], strides = [1, 1]} : vector<1x128xf32> to vector<1x32xf32>
    %253 = arith.negf %252 : vector<1x32xf32>
    %254 = math.exp %253 : vector<1x32xf32>
    %cst_77 = arith.constant 1.000000e+00 : f32
    %255 = vector.broadcast %cst_77 : f32 to vector<1x32xf32>
    %256 = arith.addf %255, %254 : vector<1x32xf32>
    %257 = arith.divf %255, %256 : vector<1x32xf32>
    %258 = vector.extract_strided_slice %249 {offsets = [0, 32], sizes = [1, 32], strides = [1, 1]} : vector<1x64xf32> to vector<1x32xf32>
    %259 = arith.mulf %258, %234 : vector<1x32xf32>
    %260 = vector.extract_strided_slice %249 {offsets = [0, 0], sizes = [1, 32], strides = [1, 1]} : vector<1x64xf32> to vector<1x32xf32>
    %261 = arith.mulf %260, %251 : vector<1x32xf32>
    %262 = arith.addf %259, %261 : vector<1x32xf32>
    %263 = math.tanh %262 : vector<1x32xf32>
    %264 = arith.mulf %257, %263 : vector<1x32xf32>
    %c8_78 = arith.constant 8 : index
    %c0_79 = arith.constant 0 : index
    %265 = vector.load %arg34[%c8_78, %c0_79] : memref<16x32xf32, #tpu.memory_space<vmem>>, vector<1x32xf32>
    tpu.vector_store %arg34[%c8_78, %c0_79], %264 {strides = array<i32>} : memref<16x32xf32, #tpu.memory_space<vmem>>, vector<1x32xf32>,
    %c9_80 = arith.constant 9 : index
    %c0_81 = arith.constant 0 : index
    %266 = vector.load %arg33[%c9_80, %c0_81] : memref<16x256xf32, #tpu.memory_space<vmem>>, vector<1x128xf32>
    %c6_82 = arith.constant 6 : index
    %c128_83 = arith.constant 128 : index
    %267 = vector.load %arg33[%c6_82, %c128_83] : memref<16x256xf32, #tpu.memory_space<vmem>>, vector<1x128xf32>
    %268 = arith.addf %266, %267 : vector<1x128xf32>
    %269 = arith.truncf %264 : vector<1x32xf32> to vector<1x32xbf16>
    %cst_84 = arith.constant dense<0.000000e+00> : vector<1x128xf32>
    %270 = tpu.matmul %269, %11, %cst_84 {dimension_numbers = #tpu.dot_dimension_numbers<[1], [0], [0], [1], [0, 0, 1, 1], [], []>} : vector<1x32xbf16>, vector<32x128xbf16>, vector<1x128xf32> -> vector<1x128xf32>
    %271 = arith.addf %268, %270 : vector<1x128xf32>
    %272 = vector.extract_strided_slice %271 {offsets = [0, 0], sizes = [1, 64], strides = [1, 1]} : vector<1x128xf32> to vector<1x64xf32>
    %273 = arith.negf %272 : vector<1x64xf32>
    %274 = math.exp %273 : vector<1x64xf32>
    %cst_85 = arith.constant 1.000000e+00 : f32
    %275 = vector.broadcast %cst_85 : f32 to vector<1x64xf32>
    %276 = arith.addf %275, %274 : vector<1x64xf32>
    %277 = arith.divf %275, %276 : vector<1x64xf32>
    %278 = vector.extract_strided_slice %271 {offsets = [0, 64], sizes = [1, 32], strides = [1, 1]} : vector<1x128xf32> to vector<1x32xf32>
    %279 = math.tanh %278 : vector<1x32xf32>
    %280 = vector.extract_strided_slice %271 {offsets = [0, 96], sizes = [1, 32], strides = [1, 1]} : vector<1x128xf32> to vector<1x32xf32>
    %281 = arith.negf %280 : vector<1x32xf32>
    %282 = math.exp %281 : vector<1x32xf32>
    %cst_86 = arith.constant 1.000000e+00 : f32
    %283 = vector.broadcast %cst_86 : f32 to vector<1x32xf32>
    %284 = arith.addf %283, %282 : vector<1x32xf32>
    %285 = arith.divf %283, %284 : vector<1x32xf32>
    %286 = vector.extract_strided_slice %277 {offsets = [0, 32], sizes = [1, 32], strides = [1, 1]} : vector<1x64xf32> to vector<1x32xf32>
    %287 = arith.mulf %286, %262 : vector<1x32xf32>
    %288 = vector.extract_strided_slice %277 {offsets = [0, 0], sizes = [1, 32], strides = [1, 1]} : vector<1x64xf32> to vector<1x32xf32>
    %289 = arith.mulf %288, %279 : vector<1x32xf32>
    %290 = arith.addf %287, %289 : vector<1x32xf32>
    %291 = math.tanh %290 : vector<1x32xf32>
    %292 = arith.mulf %285, %291 : vector<1x32xf32>
    %c9_87 = arith.constant 9 : index
    %c0_88 = arith.constant 0 : index
    %293 = vector.load %arg34[%c9_87, %c0_88] : memref<16x32xf32, #tpu.memory_space<vmem>>, vector<1x32xf32>
    tpu.vector_store %arg34[%c9_87, %c0_88], %292 {strides = array<i32>} : memref<16x32xf32, #tpu.memory_space<vmem>>, vector<1x32xf32>,
    %c10_89 = arith.constant 10 : index
    %c0_90 = arith.constant 0 : index
    %294 = vector.load %arg33[%c10_89, %c0_90] : memref<16x256xf32, #tpu.memory_space<vmem>>, vector<1x128xf32>
    %c5_91 = arith.constant 5 : index
    %c128_92 = arith.constant 128 : index
    %295 = vector.load %arg33[%c5_91, %c128_92] : memref<16x256xf32, #tpu.memory_space<vmem>>, vector<1x128xf32>
    %296 = arith.addf %294, %295 : vector<1x128xf32>
    %297 = arith.truncf %292 : vector<1x32xf32> to vector<1x32xbf16>
    %cst_93 = arith.constant dense<0.000000e+00> : vector<1x128xf32>
    %298 = tpu.matmul %297, %11, %cst_93 {dimension_numbers = #tpu.dot_dimension_numbers<[1], [0], [0], [1], [0, 0, 1, 1], [], []>} : vector<1x32xbf16>, vector<32x128xbf16>, vector<1x128xf32> -> vector<1x128xf32>
    %299 = arith.addf %296, %298 : vector<1x128xf32>
    %300 = vector.extract_strided_slice %299 {offsets = [0, 0], sizes = [1, 64], strides = [1, 1]} : vector<1x128xf32> to vector<1x64xf32>
    %301 = arith.negf %300 : vector<1x64xf32>
    %302 = math.exp %301 : vector<1x64xf32>
    %cst_94 = arith.constant 1.000000e+00 : f32
    %303 = vector.broadcast %cst_94 : f32 to vector<1x64xf32>
    %304 = arith.addf %303, %302 : vector<1x64xf32>
    %305 = arith.divf %303, %304 : vector<1x64xf32>
    %306 = vector.extract_strided_slice %299 {offsets = [0, 64], sizes = [1, 32], strides = [1, 1]} : vector<1x128xf32> to vector<1x32xf32>
    %307 = math.tanh %306 : vector<1x32xf32>
    %308 = vector.extract_strided_slice %299 {offsets = [0, 96], sizes = [1, 32], strides = [1, 1]} : vector<1x128xf32> to vector<1x32xf32>
    %309 = arith.negf %308 : vector<1x32xf32>
    %310 = math.exp %309 : vector<1x32xf32>
    %cst_95 = arith.constant 1.000000e+00 : f32
    %311 = vector.broadcast %cst_95 : f32 to vector<1x32xf32>
    %312 = arith.addf %311, %310 : vector<1x32xf32>
    %313 = arith.divf %311, %312 : vector<1x32xf32>
    %314 = vector.extract_strided_slice %305 {offsets = [0, 32], sizes = [1, 32], strides = [1, 1]} : vector<1x64xf32> to vector<1x32xf32>
    %315 = arith.mulf %314, %290 : vector<1x32xf32>
    %316 = vector.extract_strided_slice %305 {offsets = [0, 0], sizes = [1, 32], strides = [1, 1]} : vector<1x64xf32> to vector<1x32xf32>
    %317 = arith.mulf %316, %307 : vector<1x32xf32>
    %318 = arith.addf %315, %317 : vector<1x32xf32>
    %319 = math.tanh %318 : vector<1x32xf32>
    %320 = arith.mulf %313, %319 : vector<1x32xf32>
    %c10_96 = arith.constant 10 : index
    %c0_97 = arith.constant 0 : index
    %321 = vector.load %arg34[%c10_96, %c0_97] : memref<16x32xf32, #tpu.memory_space<vmem>>, vector<1x32xf32>
    tpu.vector_store %arg34[%c10_96, %c0_97], %320 {strides = array<i32>} : memref<16x32xf32, #tpu.memory_space<vmem>>, vector<1x32xf32>,
    %c11_98 = arith.constant 11 : index
    %c0_99 = arith.constant 0 : index
    %322 = vector.load %arg33[%c11_98, %c0_99] : memref<16x256xf32, #tpu.memory_space<vmem>>, vector<1x128xf32>
    %c4_100 = arith.constant 4 : index
    %c128_101 = arith.constant 128 : index
    %323 = vector.load %arg33[%c4_100, %c128_101] : memref<16x256xf32, #tpu.memory_space<vmem>>, vector<1x128xf32>
    %324 = arith.addf %322, %323 : vector<1x128xf32>
    %325 = arith.truncf %320 : vector<1x32xf32> to vector<1x32xbf16>
    %cst_102 = arith.constant dense<0.000000e+00> : vector<1x128xf32>
    %326 = tpu.matmul %325, %11, %cst_102 {dimension_numbers = #tpu.dot_dimension_numbers<[1], [0], [0], [1], [0, 0, 1, 1], [], []>} : vector<1x32xbf16>, vector<32x128xbf16>, vector<1x128xf32> -> vector<1x128xf32>
    %327 = arith.addf %324, %326 : vector<1x128xf32>
    %328 = vector.extract_strided_slice %327 {offsets = [0, 0], sizes = [1, 64], strides = [1, 1]} : vector<1x128xf32> to vector<1x64xf32>
    %329 = arith.negf %328 : vector<1x64xf32>
    %330 = math.exp %329 : vector<1x64xf32>
    %cst_103 = arith.constant 1.000000e+00 : f32
    %331 = vector.broadcast %cst_103 : f32 to vector<1x64xf32>
    %332 = arith.addf %331, %330 : vector<1x64xf32>
    %333 = arith.divf %331, %332 : vector<1x64xf32>
    %334 = vector.extract_strided_slice %327 {offsets = [0, 64], sizes = [1, 32], strides = [1, 1]} : vector<1x128xf32> to vector<1x32xf32>
    %335 = math.tanh %334 : vector<1x32xf32>
    %336 = vector.extract_strided_slice %327 {offsets = [0, 96], sizes = [1, 32], strides = [1, 1]} : vector<1x128xf32> to vector<1x32xf32>
    %337 = arith.negf %336 : vector<1x32xf32>
    %338 = math.exp %337 : vector<1x32xf32>
    %cst_104 = arith.constant 1.000000e+00 : f32
    %339 = vector.broadcast %cst_104 : f32 to vector<1x32xf32>
    %340 = arith.addf %339, %338 : vector<1x32xf32>
    %341 = arith.divf %339, %340 : vector<1x32xf32>
    %342 = vector.extract_strided_slice %333 {offsets = [0, 32], sizes = [1, 32], strides = [1, 1]} : vector<1x64xf32> to vector<1x32xf32>
    %343 = arith.mulf %342, %318 : vector<1x32xf32>
    %344 = vector.extract_strided_slice %333 {offsets = [0, 0], sizes = [1, 32], strides = [1, 1]} : vector<1x64xf32> to vector<1x32xf32>
    %345 = arith.mulf %344, %335 : vector<1x32xf32>
    %346 = arith.addf %343, %345 : vector<1x32xf32>
    %347 = math.tanh %346 : vector<1x32xf32>
    %348 = arith.mulf %341, %347 : vector<1x32xf32>
    %c11_105 = arith.constant 11 : index
    %c0_106 = arith.constant 0 : index
    %349 = vector.load %arg34[%c11_105, %c0_106] : memref<16x32xf32, #tpu.memory_space<vmem>>, vector<1x32xf32>
    tpu.vector_store %arg34[%c11_105, %c0_106], %348 {strides = array<i32>} : memref<16x32xf32, #tpu.memory_space<vmem>>, vector<1x32xf32>,
    %c12_107 = arith.constant 12 : index
    %c0_108 = arith.constant 0 : index
    %350 = vector.load %arg33[%c12_107, %c0_108] : memref<16x256xf32, #tpu.memory_space<vmem>>, vector<1x128xf32>
    %c3_109 = arith.constant 3 : index
    %c128_110 = arith.constant 128 : index
    %351 = vector.load %arg33[%c3_109, %c128_110] : memref<16x256xf32, #tpu.memory_space<vmem>>, vector<1x128xf32>
    %352 = arith.addf %350, %351 : vector<1x128xf32>
    %353 = arith.truncf %348 : vector<1x32xf32> to vector<1x32xbf16>
    %cst_111 = arith.constant dense<0.000000e+00> : vector<1x128xf32>
    %354 = tpu.matmul %353, %11, %cst_111 {dimension_numbers = #tpu.dot_dimension_numbers<[1], [0], [0], [1], [0, 0, 1, 1], [], []>} : vector<1x32xbf16>, vector<32x128xbf16>, vector<1x128xf32> -> vector<1x128xf32>
    %355 = arith.addf %352, %354 : vector<1x128xf32>
    %356 = vector.extract_strided_slice %355 {offsets = [0, 0], sizes = [1, 64], strides = [1, 1]} : vector<1x128xf32> to vector<1x64xf32>
    %357 = arith.negf %356 : vector<1x64xf32>
    %358 = math.exp %357 : vector<1x64xf32>
    %cst_112 = arith.constant 1.000000e+00 : f32
    %359 = vector.broadcast %cst_112 : f32 to vector<1x64xf32>
    %360 = arith.addf %359, %358 : vector<1x64xf32>
    %361 = arith.divf %359, %360 : vector<1x64xf32>
    %362 = vector.extract_strided_slice %355 {offsets = [0, 64], sizes = [1, 32], strides = [1, 1]} : vector<1x128xf32> to vector<1x32xf32>
    %363 = math.tanh %362 : vector<1x32xf32>
    %364 = vector.extract_strided_slice %355 {offsets = [0, 96], sizes = [1, 32], strides = [1, 1]} : vector<1x128xf32> to vector<1x32xf32>
    %365 = arith.negf %364 : vector<1x32xf32>
    %366 = math.exp %365 : vector<1x32xf32>
    %cst_113 = arith.constant 1.000000e+00 : f32
    %367 = vector.broadcast %cst_113 : f32 to vector<1x32xf32>
    %368 = arith.addf %367, %366 : vector<1x32xf32>
    %369 = arith.divf %367, %368 : vector<1x32xf32>
    %370 = vector.extract_strided_slice %361 {offsets = [0, 32], sizes = [1, 32], strides = [1, 1]} : vector<1x64xf32> to vector<1x32xf32>
    %371 = arith.mulf %370, %346 : vector<1x32xf32>
    %372 = vector.extract_strided_slice %361 {offsets = [0, 0], sizes = [1, 32], strides = [1, 1]} : vector<1x64xf32> to vector<1x32xf32>
    %373 = arith.mulf %372, %363 : vector<1x32xf32>
    %374 = arith.addf %371, %373 : vector<1x32xf32>
    %375 = math.tanh %374 : vector<1x32xf32>
    %376 = arith.mulf %369, %375 : vector<1x32xf32>
    %c12_114 = arith.constant 12 : index
    %c0_115 = arith.constant 0 : index
    %377 = vector.load %arg34[%c12_114, %c0_115] : memref<16x32xf32, #tpu.memory_space<vmem>>, vector<1x32xf32>
    tpu.vector_store %arg34[%c12_114, %c0_115], %376 {strides = array<i32>} : memref<16x32xf32, #tpu.memory_space<vmem>>, vector<1x32xf32>,
    %c13_116 = arith.constant 13 : index
    %c0_117 = arith.constant 0 : index
    %378 = vector.load %arg33[%c13_116, %c0_117] : memref<16x256xf32, #tpu.memory_space<vmem>>, vector<1x128xf32>
    %c2_118 = arith.constant 2 : index
    %c128_119 = arith.constant 128 : index
    %379 = vector.load %arg33[%c2_118, %c128_119] : memref<16x256xf32, #tpu.memory_space<vmem>>, vector<1x128xf32>
    %380 = arith.addf %378, %379 : vector<1x128xf32>
    %381 = arith.truncf %376 : vector<1x32xf32> to vector<1x32xbf16>
    %cst_120 = arith.constant dense<0.000000e+00> : vector<1x128xf32>
    %382 = tpu.matmul %381, %11, %cst_120 {dimension_numbers = #tpu.dot_dimension_numbers<[1], [0], [0], [1], [0, 0, 1, 1], [], []>} : vector<1x32xbf16>, vector<32x128xbf16>, vector<1x128xf32> -> vector<1x128xf32>
    %383 = arith.addf %380, %382 : vector<1x128xf32>
    %384 = vector.extract_strided_slice %383 {offsets = [0, 0], sizes = [1, 64], strides = [1, 1]} : vector<1x128xf32> to vector<1x64xf32>
    %385 = arith.negf %384 : vector<1x64xf32>
    %386 = math.exp %385 : vector<1x64xf32>
    %cst_121 = arith.constant 1.000000e+00 : f32
    %387 = vector.broadcast %cst_121 : f32 to vector<1x64xf32>
    %388 = arith.addf %387, %386 : vector<1x64xf32>
    %389 = arith.divf %387, %388 : vector<1x64xf32>
    %390 = vector.extract_strided_slice %383 {offsets = [0, 64], sizes = [1, 32], strides = [1, 1]} : vector<1x128xf32> to vector<1x32xf32>
    %391 = math.tanh %390 : vector<1x32xf32>
    %392 = vector.extract_strided_slice %383 {offsets = [0, 96], sizes = [1, 32], strides = [1, 1]} : vector<1x128xf32> to vector<1x32xf32>
    %393 = arith.negf %392 : vector<1x32xf32>
    %394 = math.exp %393 : vector<1x32xf32>
    %cst_122 = arith.constant 1.000000e+00 : f32
    %395 = vector.broadcast %cst_122 : f32 to vector<1x32xf32>
    %396 = arith.addf %395, %394 : vector<1x32xf32>
    %397 = arith.divf %395, %396 : vector<1x32xf32>
    %398 = vector.extract_strided_slice %389 {offsets = [0, 32], sizes = [1, 32], strides = [1, 1]} : vector<1x64xf32> to vector<1x32xf32>
    %399 = arith.mulf %398, %374 : vector<1x32xf32>
    %400 = vector.extract_strided_slice %389 {offsets = [0, 0], sizes = [1, 32], strides = [1, 1]} : vector<1x64xf32> to vector<1x32xf32>
    %401 = arith.mulf %400, %391 : vector<1x32xf32>
    %402 = arith.addf %399, %401 : vector<1x32xf32>
    %403 = math.tanh %402 : vector<1x32xf32>
    %404 = arith.mulf %397, %403 : vector<1x32xf32>
    %c13_123 = arith.constant 13 : index
    %c0_124 = arith.constant 0 : index
    %405 = vector.load %arg34[%c13_123, %c0_124] : memref<16x32xf32, #tpu.memory_space<vmem>>, vector<1x32xf32>
    tpu.vector_store %arg34[%c13_123, %c0_124], %404 {strides = array<i32>} : memref<16x32xf32, #tpu.memory_space<vmem>>, vector<1x32xf32>,
    %c14_125 = arith.constant 14 : index
    %c0_126 = arith.constant 0 : index
    %406 = vector.load %arg33[%c14_125, %c0_126] : memref<16x256xf32, #tpu.memory_space<vmem>>, vector<1x128xf32>
    %c1_127 = arith.constant 1 : index
    %c128_128 = arith.constant 128 : index
    %407 = vector.load %arg33[%c1_127, %c128_128] : memref<16x256xf32, #tpu.memory_space<vmem>>, vector<1x128xf32>
    %408 = arith.addf %406, %407 : vector<1x128xf32>
    %409 = arith.truncf %404 : vector<1x32xf32> to vector<1x32xbf16>
    %cst_129 = arith.constant dense<0.000000e+00> : vector<1x128xf32>
    %410 = tpu.matmul %409, %11, %cst_129 {dimension_numbers = #tpu.dot_dimension_numbers<[1], [0], [0], [1], [0, 0, 1, 1], [], []>} : vector<1x32xbf16>, vector<32x128xbf16>, vector<1x128xf32> -> vector<1x128xf32>
    %411 = arith.addf %408, %410 : vector<1x128xf32>
    %412 = vector.extract_strided_slice %411 {offsets = [0, 0], sizes = [1, 64], strides = [1, 1]} : vector<1x128xf32> to vector<1x64xf32>
    %413 = arith.negf %412 : vector<1x64xf32>
    %414 = math.exp %413 : vector<1x64xf32>
    %cst_130 = arith.constant 1.000000e+00 : f32
    %415 = vector.broadcast %cst_130 : f32 to vector<1x64xf32>
    %416 = arith.addf %415, %414 : vector<1x64xf32>
    %417 = arith.divf %415, %416 : vector<1x64xf32>
    %418 = vector.extract_strided_slice %411 {offsets = [0, 64], sizes = [1, 32], strides = [1, 1]} : vector<1x128xf32> to vector<1x32xf32>
    %419 = math.tanh %418 : vector<1x32xf32>
    %420 = vector.extract_strided_slice %411 {offsets = [0, 96], sizes = [1, 32], strides = [1, 1]} : vector<1x128xf32> to vector<1x32xf32>
    %421 = arith.negf %420 : vector<1x32xf32>
    %422 = math.exp %421 : vector<1x32xf32>
    %cst_131 = arith.constant 1.000000e+00 : f32
    %423 = vector.broadcast %cst_131 : f32 to vector<1x32xf32>
    %424 = arith.addf %423, %422 : vector<1x32xf32>
    %425 = arith.divf %423, %424 : vector<1x32xf32>
    %426 = vector.extract_strided_slice %417 {offsets = [0, 32], sizes = [1, 32], strides = [1, 1]} : vector<1x64xf32> to vector<1x32xf32>
    %427 = arith.mulf %426, %402 : vector<1x32xf32>
    %428 = vector.extract_strided_slice %417 {offsets = [0, 0], sizes = [1, 32], strides = [1, 1]} : vector<1x64xf32> to vector<1x32xf32>
    %429 = arith.mulf %428, %419 : vector<1x32xf32>
    %430 = arith.addf %427, %429 : vector<1x32xf32>
    %431 = math.tanh %430 : vector<1x32xf32>
    %432 = arith.mulf %425, %431 : vector<1x32xf32>
    %c14_132 = arith.constant 14 : index
    %c0_133 = arith.constant 0 : index
    %433 = vector.load %arg34[%c14_132, %c0_133] : memref<16x32xf32, #tpu.memory_space<vmem>>, vector<1x32xf32>
    tpu.vector_store %arg34[%c14_132, %c0_133], %432 {strides = array<i32>} : memref<16x32xf32, #tpu.memory_space<vmem>>, vector<1x32xf32>,
    %c15_134 = arith.constant 15 : index
    %c0_135 = arith.constant 0 : index
    %434 = vector.load %arg33[%c15_134, %c0_135] : memref<16x256xf32, #tpu.memory_space<vmem>>, vector<1x128xf32>
    %c0_136 = arith.constant 0 : index
    %c128_137 = arith.constant 128 : index
    %435 = vector.load %arg33[%c0_136, %c128_137] : memref<16x256xf32, #tpu.memory_space<vmem>>, vector<1x128xf32>
    %436 = arith.addf %434, %435 : vector<1x128xf32>
    %437 = arith.truncf %432 : vector<1x32xf32> to vector<1x32xbf16>
    %cst_138 = arith.constant dense<0.000000e+00> : vector<1x128xf32>
    %438 = tpu.matmul %437, %11, %cst_138 {dimension_numbers = #tpu.dot_dimension_numbers<[1], [0], [0], [1], [0, 0, 1, 1], [], []>} : vector<1x32xbf16>, vector<32x128xbf16>, vector<1x128xf32> -> vector<1x128xf32>
    %439 = arith.addf %436, %438 : vector<1x128xf32>
    %440 = vector.extract_strided_slice %439 {offsets = [0, 0], sizes = [1, 64], strides = [1, 1]} : vector<1x128xf32> to vector<1x64xf32>
    %441 = arith.negf %440 : vector<1x64xf32>
    %442 = math.exp %441 : vector<1x64xf32>
    %cst_139 = arith.constant 1.000000e+00 : f32
    %443 = vector.broadcast %cst_139 : f32 to vector<1x64xf32>
    %444 = arith.addf %443, %442 : vector<1x64xf32>
    %445 = arith.divf %443, %444 : vector<1x64xf32>
    %446 = vector.extract_strided_slice %439 {offsets = [0, 64], sizes = [1, 32], strides = [1, 1]} : vector<1x128xf32> to vector<1x32xf32>
    %447 = math.tanh %446 : vector<1x32xf32>
    %448 = vector.extract_strided_slice %439 {offsets = [0, 96], sizes = [1, 32], strides = [1, 1]} : vector<1x128xf32> to vector<1x32xf32>
    %449 = arith.negf %448 : vector<1x32xf32>
    %450 = math.exp %449 : vector<1x32xf32>
    %cst_140 = arith.constant 1.000000e+00 : f32
    %451 = vector.broadcast %cst_140 : f32 to vector<1x32xf32>
    %452 = arith.addf %451, %450 : vector<1x32xf32>
    %453 = arith.divf %451, %452 : vector<1x32xf32>
    %454 = vector.extract_strided_slice %445 {offsets = [0, 32], sizes = [1, 32], strides = [1, 1]} : vector<1x64xf32> to vector<1x32xf32>
    %455 = arith.mulf %454, %430 : vector<1x32xf32>
    %456 = vector.extract_strided_slice %445 {offsets = [0, 0], sizes = [1, 32], strides = [1, 1]} : vector<1x64xf32> to vector<1x32xf32>
    %457 = arith.mulf %456, %447 : vector<1x32xf32>
    %458 = arith.addf %455, %457 : vector<1x32xf32>
    %459 = math.tanh %458 : vector<1x32xf32>
    %460 = arith.mulf %453, %459 : vector<1x32xf32>
    %c15_141 = arith.constant 15 : index
    %c0_142 = arith.constant 0 : index
    %461 = vector.load %arg34[%c15_141, %c0_142] : memref<16x32xf32, #tpu.memory_space<vmem>>, vector<1x32xf32>
    tpu.vector_store %arg34[%c15_141, %c0_142], %460 {strides = array<i32>} : memref<16x32xf32, #tpu.memory_space<vmem>>, vector<1x32xf32>,
    %c0_143 = arith.constant 0 : index
    %c0_144 = arith.constant 0 : index
    %462 = vector.load %arg34[%c0_143, %c0_144] : memref<16x32xf32, #tpu.memory_space<vmem>>, vector<16x16xf32>
    %c1_145 = arith.constant 1 : index
    %c0_146 = arith.constant 0 : index
    %463 = vector.load %arg35[%c1_145, %c0_146] : memref<144x128xf32, #tpu.memory_space<vmem>>, vector<16x16xf32>
    tpu.vector_store %arg35[%c1_145, %c0_146], %462 {strides = array<i32>} : memref<144x128xf32, #tpu.memory_space<vmem>>, vector<16x16xf32>,
    %c0_147 = arith.constant 0 : index
    %c0_148 = arith.constant 0 : index
    %464 = vector.load %arg5[%c0_147, %c0_148] : memref<16x16xbf16, #tpu.memory_space<vmem>>, vector<16x16xbf16>
    %c0_149 = arith.constant 0 : index
    %c16 = arith.constant 16 : index
    %465 = vector.load %arg34[%c0_149, %c16] : memref<16x32xf32, #tpu.memory_space<vmem>>, vector<16x16xf32>
    %466 = arith.truncf %465 : vector<16x16xf32> to vector<16x16xbf16>
    %cst_150 = arith.constant dense<0.000000e+00> : vector<16x16xf32>
    %467 = tpu.matmul %464, %466, %cst_150 {dimension_numbers = #tpu.dot_dimension_numbers<[1], [0], [0], [1], [0, 0, 1, 1], [], []>} : vector<16x16xbf16>, vector<16x16xbf16>, vector<16x16xf32> -> vector<16x16xf32>
    %c1_151 = arith.constant 1 : index
    %c16_152 = arith.constant 16 : index
    %468 = vector.load %arg35[%c1_151, %c16_152] : memref<144x128xf32, #tpu.memory_space<vmem>>, vector<16x16xf32>
    tpu.vector_store %arg35[%c1_151, %c16_152], %467 {strides = array<i32>} : memref<144x128xf32, #tpu.memory_space<vmem>>, vector<16x16xf32>,
    %c0_153 = arith.constant 0 : index
    %c0_154 = arith.constant 0 : index
    %469 = vector.load %arg35[%c0_153, %c0_154] : memref<144x128xf32, #tpu.memory_space<vmem>>, vector<16x32xf32>
    %470 = arith.truncf %469 : vector<16x32xf32> to vector<16x32xbf16>
    %c1_155 = arith.constant 1 : index
    %c0_156 = arith.constant 0 : index
    %471 = vector.load %arg35[%c1_155, %c0_156] : memref<144x128xf32, #tpu.memory_space<vmem>>, vector<16x32xf32>
    %472 = arith.truncf %471 : vector<16x32xf32> to vector<16x32xbf16>
    %c2_157 = arith.constant 2 : index
    %c0_158 = arith.constant 0 : index
    %473 = vector.load %arg35[%c2_157, %c0_158] : memref<144x128xf32, #tpu.memory_space<vmem>>, vector<16x32xf32>
    %474 = arith.truncf %473 : vector<16x32xf32> to vector<16x32xbf16>
    %c0_159 = arith.constant 0 : index
    %c0_160 = arith.constant 0 : index
    %475 = vector.load %arg6[%c0_159, %c0_160] : memref<96x32xbf16, #tpu.memory_space<vmem>>, vector<32x32xbf16>
    %cst_161 = arith.constant dense<0.000000e+00> : vector<16x32xf32>
    %476 = tpu.matmul %470, %475, %cst_161 {dimension_numbers = #tpu.dot_dimension_numbers<[1], [0], [0], [1], [0, 0, 1, 1], [], []>} : vector<16x32xbf16>, vector<32x32xbf16>, vector<16x32xf32> -> vector<16x32xf32>
    %c32 = arith.constant 32 : index
    %c0_162 = arith.constant 0 : index
    %477 = vector.load %arg6[%c32, %c0_162] : memref<96x32xbf16, #tpu.memory_space<vmem>>, vector<32x32xbf16>
    %cst_163 = arith.constant dense<0.000000e+00> : vector<16x32xf32>
    %478 = tpu.matmul %472, %477, %cst_163 {dimension_numbers = #tpu.dot_dimension_numbers<[1], [0], [0], [1], [0, 0, 1, 1], [], []>} : vector<16x32xbf16>, vector<32x32xbf16>, vector<16x32xf32> -> vector<16x32xf32>
    %479 = arith.addf %476, %478 : vector<16x32xf32>
    %c64 = arith.constant 64 : index
    %c0_164 = arith.constant 0 : index
    %480 = vector.load %arg6[%c64, %c0_164] : memref<96x32xbf16, #tpu.memory_space<vmem>>, vector<32x32xbf16>
    %cst_165 = arith.constant dense<0.000000e+00> : vector<16x32xf32>
    %481 = tpu.matmul %474, %480, %cst_165 {dimension_numbers = #tpu.dot_dimension_numbers<[1], [0], [0], [1], [0, 0, 1, 1], [], []>} : vector<16x32xbf16>, vector<32x32xbf16>, vector<16x32xf32> -> vector<16x32xf32>
    %482 = arith.addf %479, %481 : vector<16x32xf32>
    %c0_166 = arith.constant 0 : index
    %c0_167 = arith.constant 0 : index
    %483 = vector.load %arg7[%c0_166, %c0_167] : memref<1x32xf32, #tpu.memory_space<vmem>>, vector<1x32xf32>
    %484 = vector.broadcast %483 : vector<1x32xf32> to vector<16x32xf32>
    %485 = arith.addf %482, %484 : vector<16x32xf32>
    %c0_168 = arith.constant 0 : index
    %c0_169 = arith.constant 0 : index
    %486 = vector.load %arg10[%c0_168, %c0_169] : memref<32x4xf32, #tpu.memory_space<vmem>>, vector<32x4xf32>
    %c0_170 = arith.constant 0 : index
    %c0_171 = arith.constant 0 : index
    %487 = vector.load %arg11[%c0_170, %c0_171] : memref<4x32xf32, #tpu.memory_space<vmem>>, vector<4x32xf32>
    %cst_172 = arith.constant dense<0.000000e+00> : vector<32xf32>
    %488 = vector.multi_reduction <add>, %485, %cst_172 [0] : vector<16x32xf32> to vector<32xf32>
    %489 = vector.shape_cast %488 : vector<32xf32> to vector<1x32xf32>
    %cst_173 = arith.constant dense<0.000000e+00> : vector<1x4xf32>
    %490 = tpu.matmul %489, %486, %cst_173 {dimension_numbers = #tpu.dot_dimension_numbers<[1], [0], [0], [1], [0, 0, 1, 1], [], []>} : vector<1x32xf32>, vector<32x4xf32>, vector<1x4xf32> -> vector<1x4xf32>
    %cst_174 = arith.constant 1.280000e+02 : f32
    %491 = vector.broadcast %cst_174 : f32 to vector<1x4xf32>
    %492 = arith.divf %490, %491 : vector<1x4xf32>
    %cst_175 = arith.constant dense<0.000000e+00> : vector<1x32xf32>
    %493 = tpu.matmul %492, %487, %cst_175 {dimension_numbers = #tpu.dot_dimension_numbers<[1], [0], [0], [1], [0, 0, 1, 1], [], []>} : vector<1x4xf32>, vector<4x32xf32>, vector<1x32xf32> -> vector<1x32xf32>
    %494 = vector.broadcast %493 : vector<1x32xf32> to vector<16x32xf32>
    %495 = arith.subf %485, %494 : vector<16x32xf32>
    %496 = arith.mulf %495, %495 : vector<16x32xf32>
    %cst_176 = arith.constant dense<0.000000e+00> : vector<32xf32>
    %497 = vector.multi_reduction <add>, %496, %cst_176 [0] : vector<16x32xf32> to vector<32xf32>
    %498 = vector.shape_cast %497 : vector<32xf32> to vector<1x32xf32>
    %cst_177 = arith.constant dense<0.000000e+00> : vector<1x4xf32>
    %499 = tpu.matmul %498, %486, %cst_177 {dimension_numbers = #tpu.dot_dimension_numbers<[1], [0], [0], [1], [0, 0, 1, 1], [], []>} : vector<1x32xf32>, vector<32x4xf32>, vector<1x4xf32> -> vector<1x4xf32>
    %cst_178 = arith.constant 1.280000e+02 : f32
    %500 = vector.broadcast %cst_178 : f32 to vector<1x4xf32>
    %501 = arith.divf %499, %500 : vector<1x4xf32>
    %cst_179 = arith.constant 9.99999974E-6 : f32
    %502 = vector.broadcast %cst_179 : f32 to vector<1x4xf32>
    %503 = arith.addf %501, %502 : vector<1x4xf32>
    %504 = math.rsqrt %503 : vector<1x4xf32>
    %cst_180 = arith.constant dense<0.000000e+00> : vector<1x32xf32>
    %505 = tpu.matmul %504, %487, %cst_180 {dimension_numbers = #tpu.dot_dimension_numbers<[1], [0], [0], [1], [0, 0, 1, 1], [], []>} : vector<1x4xf32>, vector<4x32xf32>, vector<1x32xf32> -> vector<1x32xf32>
    %506 = vector.broadcast %505 : vector<1x32xf32> to vector<16x32xf32>
    %507 = arith.mulf %495, %506 : vector<16x32xf32>
    %c0_181 = arith.constant 0 : index
    %c0_182 = arith.constant 0 : index
    %508 = vector.load %arg8[%c0_181, %c0_182] : memref<1x32xf32, #tpu.memory_space<vmem>>, vector<1x32xf32>
    %509 = vector.broadcast %508 : vector<1x32xf32> to vector<16x32xf32>
    %510 = arith.mulf %507, %509 : vector<16x32xf32>
    %c0_183 = arith.constant 0 : index
    %c0_184 = arith.constant 0 : index
    %511 = vector.load %arg9[%c0_183, %c0_184] : memref<1x32xf32, #tpu.memory_space<vmem>>, vector<1x32xf32>
    %512 = vector.broadcast %511 : vector<1x32xf32> to vector<16x32xf32>
    %513 = arith.addf %510, %512 : vector<16x32xf32>
    %cst_185 = arith.constant 0.000000e+00 : f32
    %514 = vector.broadcast %cst_185 : f32 to vector<16x32xf32>
    %515 = arith.maximumf %513, %514 : vector<16x32xf32>
    %516 = arith.truncf %515 : vector<16x32xf32> to vector<16x32xbf16>
    %c0_186 = arith.constant 0 : index
    %c0_187 = arith.constant 0 : index
    %517 = vector.load %arg12[%c0_186, %c0_187] : memref<32x16xbf16, #tpu.memory_space<vmem>>, vector<32x16xbf16>
    %518 = vector.extract_strided_slice %516 {offsets = [0, 0], sizes = [16, 16], strides = [1, 1]} : vector<16x32xbf16> to vector<16x16xbf16>
    %cst_188 = arith.constant dense<0.000000e+00> : vector<32x16xf32>
    %519 = tpu.matmul %517, %518, %cst_188 {dimension_numbers = #tpu.dot_dimension_numbers<[1], [0], [0], [1], [0, 0, 1, 1], [], []>} : vector<32x16xbf16>, vector<16x16xbf16>, vector<32x16xf32> -> vector<32x16xf32>
    %c0_189 = arith.constant 0 : index
    %c0_190 = arith.constant 0 : index
    %520 = vector.load %arg13[%c0_189, %c0_190] : memref<32x16xbf16, #tpu.memory_space<vmem>>, vector<32x16xbf16>
    %521 = vector.extract_strided_slice %516 {offsets = [0, 16], sizes = [16, 16], strides = [1, 1]} : vector<16x32xbf16> to vector<16x16xbf16>
    %cst_191 = arith.constant dense<0.000000e+00> : vector<32x16xf32>
    %522 = tpu.matmul %520, %521, %cst_191 {dimension_numbers = #tpu.dot_dimension_numbers<[1], [0], [0], [1], [0, 0, 1, 1], [], []>} : vector<32x16xbf16>, vector<16x16xbf16>, vector<32x16xf32> -> vector<32x16xf32>
    %523 = arith.addf %519, %522 : vector<32x16xf32>
    %c1_192 = arith.constant 1 : index
    %c0_193 = arith.constant 0 : index
    %524 = vector.load %arg35[%c1_192, %c0_193] : memref<144x128xf32, #tpu.memory_space<vmem>>, vector<32x16xf32>
    tpu.vector_store %arg35[%c1_192, %c0_193], %523 {strides = array<i32>} : memref<144x128xf32, #tpu.memory_space<vmem>>, vector<32x16xf32>,
    %c0_194 = arith.constant 0 : index
    %c0_195 = arith.constant 0 : index
    %525 = vector.load %arg35[%c0_194, %c0_195] : memref<144x128xf32, #tpu.memory_space<vmem>>, vector<32x16xf32>
    %526 = arith.truncf %525 : vector<32x16xf32> to vector<32x16xbf16>
    %c1_196 = arith.constant 1 : index
    %c0_197 = arith.constant 0 : index
    %527 = vector.load %arg35[%c1_196, %c0_197] : memref<144x128xf32, #tpu.memory_space<vmem>>, vector<32x16xf32>
    %528 = arith.truncf %527 : vector<32x16xf32> to vector<32x16xbf16>
    %c2_198 = arith.constant 2 : index
    %c0_199 = arith.constant 0 : index
    %529 = vector.load %arg35[%c2_198, %c0_199] : memref<144x128xf32, #tpu.memory_space<vmem>>, vector<32x16xf32>
    %530 = arith.truncf %529 : vector<32x16xf32> to vector<32x16xbf16>
    %c0_200 = arith.constant 0 : index
    %c0_201 = arith.constant 0 : index
    %531 = vector.load %arg14[%c0_200, %c0_201] : memref<48x32xbf16, #tpu.memory_space<vmem>>, vector<16x32xbf16>
    %cst_202 = arith.constant dense<0.000000e+00> : vector<32x32xf32>
    %532 = tpu.matmul %526, %531, %cst_202 {dimension_numbers = #tpu.dot_dimension_numbers<[1], [0], [0], [1], [0, 0, 1, 1], [], []>} : vector<32x16xbf16>, vector<16x32xbf16>, vector<32x32xf32> -> vector<32x32xf32>
    %c16_203 = arith.constant 16 : index
    %c0_204 = arith.constant 0 : index
    %533 = vector.load %arg14[%c16_203, %c0_204] : memref<48x32xbf16, #tpu.memory_space<vmem>>, vector<16x32xbf16>
    %cst_205 = arith.constant dense<0.000000e+00> : vector<32x32xf32>
    %534 = tpu.matmul %528, %533, %cst_205 {dimension_numbers = #tpu.dot_dimension_numbers<[1], [0], [0], [1], [0, 0, 1, 1], [], []>} : vector<32x16xbf16>, vector<16x32xbf16>, vector<32x32xf32> -> vector<32x32xf32>
    %535 = arith.addf %532, %534 : vector<32x32xf32>
    %c32_206 = arith.constant 32 : index
    %c0_207 = arith.constant 0 : index
    %536 = vector.load %arg14[%c32_206, %c0_207] : memref<48x32xbf16, #tpu.memory_space<vmem>>, vector<16x32xbf16>
    %cst_208 = arith.constant dense<0.000000e+00> : vector<32x32xf32>
    %537 = tpu.matmul %530, %536, %cst_208 {dimension_numbers = #tpu.dot_dimension_numbers<[1], [0], [0], [1], [0, 0, 1, 1], [], []>} : vector<32x16xbf16>, vector<16x32xbf16>, vector<32x32xf32> -> vector<32x32xf32>
    %538 = arith.addf %535, %537 : vector<32x32xf32>
    %c0_209 = arith.constant 0 : index
    %c0_210 = arith.constant 0 : index
    %539 = vector.load %arg15[%c0_209, %c0_210] : memref<1x32xf32, #tpu.memory_space<vmem>>, vector<1x32xf32>
    %540 = vector.broadcast %539 : vector<1x32xf32> to vector<32x32xf32>
    %541 = arith.addf %538, %540 : vector<32x32xf32>
    %c0_211 = arith.constant 0 : index
    %c0_212 = arith.constant 0 : index
    %542 = vector.load %arg18[%c0_211, %c0_212] : memref<32x4xf32, #tpu.memory_space<vmem>>, vector<32x4xf32>
    %c0_213 = arith.constant 0 : index
    %c0_214 = arith.constant 0 : index
    %543 = vector.load %arg19[%c0_213, %c0_214] : memref<4x32xf32, #tpu.memory_space<vmem>>, vector<4x32xf32>
    %cst_215 = arith.constant dense<0.000000e+00> : vector<32xf32>
    %544 = vector.multi_reduction <add>, %541, %cst_215 [0] : vector<32x32xf32> to vector<32xf32>
    %545 = vector.shape_cast %544 : vector<32xf32> to vector<1x32xf32>
    %cst_216 = arith.constant dense<0.000000e+00> : vector<1x4xf32>
    %546 = tpu.matmul %545, %542, %cst_216 {dimension_numbers = #tpu.dot_dimension_numbers<[1], [0], [0], [1], [0, 0, 1, 1], [], []>} : vector<1x32xf32>, vector<32x4xf32>, vector<1x4xf32> -> vector<1x4xf32>
    %cst_217 = arith.constant 2.560000e+02 : f32
    %547 = vector.broadcast %cst_217 : f32 to vector<1x4xf32>
    %548 = arith.divf %546, %547 : vector<1x4xf32>
    %cst_218 = arith.constant dense<0.000000e+00> : vector<1x32xf32>
    %549 = tpu.matmul %548, %543, %cst_218 {dimension_numbers = #tpu.dot_dimension_numbers<[1], [0], [0], [1], [0, 0, 1, 1], [], []>} : vector<1x4xf32>, vector<4x32xf32>, vector<1x32xf32> -> vector<1x32xf32>
    %550 = vector.broadcast %549 : vector<1x32xf32> to vector<32x32xf32>
    %551 = arith.subf %541, %550 : vector<32x32xf32>
    %552 = arith.mulf %551, %551 : vector<32x32xf32>
    %cst_219 = arith.constant dense<0.000000e+00> : vector<32xf32>
    %553 = vector.multi_reduction <add>, %552, %cst_219 [0] : vector<32x32xf32> to vector<32xf32>
    %554 = vector.shape_cast %553 : vector<32xf32> to vector<1x32xf32>
    %cst_220 = arith.constant dense<0.000000e+00> : vector<1x4xf32>
    %555 = tpu.matmul %554, %542, %cst_220 {dimension_numbers = #tpu.dot_dimension_numbers<[1], [0], [0], [1], [0, 0, 1, 1], [], []>} : vector<1x32xf32>, vector<32x4xf32>, vector<1x4xf32> -> vector<1x4xf32>
    %cst_221 = arith.constant 2.560000e+02 : f32
    %556 = vector.broadcast %cst_221 : f32 to vector<1x4xf32>
    %557 = arith.divf %555, %556 : vector<1x4xf32>
    %cst_222 = arith.constant 9.99999974E-6 : f32
    %558 = vector.broadcast %cst_222 : f32 to vector<1x4xf32>
    %559 = arith.addf %557, %558 : vector<1x4xf32>
    %560 = math.rsqrt %559 : vector<1x4xf32>
    %cst_223 = arith.constant dense<0.000000e+00> : vector<1x32xf32>
    %561 = tpu.matmul %560, %543, %cst_223 {dimension_numbers = #tpu.dot_dimension_numbers<[1], [0], [0], [1], [0, 0, 1, 1], [], []>} : vector<1x4xf32>, vector<4x32xf32>, vector<1x32xf32> -> vector<1x32xf32>
    %562 = vector.broadcast %561 : vector<1x32xf32> to vector<32x32xf32>
    %563 = arith.mulf %551, %562 : vector<32x32xf32>
    %c0_224 = arith.constant 0 : index
    %c0_225 = arith.constant 0 : index
    %564 = vector.load %arg16[%c0_224, %c0_225] : memref<1x32xf32, #tpu.memory_space<vmem>>, vector<1x32xf32>
    %565 = vector.broadcast %564 : vector<1x32xf32> to vector<32x32xf32>
    %566 = arith.mulf %563, %565 : vector<32x32xf32>
    %c0_226 = arith.constant 0 : index
    %c0_227 = arith.constant 0 : index
    %567 = vector.load %arg17[%c0_226, %c0_227] : memref<1x32xf32, #tpu.memory_space<vmem>>, vector<1x32xf32>
    %568 = vector.broadcast %567 : vector<1x32xf32> to vector<32x32xf32>
    %569 = arith.addf %566, %568 : vector<32x32xf32>
    %cst_228 = arith.constant 0.000000e+00 : f32
    %570 = vector.broadcast %cst_228 : f32 to vector<32x32xf32>
    %571 = arith.maximumf %569, %570 : vector<32x32xf32>
    %572 = arith.truncf %571 : vector<32x32xf32> to vector<32x32xbf16>
    %c0_229 = arith.constant 0 : index
    %c0_230 = arith.constant 0 : index
    %573 = vector.load %arg20[%c0_229, %c0_230] : memref<64x32xbf16, #tpu.memory_space<vmem>>, vector<64x32xbf16>
    %574 = vector.extract_strided_slice %572 {offsets = [0, 0], sizes = [32, 16], strides = [1, 1]} : vector<32x32xbf16> to vector<32x16xbf16>
    %cst_231 = arith.constant dense<0.000000e+00> : vector<64x16xf32>
    %575 = tpu.matmul %573, %574, %cst_231 {dimension_numbers = #tpu.dot_dimension_numbers<[1], [0], [0], [1], [0, 0, 1, 1], [], []>} : vector<64x32xbf16>, vector<32x16xbf16>, vector<64x16xf32> -> vector<64x16xf32>
    %c0_232 = arith.constant 0 : index
    %c0_233 = arith.constant 0 : index
    %576 = vector.load %arg21[%c0_232, %c0_233] : memref<64x32xbf16, #tpu.memory_space<vmem>>, vector<64x32xbf16>
    %577 = vector.extract_strided_slice %572 {offsets = [0, 16], sizes = [32, 16], strides = [1, 1]} : vector<32x32xbf16> to vector<32x16xbf16>
    %cst_234 = arith.constant dense<0.000000e+00> : vector<64x16xf32>
    %578 = tpu.matmul %576, %577, %cst_234 {dimension_numbers = #tpu.dot_dimension_numbers<[1], [0], [0], [1], [0, 0, 1, 1], [], []>} : vector<64x32xbf16>, vector<32x16xbf16>, vector<64x16xf32> -> vector<64x16xf32>
    %579 = arith.addf %575, %578 : vector<64x16xf32>
    %c1_235 = arith.constant 1 : index
    %c0_236 = arith.constant 0 : index
    %580 = vector.load %arg35[%c1_235, %c0_236] : memref<144x128xf32, #tpu.memory_space<vmem>>, vector<64x16xf32>
    tpu.vector_store %arg35[%c1_235, %c0_236], %579 {strides = array<i32>} : memref<144x128xf32, #tpu.memory_space<vmem>>, vector<64x16xf32>,
    %c0_237 = arith.constant 0 : index
    %c0_238 = arith.constant 0 : index
    %581 = vector.load %arg35[%c0_237, %c0_238] : memref<144x128xf32, #tpu.memory_space<vmem>>, vector<64x16xf32>
    %582 = arith.truncf %581 : vector<64x16xf32> to vector<64x16xbf16>
    %c1_239 = arith.constant 1 : index
    %c0_240 = arith.constant 0 : index
    %583 = vector.load %arg35[%c1_239, %c0_240] : memref<144x128xf32, #tpu.memory_space<vmem>>, vector<64x16xf32>
    %584 = arith.truncf %583 : vector<64x16xf32> to vector<64x16xbf16>
    %c2_241 = arith.constant 2 : index
    %c0_242 = arith.constant 0 : index
    %585 = vector.load %arg35[%c2_241, %c0_242] : memref<144x128xf32, #tpu.memory_space<vmem>>, vector<64x16xf32>
    %586 = arith.truncf %585 : vector<64x16xf32> to vector<64x16xbf16>
    %c0_243 = arith.constant 0 : index
    %c0_244 = arith.constant 0 : index
    %587 = vector.load %arg22[%c0_243, %c0_244] : memref<48x16xbf16, #tpu.memory_space<vmem>>, vector<16x16xbf16>
    %cst_245 = arith.constant dense<0.000000e+00> : vector<64x16xf32>
    %588 = tpu.matmul %582, %587, %cst_245 {dimension_numbers = #tpu.dot_dimension_numbers<[1], [0], [0], [1], [0, 0, 1, 1], [], []>} : vector<64x16xbf16>, vector<16x16xbf16>, vector<64x16xf32> -> vector<64x16xf32>
    %c16_246 = arith.constant 16 : index
    %c0_247 = arith.constant 0 : index
    %589 = vector.load %arg22[%c16_246, %c0_247] : memref<48x16xbf16, #tpu.memory_space<vmem>>, vector<16x16xbf16>
    %cst_248 = arith.constant dense<0.000000e+00> : vector<64x16xf32>
    %590 = tpu.matmul %584, %589, %cst_248 {dimension_numbers = #tpu.dot_dimension_numbers<[1], [0], [0], [1], [0, 0, 1, 1], [], []>} : vector<64x16xbf16>, vector<16x16xbf16>, vector<64x16xf32> -> vector<64x16xf32>
    %591 = arith.addf %588, %590 : vector<64x16xf32>
    %c32_249 = arith.constant 32 : index
    %c0_250 = arith.constant 0 : index
    %592 = vector.load %arg22[%c32_249, %c0_250] : memref<48x16xbf16, #tpu.memory_space<vmem>>, vector<16x16xbf16>
    %cst_251 = arith.constant dense<0.000000e+00> : vector<64x16xf32>
    %593 = tpu.matmul %586, %592, %cst_251 {dimension_numbers = #tpu.dot_dimension_numbers<[1], [0], [0], [1], [0, 0, 1, 1], [], []>} : vector<64x16xbf16>, vector<16x16xbf16>, vector<64x16xf32> -> vector<64x16xf32>
    %594 = arith.addf %591, %593 : vector<64x16xf32>
    %c0_252 = arith.constant 0 : index
    %c0_253 = arith.constant 0 : index
    %595 = vector.load %arg23[%c0_252, %c0_253] : memref<1x16xf32, #tpu.memory_space<vmem>>, vector<1x16xf32>
    %596 = vector.broadcast %595 : vector<1x16xf32> to vector<64x16xf32>
    %597 = arith.addf %594, %596 : vector<64x16xf32>
    %c0_254 = arith.constant 0 : index
    %c0_255 = arith.constant 0 : index
    %598 = vector.load %arg26[%c0_254, %c0_255] : memref<16x4xf32, #tpu.memory_space<vmem>>, vector<16x4xf32>
    %c0_256 = arith.constant 0 : index
    %c0_257 = arith.constant 0 : index
    %599 = vector.load %arg27[%c0_256, %c0_257] : memref<4x16xf32, #tpu.memory_space<vmem>>, vector<4x16xf32>
    %cst_258 = arith.constant dense<0.000000e+00> : vector<16xf32>
    %600 = vector.multi_reduction <add>, %597, %cst_258 [0] : vector<64x16xf32> to vector<16xf32>
    %601 = vector.shape_cast %600 : vector<16xf32> to vector<1x16xf32>
    %cst_259 = arith.constant dense<0.000000e+00> : vector<1x4xf32>
    %602 = tpu.matmul %601, %598, %cst_259 {dimension_numbers = #tpu.dot_dimension_numbers<[1], [0], [0], [1], [0, 0, 1, 1], [], []>} : vector<1x16xf32>, vector<16x4xf32>, vector<1x4xf32> -> vector<1x4xf32>
    %cst_260 = arith.constant 2.560000e+02 : f32
    %603 = vector.broadcast %cst_260 : f32 to vector<1x4xf32>
    %604 = arith.divf %602, %603 : vector<1x4xf32>
    %cst_261 = arith.constant dense<0.000000e+00> : vector<1x16xf32>
    %605 = tpu.matmul %604, %599, %cst_261 {dimension_numbers = #tpu.dot_dimension_numbers<[1], [0], [0], [1], [0, 0, 1, 1], [], []>} : vector<1x4xf32>, vector<4x16xf32>, vector<1x16xf32> -> vector<1x16xf32>
    %606 = vector.broadcast %605 : vector<1x16xf32> to vector<64x16xf32>
    %607 = arith.subf %597, %606 : vector<64x16xf32>
    %608 = arith.mulf %607, %607 : vector<64x16xf32>
    %cst_262 = arith.constant dense<0.000000e+00> : vector<16xf32>
    %609 = vector.multi_reduction <add>, %608, %cst_262 [0] : vector<64x16xf32> to vector<16xf32>
    %610 = vector.shape_cast %609 : vector<16xf32> to vector<1x16xf32>
    %cst_263 = arith.constant dense<0.000000e+00> : vector<1x4xf32>
    %611 = tpu.matmul %610, %598, %cst_263 {dimension_numbers = #tpu.dot_dimension_numbers<[1], [0], [0], [1], [0, 0, 1, 1], [], []>} : vector<1x16xf32>, vector<16x4xf32>, vector<1x4xf32> -> vector<1x4xf32>
    %cst_264 = arith.constant 2.560000e+02 : f32
    %612 = vector.broadcast %cst_264 : f32 to vector<1x4xf32>
    %613 = arith.divf %611, %612 : vector<1x4xf32>
    %cst_265 = arith.constant 9.99999974E-6 : f32
    %614 = vector.broadcast %cst_265 : f32 to vector<1x4xf32>
    %615 = arith.addf %613, %614 : vector<1x4xf32>
    %616 = math.rsqrt %615 : vector<1x4xf32>
    %cst_266 = arith.constant dense<0.000000e+00> : vector<1x16xf32>
    %617 = tpu.matmul %616, %599, %cst_266 {dimension_numbers = #tpu.dot_dimension_numbers<[1], [0], [0], [1], [0, 0, 1, 1], [], []>} : vector<1x4xf32>, vector<4x16xf32>, vector<1x16xf32> -> vector<1x16xf32>
    %618 = vector.broadcast %617 : vector<1x16xf32> to vector<64x16xf32>
    %619 = arith.mulf %607, %618 : vector<64x16xf32>
    %c0_267 = arith.constant 0 : index
    %c0_268 = arith.constant 0 : index
    %620 = vector.load %arg24[%c0_267, %c0_268] : memref<1x16xf32, #tpu.memory_space<vmem>>, vector<1x16xf32>
    %621 = vector.broadcast %620 : vector<1x16xf32> to vector<64x16xf32>
    %622 = arith.mulf %619, %621 : vector<64x16xf32>
    %c0_269 = arith.constant 0 : index
    %c0_270 = arith.constant 0 : index
    %623 = vector.load %arg25[%c0_269, %c0_270] : memref<1x16xf32, #tpu.memory_space<vmem>>, vector<1x16xf32>
    %624 = vector.broadcast %623 : vector<1x16xf32> to vector<64x16xf32>
    %625 = arith.addf %622, %624 : vector<64x16xf32>
    %cst_271 = arith.constant 0.000000e+00 : f32
    %626 = vector.broadcast %cst_271 : f32 to vector<64x16xf32>
    %627 = arith.maximumf %625, %626 : vector<64x16xf32>
    %628 = arith.truncf %627 : vector<64x16xf32> to vector<64x16xbf16>
    %c0_272 = arith.constant 0 : index
    %c0_273 = arith.constant 0 : index
    %629 = vector.load %arg28[%c0_272, %c0_273] : memref<128x64xbf16, #tpu.memory_space<vmem>>, vector<128x64xbf16>
    %630 = vector.extract_strided_slice %628 {offsets = [0, 0], sizes = [64, 8], strides = [1, 1]} : vector<64x16xbf16> to vector<64x8xbf16>
    %cst_274 = arith.constant dense<0.000000e+00> : vector<128x8xf32>
    %631 = tpu.matmul %629, %630, %cst_274 {dimension_numbers = #tpu.dot_dimension_numbers<[1], [0], [0], [1], [0, 0, 1, 1], [], []>} : vector<128x64xbf16>, vector<64x8xbf16>, vector<128x8xf32> -> vector<128x8xf32>
    %c0_275 = arith.constant 0 : index
    %c0_276 = arith.constant 0 : index
    %632 = vector.load %arg29[%c0_275, %c0_276] : memref<128x64xbf16, #tpu.memory_space<vmem>>, vector<128x64xbf16>
    %633 = vector.extract_strided_slice %628 {offsets = [0, 8], sizes = [64, 8], strides = [1, 1]} : vector<64x16xbf16> to vector<64x8xbf16>
    %cst_277 = arith.constant dense<0.000000e+00> : vector<128x8xf32>
    %634 = tpu.matmul %632, %633, %cst_277 {dimension_numbers = #tpu.dot_dimension_numbers<[1], [0], [0], [1], [0, 0, 1, 1], [], []>} : vector<128x64xbf16>, vector<64x8xbf16>, vector<128x8xf32> -> vector<128x8xf32>
    %635 = arith.addf %631, %634 : vector<128x8xf32>
    %c1_278 = arith.constant 1 : index
    %c0_279 = arith.constant 0 : index
    %636 = vector.load %arg35[%c1_278, %c0_279] : memref<144x128xf32, #tpu.memory_space<vmem>>, vector<128x8xf32>
    tpu.vector_store %arg35[%c1_278, %c0_279], %635 {strides = array<i32>} : memref<144x128xf32, #tpu.memory_space<vmem>>, vector<128x8xf32>,
    %cst_280 = arith.constant 0.000000e+00 : f32
    %637 = vector.broadcast %cst_280 : f32 to vector<3x128xf32>
    %c0_281 = arith.constant 0 : index
    %c0_282 = arith.constant 0 : index
    %638 = vector.load %arg31[%c0_281, %c0_282] : memref<3x1xf32, #tpu.memory_space<vmem>>, vector<3x1xf32>
    %639 = vector.broadcast %638 : vector<3x1xf32> to vector<3x128xf32>
    %640 = arith.addf %637, %639 : vector<3x128xf32>
    %c0_283 = arith.constant 0 : index
    %c0_284 = arith.constant 0 : index
    %c0_285 = arith.constant 0 : index
    %641 = vector.load %arg30[%c0_283, %c0_284, %c0_285] : memref<12x3x8xbf16, #tpu.memory_space<vmem>>, vector<1x3x8xbf16>
    %642 = vector.shape_cast %641 : vector<1x3x8xbf16> to vector<3x8xbf16>
    %c1_286 = arith.constant 1 : index
    %c0_287 = arith.constant 0 : index
    %643 = vector.load %arg35[%c1_286, %c0_287] : memref<144x128xf32, #tpu.memory_space<vmem>>, vector<128x8xf32>
    %644 = arith.truncf %643 : vector<128x8xf32> to vector<128x8xbf16>
    %cst_288 = arith.constant dense<0.000000e+00> : vector<3x128xf32>
    %645 = tpu.matmul %642, %644, %cst_288 {dimension_numbers = #tpu.dot_dimension_numbers<[1], [1], [0], [0], [0, 0, 1, 0], [], []>} : vector<3x8xbf16>, vector<128x8xbf16>, vector<3x128xf32> -> vector<3x128xf32>
    %646 = arith.addf %640, %645 : vector<3x128xf32>
    %c1_289 = arith.constant 1 : index
    %c0_290 = arith.constant 0 : index
    %c0_291 = arith.constant 0 : index
    %647 = vector.load %arg30[%c1_289, %c0_290, %c0_291] : memref<12x3x8xbf16, #tpu.memory_space<vmem>>, vector<1x3x8xbf16>
    %648 = vector.shape_cast %647 : vector<1x3x8xbf16> to vector<3x8xbf16>
    %c2_292 = arith.constant 2 : index
    %c0_293 = arith.constant 0 : index
    %649 = vector.load %arg35[%c2_292, %c0_293] : memref<144x128xf32, #tpu.memory_space<vmem>>, vector<128x8xf32>
    %650 = arith.truncf %649 : vector<128x8xf32> to vector<128x8xbf16>
    %cst_294 = arith.constant dense<0.000000e+00> : vector<3x128xf32>
    %651 = tpu.matmul %648, %650, %cst_294 {dimension_numbers = #tpu.dot_dimension_numbers<[1], [1], [0], [0], [0, 0, 1, 0], [], []>} : vector<3x8xbf16>, vector<128x8xbf16>, vector<3x128xf32> -> vector<3x128xf32>
    %652 = arith.addf %646, %651 : vector<3x128xf32>
    %c2_295 = arith.constant 2 : index
    %c0_296 = arith.constant 0 : index
    %c0_297 = arith.constant 0 : index
    %653 = vector.load %arg30[%c2_295, %c0_296, %c0_297] : memref<12x3x8xbf16, #tpu.memory_space<vmem>>, vector<1x3x8xbf16>
    %654 = vector.shape_cast %653 : vector<1x3x8xbf16> to vector<3x8xbf16>
    %c3_298 = arith.constant 3 : index
    %c0_299 = arith.constant 0 : index
    %655 = vector.load %arg35[%c3_298, %c0_299] : memref<144x128xf32, #tpu.memory_space<vmem>>, vector<128x8xf32>
    %656 = arith.truncf %655 : vector<128x8xf32> to vector<128x8xbf16>
    %cst_300 = arith.constant dense<0.000000e+00> : vector<3x128xf32>
    %657 = tpu.matmul %654, %656, %cst_300 {dimension_numbers = #tpu.dot_dimension_numbers<[1], [1], [0], [0], [0, 0, 1, 0], [], []>} : vector<3x8xbf16>, vector<128x8xbf16>, vector<3x128xf32> -> vector<3x128xf32>
    %658 = arith.addf %652, %657 : vector<3x128xf32>
    %c3_301 = arith.constant 3 : index
    %c0_302 = arith.constant 0 : index
    %c0_303 = arith.constant 0 : index
    %659 = vector.load %arg30[%c3_301, %c0_302, %c0_303] : memref<12x3x8xbf16, #tpu.memory_space<vmem>>, vector<1x3x8xbf16>
    %660 = vector.shape_cast %659 : vector<1x3x8xbf16> to vector<3x8xbf16>
    %c4_304 = arith.constant 4 : index
    %c0_305 = arith.constant 0 : index
    %661 = vector.load %arg35[%c4_304, %c0_305] : memref<144x128xf32, #tpu.memory_space<vmem>>, vector<128x8xf32>
    %662 = arith.truncf %661 : vector<128x8xf32> to vector<128x8xbf16>
    %cst_306 = arith.constant dense<0.000000e+00> : vector<3x128xf32>
    %663 = tpu.matmul %660, %662, %cst_306 {dimension_numbers = #tpu.dot_dimension_numbers<[1], [1], [0], [0], [0, 0, 1, 0], [], []>} : vector<3x8xbf16>, vector<128x8xbf16>, vector<3x128xf32> -> vector<3x128xf32>
    %664 = arith.addf %658, %663 : vector<3x128xf32>
    %c4_307 = arith.constant 4 : index
    %c0_308 = arith.constant 0 : index
    %c0_309 = arith.constant 0 : index
    %665 = vector.load %arg30[%c4_307, %c0_308, %c0_309] : memref<12x3x8xbf16, #tpu.memory_space<vmem>>, vector<1x3x8xbf16>
    %666 = vector.shape_cast %665 : vector<1x3x8xbf16> to vector<3x8xbf16>
    %c5_310 = arith.constant 5 : index
    %c0_311 = arith.constant 0 : index
    %667 = vector.load %arg35[%c5_310, %c0_311] : memref<144x128xf32, #tpu.memory_space<vmem>>, vector<128x8xf32>
    %668 = arith.truncf %667 : vector<128x8xf32> to vector<128x8xbf16>
    %cst_312 = arith.constant dense<0.000000e+00> : vector<3x128xf32>
    %669 = tpu.matmul %666, %668, %cst_312 {dimension_numbers = #tpu.dot_dimension_numbers<[1], [1], [0], [0], [0, 0, 1, 0], [], []>} : vector<3x8xbf16>, vector<128x8xbf16>, vector<3x128xf32> -> vector<3x128xf32>
    %670 = arith.addf %664, %669 : vector<3x128xf32>
    %c5_313 = arith.constant 5 : index
    %c0_314 = arith.constant 0 : index
    %c0_315 = arith.constant 0 : index
    %671 = vector.load %arg30[%c5_313, %c0_314, %c0_315] : memref<12x3x8xbf16, #tpu.memory_space<vmem>>, vector<1x3x8xbf16>
    %672 = vector.shape_cast %671 : vector<1x3x8xbf16> to vector<3x8xbf16>
    %c6_316 = arith.constant 6 : index
    %c0_317 = arith.constant 0 : index
    %673 = vector.load %arg35[%c6_316, %c0_317] : memref<144x128xf32, #tpu.memory_space<vmem>>, vector<128x8xf32>
    %674 = arith.truncf %673 : vector<128x8xf32> to vector<128x8xbf16>
    %cst_318 = arith.constant dense<0.000000e+00> : vector<3x128xf32>
    %675 = tpu.matmul %672, %674, %cst_318 {dimension_numbers = #tpu.dot_dimension_numbers<[1], [1], [0], [0], [0, 0, 1, 0], [], []>} : vector<3x8xbf16>, vector<128x8xbf16>, vector<3x128xf32> -> vector<3x128xf32>
    %676 = arith.addf %670, %675 : vector<3x128xf32>
    %c6_319 = arith.constant 6 : index
    %c0_320 = arith.constant 0 : index
    %c0_321 = arith.constant 0 : index
    %677 = vector.load %arg30[%c6_319, %c0_320, %c0_321] : memref<12x3x8xbf16, #tpu.memory_space<vmem>>, vector<1x3x8xbf16>
    %678 = vector.shape_cast %677 : vector<1x3x8xbf16> to vector<3x8xbf16>
    %c7_322 = arith.constant 7 : index
    %c0_323 = arith.constant 0 : index
    %679 = vector.load %arg35[%c7_322, %c0_323] : memref<144x128xf32, #tpu.memory_space<vmem>>, vector<128x8xf32>
    %680 = arith.truncf %679 : vector<128x8xf32> to vector<128x8xbf16>
    %cst_324 = arith.constant dense<0.000000e+00> : vector<3x128xf32>
    %681 = tpu.matmul %678, %680, %cst_324 {dimension_numbers = #tpu.dot_dimension_numbers<[1], [1], [0], [0], [0, 0, 1, 0], [], []>} : vector<3x8xbf16>, vector<128x8xbf16>, vector<3x128xf32> -> vector<3x128xf32>
    %682 = arith.addf %676, %681 : vector<3x128xf32>
    %c7_325 = arith.constant 7 : index
    %c0_326 = arith.constant 0 : index
    %c0_327 = arith.constant 0 : index
    %683 = vector.load %arg30[%c7_325, %c0_326, %c0_327] : memref<12x3x8xbf16, #tpu.memory_space<vmem>>, vector<1x3x8xbf16>
    %684 = vector.shape_cast %683 : vector<1x3x8xbf16> to vector<3x8xbf16>
    %c8_328 = arith.constant 8 : index
    %c0_329 = arith.constant 0 : index
    %685 = vector.load %arg35[%c8_328, %c0_329] : memref<144x128xf32, #tpu.memory_space<vmem>>, vector<128x8xf32>
    %686 = arith.truncf %685 : vector<128x8xf32> to vector<128x8xbf16>
    %cst_330 = arith.constant dense<0.000000e+00> : vector<3x128xf32>
    %687 = tpu.matmul %684, %686, %cst_330 {dimension_numbers = #tpu.dot_dimension_numbers<[1], [1], [0], [0], [0, 0, 1, 0], [], []>} : vector<3x8xbf16>, vector<128x8xbf16>, vector<3x128xf32> -> vector<3x128xf32>
    %688 = arith.addf %682, %687 : vector<3x128xf32>
    %c8_331 = arith.constant 8 : index
    %c0_332 = arith.constant 0 : index
    %c0_333 = arith.constant 0 : index
    %689 = vector.load %arg30[%c8_331, %c0_332, %c0_333] : memref<12x3x8xbf16, #tpu.memory_space<vmem>>, vector<1x3x8xbf16>
    %690 = vector.shape_cast %689 : vector<1x3x8xbf16> to vector<3x8xbf16>
    %c9_334 = arith.constant 9 : index
    %c0_335 = arith.constant 0 : index
    %691 = vector.load %arg35[%c9_334, %c0_335] : memref<144x128xf32, #tpu.memory_space<vmem>>, vector<128x8xf32>
    %692 = arith.truncf %691 : vector<128x8xf32> to vector<128x8xbf16>
    %cst_336 = arith.constant dense<0.000000e+00> : vector<3x128xf32>
    %693 = tpu.matmul %690, %692, %cst_336 {dimension_numbers = #tpu.dot_dimension_numbers<[1], [1], [0], [0], [0, 0, 1, 0], [], []>} : vector<3x8xbf16>, vector<128x8xbf16>, vector<3x128xf32> -> vector<3x128xf32>
    %694 = arith.addf %688, %693 : vector<3x128xf32>
    %c9_337 = arith.constant 9 : index
    %c0_338 = arith.constant 0 : index
    %c0_339 = arith.constant 0 : index
    %695 = vector.load %arg30[%c9_337, %c0_338, %c0_339] : memref<12x3x8xbf16, #tpu.memory_space<vmem>>, vector<1x3x8xbf16>
    %696 = vector.shape_cast %695 : vector<1x3x8xbf16> to vector<3x8xbf16>
    %c10_340 = arith.constant 10 : index
    %c0_341 = arith.constant 0 : index
    %697 = vector.load %arg35[%c10_340, %c0_341] : memref<144x128xf32, #tpu.memory_space<vmem>>, vector<128x8xf32>
    %698 = arith.truncf %697 : vector<128x8xf32> to vector<128x8xbf16>
    %cst_342 = arith.constant dense<0.000000e+00> : vector<3x128xf32>
    %699 = tpu.matmul %696, %698, %cst_342 {dimension_numbers = #tpu.dot_dimension_numbers<[1], [1], [0], [0], [0, 0, 1, 0], [], []>} : vector<3x8xbf16>, vector<128x8xbf16>, vector<3x128xf32> -> vector<3x128xf32>
    %700 = arith.addf %694, %699 : vector<3x128xf32>
    %c10_343 = arith.constant 10 : index
    %c0_344 = arith.constant 0 : index
    %c0_345 = arith.constant 0 : index
    %701 = vector.load %arg30[%c10_343, %c0_344, %c0_345] : memref<12x3x8xbf16, #tpu.memory_space<vmem>>, vector<1x3x8xbf16>
    %702 = vector.shape_cast %701 : vector<1x3x8xbf16> to vector<3x8xbf16>
    %c11_346 = arith.constant 11 : index
    %c0_347 = arith.constant 0 : index
    %703 = vector.load %arg35[%c11_346, %c0_347] : memref<144x128xf32, #tpu.memory_space<vmem>>, vector<128x8xf32>
    %704 = arith.truncf %703 : vector<128x8xf32> to vector<128x8xbf16>
    %cst_348 = arith.constant dense<0.000000e+00> : vector<3x128xf32>
    %705 = tpu.matmul %702, %704, %cst_348 {dimension_numbers = #tpu.dot_dimension_numbers<[1], [1], [0], [0], [0, 0, 1, 0], [], []>} : vector<3x8xbf16>, vector<128x8xbf16>, vector<3x128xf32> -> vector<3x128xf32>
    %706 = arith.addf %700, %705 : vector<3x128xf32>
    %c11_349 = arith.constant 11 : index
    %c0_350 = arith.constant 0 : index
    %c0_351 = arith.constant 0 : index
    %707 = vector.load %arg30[%c11_349, %c0_350, %c0_351] : memref<12x3x8xbf16, #tpu.memory_space<vmem>>, vector<1x3x8xbf16>
    %708 = vector.shape_cast %707 : vector<1x3x8xbf16> to vector<3x8xbf16>
    %c12_352 = arith.constant 12 : index
    %c0_353 = arith.constant 0 : index
    %709 = vector.load %arg35[%c12_352, %c0_353] : memref<144x128xf32, #tpu.memory_space<vmem>>, vector<128x8xf32>
    %710 = arith.truncf %709 : vector<128x8xf32> to vector<128x8xbf16>
    %cst_354 = arith.constant dense<0.000000e+00> : vector<3x128xf32>
    %711 = tpu.matmul %708, %710, %cst_354 {dimension_numbers = #tpu.dot_dimension_numbers<[1], [1], [0], [0], [0, 0, 1, 0], [], []>} : vector<3x8xbf16>, vector<128x8xbf16>, vector<3x128xf32> -> vector<3x128xf32>
    %712 = arith.addf %706, %711 : vector<3x128xf32>
    %713 = arith.negf %712 : vector<3x128xf32>
    %714 = math.exp %713 : vector<3x128xf32>
    %cst_355 = arith.constant 1.000000e+00 : f32
    %715 = vector.broadcast %cst_355 : f32 to vector<3x128xf32>
    %716 = arith.addf %715, %714 : vector<3x128xf32>
    %717 = arith.divf %715, %716 : vector<3x128xf32>
    %718 = vector.extract_strided_slice %717 {offsets = [0, 0], sizes = [1, 128], strides = [1, 1]} : vector<3x128xf32> to vector<1x128xf32>
    %719 = vector.extract_strided_slice %717 {offsets = [1, 0], sizes = [1, 128], strides = [1, 1]} : vector<3x128xf32> to vector<1x128xf32>
    %720 = arith.mulf %719, %718 : vector<1x128xf32>
    %721 = vector.extract_strided_slice %717 {offsets = [2, 0], sizes = [1, 128], strides = [1, 1]} : vector<3x128xf32> to vector<1x128xf32>
    %722 = arith.mulf %721, %718 : vector<1x128xf32>
    %723 = tpu.concatenate %718, %720, %722 in 0 : vector<1x128xf32>, vector<1x128xf32>, vector<1x128xf32> -> vector<3x128xf32>
    %c0_356 = arith.constant 0 : index
    %c0_357 = arith.constant 0 : index
    %c0_358 = arith.constant 0 : index
    %724 = vector.load %arg32[%c0_356, %c0_357, %c0_358] : memref<1x3x128xf32, #tpu.memory_space<vmem>>, vector<1x3x128xf32>
    %725 = vector.shape_cast %724 : vector<1x3x128xf32> to vector<3x128xf32>
    %726 = vector.shape_cast %723 : vector<3x128xf32> to vector<1x3x128xf32>
    tpu.vector_store %arg32[%c0_356, %c0_357, %c0_358], %726 {strides = array<i32>} : memref<1x3x128xf32, #tpu.memory_space<vmem>>, vector<1x3x128xf32>,
    return
  }
  func.func @transform_0(%arg0: i32) -> (i32, i32, i32) {
    %c0_i32 = arith.constant 0 : i32
    %c0_i32_0 = arith.constant 0 : i32
    %c0_i32_1 = arith.constant 0 : i32
    return %arg0, %c0_i32, %c0_i32_0 : i32, i32, i32
  }
  func.func @transform_1(%arg0: i32) -> (i32, i32) {
    %c0_i32 = arith.constant 0 : i32
    %c0_i32_0 = arith.constant 0 : i32
    %c0_i32_1 = arith.constant 0 : i32
    return %c0_i32, %c0_i32_0 : i32, i32
  }
  func.func @transform_2(%arg0: i32) -> (i32, i32) {
    %c0_i32 = arith.constant 0 : i32
    %c0_i32_0 = arith.constant 0 : i32
    %c0_i32_1 = arith.constant 0 : i32
    return %c0_i32, %c0_i32_0 : i32, i32
  }
  func.func @transform_3(%arg0: i32) -> (i32, i32) {
    %c0_i32 = arith.constant 0 : i32
    %c0_i32_0 = arith.constant 0 : i32
    %c0_i32_1 = arith.constant 0 : i32
    return %c0_i32, %c0_i32_0 : i32, i32
  }
  func.func @transform_4(%arg0: i32) -> (i32, i32) {
    %c0_i32 = arith.constant 0 : i32
    %c0_i32_0 = arith.constant 0 : i32
    %c0_i32_1 = arith.constant 0 : i32
    return %c0_i32, %c0_i32_0 : i32, i32
  }
  func.func @transform_5(%arg0: i32) -> (i32, i32) {
    %c0_i32 = arith.constant 0 : i32
    %c0_i32_0 = arith.constant 0 : i32
    %c0_i32_1 = arith.constant 0 : i32
    return %c0_i32, %c0_i32_0 : i32, i32
  }
  func.func @transform_6(%arg0: i32) -> (i32, i32) {
    %c0_i32 = arith.constant 0 : i32
    %c0_i32_0 = arith.constant 0 : i32
    %c0_i32_1 = arith.constant 0 : i32
    return %c0_i32, %c0_i32_0 : i32, i32
  }
  func.func @transform_7(%arg0: i32) -> (i32, i32) {
    %c0_i32 = arith.constant 0 : i32
    %c0_i32_0 = arith.constant 0 : i32
    %c0_i32_1 = arith.constant 0 : i32
    return %c0_i32, %c0_i32_0 : i32, i32
  }
  func.func @transform_8(%arg0: i32) -> (i32, i32) {
    %c0_i32 = arith.constant 0 : i32
    %c0_i32_0 = arith.constant 0 : i32
    %c0_i32_1 = arith.constant 0 : i32
    return %c0_i32, %c0_i32_0 : i32, i32
  }
  func.func @transform_9(%arg0: i32) -> (i32, i32) {
    %c0_i32 = arith.constant 0 : i32
    %c0_i32_0 = arith.constant 0 : i32
    %c0_i32_1 = arith.constant 0 : i32
    return %c0_i32, %c0_i32_0 : i32, i32
  }
  func.func @transform_10(%arg0: i32) -> (i32, i32) {
    %c0_i32 = arith.constant 0 : i32
    %c0_i32_0 = arith.constant 0 : i32
    %c0_i32_1 = arith.constant 0 : i32
    return %c0_i32, %c0_i32_0 : i32, i32
  }
  func.func @transform_11(%arg0: i32) -> (i32, i32) {
    %c0_i32 = arith.constant 0 : i32
    %c0_i32_0 = arith.constant 0 : i32
    %c0_i32_1 = arith.constant 0 : i32
    return %c0_i32, %c0_i32_0 : i32, i32
  }
  func.func @transform_12(%arg0: i32) -> (i32, i32) {
    %c0_i32 = arith.constant 0 : i32
    %c0_i32_0 = arith.constant 0 : i32
    %c0_i32_1 = arith.constant 0 : i32
    return %c0_i32, %c0_i32_0 : i32, i32
  }
  func.func @transform_13(%arg0: i32) -> (i32, i32) {
    %c0_i32 = arith.constant 0 : i32
    %c0_i32_0 = arith.constant 0 : i32
    %c0_i32_1 = arith.constant 0 : i32
    return %c0_i32, %c0_i32_0 : i32, i32
  }
  func.func @transform_14(%arg0: i32) -> (i32, i32) {
    %c0_i32 = arith.constant 0 : i32
    %c0_i32_0 = arith.constant 0 : i32
    %c0_i32_1 = arith.constant 0 : i32
    return %c0_i32, %c0_i32_0 : i32, i32
  }
  func.func @transform_15(%arg0: i32) -> (i32, i32) {
    %c0_i32 = arith.constant 0 : i32
    %c0_i32_0 = arith.constant 0 : i32
    %c0_i32_1 = arith.constant 0 : i32
    return %c0_i32, %c0_i32_0 : i32, i32
  }
  func.func @transform_16(%arg0: i32) -> (i32, i32) {
    %c0_i32 = arith.constant 0 : i32
    %c0_i32_0 = arith.constant 0 : i32
    %c0_i32_1 = arith.constant 0 : i32
    return %c0_i32, %c0_i32_0 : i32, i32
  }
  func.func @transform_17(%arg0: i32) -> (i32, i32) {
    %c0_i32 = arith.constant 0 : i32
    %c0_i32_0 = arith.constant 0 : i32
    %c0_i32_1 = arith.constant 0 : i32
    return %c0_i32, %c0_i32_0 : i32, i32
  }
  func.func @transform_18(%arg0: i32) -> (i32, i32) {
    %c0_i32 = arith.constant 0 : i32
    %c0_i32_0 = arith.constant 0 : i32
    %c0_i32_1 = arith.constant 0 : i32
    return %c0_i32, %c0_i32_0 : i32, i32
  }
  func.func @transform_19(%arg0: i32) -> (i32, i32) {
    %c0_i32 = arith.constant 0 : i32
    %c0_i32_0 = arith.constant 0 : i32
    %c0_i32_1 = arith.constant 0 : i32
    return %c0_i32, %c0_i32_0 : i32, i32
  }
  func.func @transform_20(%arg0: i32) -> (i32, i32) {
    %c0_i32 = arith.constant 0 : i32
    %c0_i32_0 = arith.constant 0 : i32
    %c0_i32_1 = arith.constant 0 : i32
    return %c0_i32, %c0_i32_0 : i32, i32
  }
  func.func @transform_21(%arg0: i32) -> (i32, i32) {
    %c0_i32 = arith.constant 0 : i32
    %c0_i32_0 = arith.constant 0 : i32
    %c0_i32_1 = arith.constant 0 : i32
    return %c0_i32, %c0_i32_0 : i32, i32
  }
  func.func @transform_22(%arg0: i32) -> (i32, i32) {
    %c0_i32 = arith.constant 0 : i32
    %c0_i32_0 = arith.constant 0 : i32
    %c0_i32_1 = arith.constant 0 : i32
    return %c0_i32, %c0_i32_0 : i32, i32
  }
  func.func @transform_23(%arg0: i32) -> (i32, i32) {
    %c0_i32 = arith.constant 0 : i32
    %c0_i32_0 = arith.constant 0 : i32
    %c0_i32_1 = arith.constant 0 : i32
    return %c0_i32, %c0_i32_0 : i32, i32
  }
  func.func @transform_24(%arg0: i32) -> (i32, i32) {
    %c0_i32 = arith.constant 0 : i32
    %c0_i32_0 = arith.constant 0 : i32
    %c0_i32_1 = arith.constant 0 : i32
    return %c0_i32, %c0_i32_0 : i32, i32
  }
  func.func @transform_25(%arg0: i32) -> (i32, i32) {
    %c0_i32 = arith.constant 0 : i32
    %c0_i32_0 = arith.constant 0 : i32
    %c0_i32_1 = arith.constant 0 : i32
    return %c0_i32, %c0_i32_0 : i32, i32
  }
  func.func @transform_26(%arg0: i32) -> (i32, i32) {
    %c0_i32 = arith.constant 0 : i32
    %c0_i32_0 = arith.constant 0 : i32
    %c0_i32_1 = arith.constant 0 : i32
    return %c0_i32, %c0_i32_0 : i32, i32
  }
  func.func @transform_27(%arg0: i32) -> (i32, i32) {
    %c0_i32 = arith.constant 0 : i32
    %c0_i32_0 = arith.constant 0 : i32
    %c0_i32_1 = arith.constant 0 : i32
    return %c0_i32, %c0_i32_0 : i32, i32
  }
  func.func @transform_28(%arg0: i32) -> (i32, i32) {
    %c0_i32 = arith.constant 0 : i32
    %c0_i32_0 = arith.constant 0 : i32
    %c0_i32_1 = arith.constant 0 : i32
    return %c0_i32, %c0_i32_0 : i32, i32
  }
  func.func @transform_29(%arg0: i32) -> (i32, i32, i32) {
    %c0_i32 = arith.constant 0 : i32
    %c0_i32_0 = arith.constant 0 : i32
    %c0_i32_1 = arith.constant 0 : i32
    %c0_i32_2 = arith.constant 0 : i32
    return %c0_i32, %c0_i32_0, %c0_i32_1 : i32, i32, i32
  }
  func.func @transform_30(%arg0: i32) -> (i32, i32) {
    %c0_i32 = arith.constant 0 : i32
    %c0_i32_0 = arith.constant 0 : i32
    %c0_i32_1 = arith.constant 0 : i32
    return %c0_i32, %c0_i32_0 : i32, i32
  }
  func.func @transform_31(%arg0: i32) -> (i32, i32, i32) {
    %c0_i32 = arith.constant 0 : i32
    %c0_i32_0 = arith.constant 0 : i32
    %c0_i32_1 = arith.constant 0 : i32
    return %arg0, %c0_i32, %c0_i32_0 : i32, i32, i32
  }
}

</mosaic_0001>

<llo_original>
// kernel: heimdall_detector_picker.1
$region0: #{heimdall_detector_picker.1}
  #allocation0 [shape = 'u32[]', space=smem, size = 0x4, offset = 0x4, fixed_abs, tag = 'smem constant byte address 0x4 - core index']
  #allocation1 [shape = 'u32[72,128]{1,0:T(1,128)}', space=vmem, size = 0x9000, scoped, tag = 'internal scratch']
  #allocation2 [shape = 'f32[16,256]{1,0:T(8,128)}', space=vmem, size = 0x4000, scoped, tag = 'scratch operand']
  #allocation3 [shape = 'f32[16,32]{1,0:T(8,128)}', space=vmem, size = 0x2000, scoped, tag = 'scratch operand']
  #allocation4 [shape = 'f32[144,128]{1,0:T(8,128)}', space=vmem, size = 0x12000, scoped, tag = 'scratch operand']
  %s0 = inlined_call_operand.smem [shape: u32[32], index: -1, kind: input, shape index: {}]
  %s1 = sld [smem:[%s0]]
  %s2 = scalar_lea.smem %s0, 1
  %s3 = sld [smem:[%s2]]
  %s4 = scalar_lea.smem %s0, 2
  %s5 = sld [smem:[%s4]]
  %s6 = scalar_lea.smem %s0, 3
  %s7 = sld [smem:[%s6]]
  %s8 = scalar_lea.smem %s0, 4
  %s9 = sld [smem:[%s8]]
  %s10 = scalar_lea.smem %s0, 5
  %s11 = sld [smem:[%s10]]
  %s12 = scalar_lea.smem %s0, 6
  %s13 = sld [smem:[%s12]]
  %s14 = scalar_lea.smem %s0, 7
  %s15 = sld [smem:[%s14]]
  %s16 = scalar_lea.smem %s0, 8
  %s17 = sld [smem:[%s16]]
  %s18 = scalar_lea.smem %s0, 9
  %s19 = sld [smem:[%s18]]
  %s20 = scalar_lea.smem %s0, 10
  %s21 = sld [smem:[%s20]]
  %s22 = scalar_lea.smem %s0, 11
  %s23 = sld [smem:[%s22]]
  %s24 = scalar_lea.smem %s0, 12
  %s25 = sld [smem:[%s24]]
  %s26 = scalar_lea.smem %s0, 13
  %s27 = sld [smem:[%s26]]
  %s28 = scalar_lea.smem %s0, 14
  %s29 = sld [smem:[%s28]]
  %s30 = scalar_lea.smem %s0, 15
  %s31 = sld [smem:[%s30]]
  %s32 = scalar_lea.smem %s0, 16
  %s33 = sld [smem:[%s32]]
  %s34 = scalar_lea.smem %s0, 17
  %s35 = sld [smem:[%s34]]
  %s36 = scalar_lea.smem %s0, 18
  %s37 = sld [smem:[%s36]]
  %s38 = scalar_lea.smem %s0, 19
  %s39 = sld [smem:[%s38]]
  %s40 = scalar_lea.smem %s0, 20
  %s41 = sld [smem:[%s40]]
  %s42 = scalar_lea.smem %s0, 21
  %s43 = sld [smem:[%s42]]
  %s44 = scalar_lea.smem %s0, 22
  %s45 = sld [smem:[%s44]]
  %s46 = scalar_lea.smem %s0, 23
  %s47 = sld [smem:[%s46]]
  %s48 = scalar_lea.smem %s0, 24
  %s49 = sld [smem:[%s48]]
  %s50 = scalar_lea.smem %s0, 25
  %s51 = sld [smem:[%s50]]
  %s52 = scalar_lea.smem %s0, 26
  %s53 = sld [smem:[%s52]]
  %s54 = scalar_lea.smem %s0, 27
  %s55 = sld [smem:[%s54]]
  %s56 = scalar_lea.smem %s0, 28
  %s57 = sld [smem:[%s56]]
  %s58 = scalar_lea.smem %s0, 29
  %s59 = sld [smem:[%s58]]
  %s60 = scalar_lea.smem %s0, 30
  %s61 = sld [smem:[%s60]]
  %s62 = scalar_lea.smem %s0, 31
  %s63 = sld [smem:[%s62]]
  %s64 = sld [smem:[#allocation0]]
  $region157: #{heimdall_detector_picker.1} parent=0
    _
  %s66 = ssub.s32 1, %s64
  %s67 = scalar_select 0, %s66, %s64
  loop: start=0, step=1, limit=4
  $region2: #{heimdall_detector_picker.1} parent=0 // loop_pre_header
    _
  $region3: #{heimdall_detector_picker.1} parent=0 // loop_header
    %s69 = sphi 0, %s73
    %p70 = scmp.ge.s32.totalorder %s69, 4
    %s79 = sphi 0, %s81
    %s82 = sphi 0, %s79
    %s83 = sphi 0, %s82
    %s99 = sphi 0, %s83
    %s103 = sphi 0, %s103
    %s105 = sphi 0, %s103
    %s106 = sphi 0, %s105
    %s120 = sphi 0, %s106
    %s124 = sphi 0, %s124
    %s126 = sphi 0, %s124
    %s127 = sphi 0, %s126
    %s141 = sphi 0, %s127
    %s145 = sphi 0, %s145
    %s147 = sphi 0, %s145
    %s148 = sphi 0, %s147
    %s162 = sphi 0, %s148
    %s166 = sphi 0, %s166
    %s168 = sphi 0, %s166
    %s169 = sphi 0, %s168
    %s183 = sphi 0, %s169
    %s187 = sphi 0, %s187
    %s189 = sphi 0, %s187
    %s190 = sphi 0, %s189
    %s204 = sphi 0, %s190
    %s208 = sphi 0, %s208
    %s210 = sphi 0, %s208
    %s211 = sphi 0, %s210
    %s225 = sphi 0, %s211
    %s229 = sphi 0, %s229
    %s231 = sphi 0, %s229
    %s232 = sphi 0, %s231
    %s246 = sphi 0, %s232
    %s250 = sphi 0, %s250
    %s252 = sphi 0, %s250
    %s253 = sphi 0, %s252
    %s267 = sphi 0, %s253
    %s271 = sphi 0, %s271
    %s273 = sphi 0, %s271
    %s274 = sphi 0, %s273
    %s288 = sphi 0, %s274
    %s292 = sphi 0, %s292
    %s294 = sphi 0, %s292
    %s295 = sphi 0, %s294
    %s309 = sphi 0, %s295
    %s313 = sphi 0, %s313
    %s315 = sphi 0, %s313
    %s316 = sphi 0, %s315
    %s330 = sphi 0, %s316
    %s334 = sphi 0, %s334
    %s336 = sphi 0, %s334
    %s337 = sphi 0, %s336
    %s351 = sphi 0, %s337
    %s355 = sphi 0, %s355
    %s357 = sphi 0, %s355
    %s358 = sphi 0, %s357
    %s372 = sphi 0, %s358
    %s376 = sphi 0, %s376
    %s378 = sphi 0, %s376
    %s379 = sphi 0, %s378
    %s393 = sphi 0, %s379
    %s397 = sphi 0, %s397
    %s399 = sphi 0, %s397
    %s400 = sphi 0, %s399
    %s414 = sphi 0, %s400
    %s418 = sphi 0, %s418
    %s420 = sphi 0, %s418
    %s421 = sphi 0, %s420
    %s435 = sphi 0, %s421
    %s439 = sphi 0, %s439
    %s441 = sphi 0, %s439
    %s442 = sphi 0, %s441
    %s456 = sphi 0, %s442
    %s460 = sphi 0, %s460
    %s462 = sphi 0, %s460
    %s463 = sphi 0, %s462
    %s477 = sphi 0, %s463
    %s481 = sphi 0, %s481
    %s483 = sphi 0, %s481
    %s484 = sphi 0, %s483
    %s498 = sphi 0, %s484
    %s502 = sphi 0, %s502
    %s504 = sphi 0, %s502
    %s505 = sphi 0, %s504
    %s519 = sphi 0, %s505
    %s523 = sphi 0, %s523
    %s525 = sphi 0, %s523
    %s526 = sphi 0, %s525
    %s540 = sphi 0, %s526
    %s544 = sphi 0, %s544
    %s546 = sphi 0, %s544
    %s547 = sphi 0, %s546
    %s561 = sphi 0, %s547
    %s565 = sphi 0, %s565
    %s567 = sphi 0, %s565
    %s568 = sphi 0, %s567
    %s582 = sphi 0, %s568
    %s586 = sphi 0, %s586
    %s588 = sphi 0, %s586
    %s589 = sphi 0, %s588
    %s603 = sphi 0, %s589
    %s607 = sphi 0, %s607
    %s609 = sphi 0, %s607
    %s610 = sphi 0, %s609
    %s624 = sphi 0, %s610
    %s628 = sphi 0, %s628
    %s630 = sphi 0, %s628
    %s631 = sphi 0, %s630
    %s645 = sphi 0, %s631
    %s649 = sphi 0, %s649
    %s651 = sphi 0, %s649
    %s652 = sphi 0, %s651
    %s666 = sphi 0, %s652
    %s670 = sphi 0, %s670
    %s672 = sphi 0, %s670
    %s673 = sphi 0, %s672
    %s687 = sphi 0, %s673
    %s691 = sphi 0, %s691
    %s693 = sphi 0, %s691
    %s694 = sphi 0, %s693
    %s708 = sphi 0, %s694
    %s712 = sphi 0, %s712
    %s714 = sphi 0, %s712
    %s715 = sphi 0, %s714
    %s729 = sphi 0, %s715
    %s735 = sphi 0, %s737
    %s738 = sphi 0, %s735
    %s739 = sphi 0, %s738
    %s755 = sphi 0, %s739
  $region4: #{heimdall_detector_picker.1} parent=0 // loop_header_branch
    %72 = sbr.rel (%p70) target = $region8
  $region5: #{heimdall_detector_picker.1} parent=0 // loop_body
    %s74 = ssub.s32 %s69, 1
    %s75 = ssub.s32 %s69, 2
    %s76 = sadd.s32 %s69, 1
    %s77 = ssub.s32 %s69, %s76
    %p78 = scmp.eq.s32.totalorder %s77, 0
    %s80 = sadd.s32 %s79, 1
    %s81 = scalar_select %p78, %s79, %s80
    %p84 = pneg %p78
    %p85 = scmp.eq.s32.totalorder %s69, 1
    %p86 = por %p84, %p85
    %p87 = scmp.ne.s32.totalorder %s79, %s82
    %p88 = scmp.eq.s32.totalorder %s69, 0
    %p89 = por %p87, %p88
    %p90 = scmp.ne.s32.totalorder %s79, %s82
    %p91 = scmp.eq.s32.totalorder %s74, 1
    %p92 = por %p90, %p91
    %p93 = scmp.ne.s32.totalorder %s82, %s83
    %p94 = scmp.eq.s32.totalorder %s74, 0
    %p95 = por %p93, %p94
    %p96 = scmp.ne.s32.totalorder %s82, %s83
    %p97 = scmp.eq.s32.totalorder %s75, 1
    %p98 = por %p96, %p97
    %p100 = scmp.ne.s32.totalorder %s83, %s99
    %p101 = scmp.eq.s32.totalorder %s75, 0
    %p102 = por %p100, %p101
    %s104 = sadd.s32 %s103, 1
    %p107 = scmp.eq.s32.totalorder %s69, 1
    %p108 = scmp.ne.s32.totalorder %s103, %s105
    %p109 = scmp.eq.s32.totalorder %s69, 0
    %p110 = por %p108, %p109
    %p111 = scmp.ne.s32.totalorder %s103, %s105
    %p112 = scmp.eq.s32.totalorder %s74, 1
    %p113 = por %p111, %p112
    %p114 = scmp.ne.s32.totalorder %s105, %s106
    %p115 = scmp.eq.s32.totalorder %s74, 0
    %p116 = por %p114, %p115
    %p117 = scmp.ne.s32.totalorder %s105, %s106
    %p118 = scmp.eq.s32.totalorder %s75, 1
    %p119 = por %p117, %p118
    %p121 = scmp.ne.s32.totalorder %s106, %s120
    %p122 = scmp.eq.s32.totalorder %s75, 0
    %p123 = por %p121, %p122
    %s125 = sadd.s32 %s124, 1
    %p128 = scmp.eq.s32.totalorder %s69, 1
    %p129 = scmp.ne.s32.totalorder %s124, %s126
    %p130 = scmp.eq.s32.totalorder %s69, 0
    %p131 = por %p129, %p130
    %p132 = scmp.ne.s32.totalorder %s124, %s126
    %p133 = scmp.eq.s32.totalorder %s74, 1
    %p134 = por %p132, %p133
    %p135 = scmp.ne.s32.totalorder %s126, %s127
    %p136 = scmp.eq.s32.totalorder %s74, 0
    %p137 = por %p135, %p136
    %p138 = scmp.ne.s32.totalorder %s126, %s127
    %p139 = scmp.eq.s32.totalorder %s75, 1
    %p140 = por %p138, %p139
    %p142 = scmp.ne.s32.totalorder %s127, %s141
    %p143 = scmp.eq.s32.totalorder %s75, 0
    %p144 = por %p142, %p143
    %s146 = sadd.s32 %s145, 1
    %p149 = scmp.eq.s32.totalorder %s69, 1
    %p150 = scmp.ne.s32.totalorder %s145, %s147
    %p151 = scmp.eq.s32.totalorder %s69, 0
    %p152 = por %p150, %p151
    %p153 = scmp.ne.s32.totalorder %s145, %s147
    %p154 = scmp.eq.s32.totalorder %s74, 1
    %p155 = por %p153, %p154
    %p156 = scmp.ne.s32.totalorder %s147, %s148
    %p157 = scmp.eq.s32.totalorder %s74, 0
    %p158 = por %p156, %p157
    %p159 = scmp.ne.s32.totalorder %s147, %s148
    %p160 = scmp.eq.s32.totalorder %s75, 1
    %p161 = por %p159, %p160
    %p163 = scmp.ne.s32.totalorder %s148, %s162
    %p164 = scmp.eq.s32.totalorder %s75, 0
    %p165 = por %p163, %p164
    %s167 = sadd.s32 %s166, 1
    %p170 = scmp.eq.s32.totalorder %s69, 1
    %p171 = scmp.ne.s32.totalorder %s166, %s168
    %p172 = scmp.eq.s32.totalorder %s69, 0
    %p173 = por %p171, %p172
    %p174 = scmp.ne.s32.totalorder %s166, %s168
    %p175 = scmp.eq.s32.totalorder %s74, 1
    %p176 = por %p174, %p175
    %p177 = scmp.ne.s32.totalorder %s168, %s169
    %p178 = scmp.eq.s32.totalorder %s74, 0
    %p179 = por %p177, %p178
    %p180 = scmp.ne.s32.totalorder %s168, %s169
    %p181 = scmp.eq.s32.totalorder %s75, 1
    %p182 = por %p180, %p181
    %p184 = scmp.ne.s32.totalorder %s169, %s183
    %p185 = scmp.eq.s32.totalorder %s75, 0
    %p186 = por %p184, %p185
    %s188 = sadd.s32 %s187, 1
    %p191 = scmp.eq.s32.totalorder %s69, 1
    %p192 = scmp.ne.s32.totalorder %s187, %s189
    %p193 = scmp.eq.s32.totalorder %s69, 0
    %p194 = por %p192, %p193
    %p195 = scmp.ne.s32.totalorder %s187, %s189
    %p196 = scmp.eq.s32.totalorder %s74, 1
    %p197 = por %p195, %p196
    %p198 = scmp.ne.s32.totalorder %s189, %s190
    %p199 = scmp.eq.s32.totalorder %s74, 0
    %p200 = por %p198, %p199
    %p201 = scmp.ne.s32.totalorder %s189, %s190
    %p202 = scmp.eq.s32.totalorder %s75, 1
    %p203 = por %p201, %p202
    %p205 = scmp.ne.s32.totalorder %s190, %s204
    %p206 = scmp.eq.s32.totalorder %s75, 0
    %p207 = por %p205, %p206
    %s209 = sadd.s32 %s208, 1
    %p212 = scmp.eq.s32.totalorder %s69, 1
    %p213 = scmp.ne.s32.totalorder %s208, %s210
    %p214 = scmp.eq.s32.totalorder %s69, 0
    %p215 = por %p213, %p214
    %p216 = scmp.ne.s32.totalorder %s208, %s210
    %p217 = scmp.eq.s32.totalorder %s74, 1
    %p218 = por %p216, %p217
    %p219 = scmp.ne.s32.totalorder %s210, %s211
    %p220 = scmp.eq.s32.totalorder %s74, 0
    %p221 = por %p219, %p220
    %p222 = scmp.ne.s32.totalorder %s210, %s211
    %p223 = scmp.eq.s32.totalorder %s75, 1
    %p224 = por %p222, %p223
    %p226 = scmp.ne.s32.totalorder %s211, %s225
    %p227 = scmp.eq.s32.totalorder %s75, 0
    %p228 = por %p226, %p227
    %s230 = sadd.s32 %s229, 1
    %p233 = scmp.eq.s32.totalorder %s69, 1
    %p234 = scmp.ne.s32.totalorder %s229, %s231
    %p235 = scmp.eq.s32.totalorder %s69, 0
    %p236 = por %p234, %p235
    %p237 = scmp.ne.s32.totalorder %s229, %s231
    %p238 = scmp.eq.s32.totalorder %s74, 1
    %p239 = por %p237, %p238
    %p240 = scmp.ne.s32.totalorder %s231, %s232
    %p241 = scmp.eq.s32.totalorder %s74, 0
    %p242 = por %p240, %p241
    %p243 = scmp.ne.s32.totalorder %s231, %s232
    %p244 = scmp.eq.s32.totalorder %s75, 1
    %p245 = por %p243, %p244
    %p247 = scmp.ne.s32.totalorder %s232, %s246
    %p248 = scmp.eq.s32.totalorder %s75, 0
    %p249 = por %p247, %p248
    %s251 = sadd.s32 %s250, 1
    %p254 = scmp.eq.s32.totalorder %s69, 1
    %p255 = scmp.ne.s32.totalorder %s250, %s252
    %p256 = scmp.eq.s32.totalorder %s69, 0
    %p257 = por %p255, %p256
    %p258 = scmp.ne.s32.totalorder %s250, %s252
    %p259 = scmp.eq.s32.totalorder %s74, 1
    %p260 = por %p258, %p259
    %p261 = scmp.ne.s32.totalorder %s252, %s253
    %p262 = scmp.eq.s32.totalorder %s74, 0
    %p263 = por %p261, %p262
    %p264 = scmp.ne.s32.totalorder %s252, %s253
    %p265 = scmp.eq.s32.totalorder %s75, 1
    %p266 = por %p264, %p265
    %p268 = scmp.ne.s32.totalorder %s253, %s267
    %p269 = scmp.eq.s32.totalorder %s75, 0
    %p270 = por %p268, %p269
    %s272 = sadd.s32 %s271, 1
    %p275 = scmp.eq.s32.totalorder %s69, 1
    %p276 = scmp.ne.s32.totalorder %s271, %s273
    %p277 = scmp.eq.s32.totalorder %s69, 0
    %p278 = por %p276, %p277
    %p279 = scmp.ne.s32.totalorder %s271, %s273
    %p280 = scmp.eq.s32.totalorder %s74, 1
    %p281 = por %p279, %p280
    %p282 = scmp.ne.s32.totalorder %s273, %s274
    %p283 = scmp.eq.s32.totalorder %s74, 0
    %p284 = por %p282, %p283
    %p285 = scmp.ne.s32.totalorder %s273, %s274
    %p286 = scmp.eq.s32.totalorder %s75, 1
    %p287 = por %p285, %p286
    %p289 = scmp.ne.s32.totalorder %s274, %s288
    %p290 = scmp.eq.s32.totalorder %s75, 0
    %p291 = por %p289, %p290
    %s293 = sadd.s32 %s292, 1
    %p296 = scmp.eq.s32.totalorder %s69, 1
    %p297 = scmp.ne.s32.totalorder %s292, %s294
    %p298 = scmp.eq.s32.totalorder %s69, 0
    %p299 = por %p297, %p298
    %p300 = scmp.ne.s32.totalorder %s292, %s294
    %p301 = scmp.eq.s32.totalorder %s74, 1
    %p302 = por %p300, %p301
    %p303 = scmp.ne.s32.totalorder %s294, %s295
    %p304 = scmp.eq.s32.totalorder %s74, 0
    %p305 = por %p303, %p304
    %p306 = scmp.ne.s32.totalorder %s294, %s295
    %p307 = scmp.eq.s32.totalorder %s75, 1
    %p308 = por %p306, %p307
    %p310 = scmp.ne.s32.totalorder %s295, %s309
    %p311 = scmp.eq.s32.totalorder %s75, 0
    %p312 = por %p310, %p311
    %s314 = sadd.s32 %s313, 1
    %p317 = scmp.eq.s32.totalorder %s69, 1
    %p318 = scmp.ne.s32.totalorder %s313, %s315
    %p319 = scmp.eq.s32.totalorder %s69, 0
    %p320 = por %p318, %p319
    %p321 = scmp.ne.s32.totalorder %s313, %s315
    %p322 = scmp.eq.s32.totalorder %s74, 1
    %p323 = por %p321, %p322
    %p324 = scmp.ne.s32.totalorder %s315, %s316
    %p325 = scmp.eq.s32.totalorder %s74, 0
    %p326 = por %p324, %p325
    %p327 = scmp.ne.s32.totalorder %s315, %s316
    %p328 = scmp.eq.s32.totalorder %s75, 1
    %p329 = por %p327, %p328
    %p331 = scmp.ne.s32.totalorder %s316, %s330
    %p332 = scmp.eq.s32.totalorder %s75, 0
    %p333 = por %p331, %p332
    %s335 = sadd.s32 %s334, 1
    %p338 = scmp.eq.s32.totalorder %s69, 1
    %p339 = scmp.ne.s32.totalorder %s334, %s336
    %p340 = scmp.eq.s32.totalorder %s69, 0
    %p341 = por %p339, %p340
    %p342 = scmp.ne.s32.totalorder %s334, %s336
    %p343 = scmp.eq.s32.totalorder %s74, 1
    %p344 = por %p342, %p343
    %p345 = scmp.ne.s32.totalorder %s336, %s337
    %p346 = scmp.eq.s32.totalorder %s74, 0
    %p347 = por %p345, %p346
    %p348 = scmp.ne.s32.totalorder %s336, %s337
    %p349 = scmp.eq.s32.totalorder %s75, 1
    %p350 = por %p348, %p349
    %p352 = scmp.ne.s32.totalorder %s337, %s351
    %p353 = scmp.eq.s32.totalorder %s75, 0
    %p354 = por %p352, %p353
    %s356 = sadd.s32 %s355, 1
    %p359 = scmp.eq.s32.totalorder %s69, 1
    %p360 = scmp.ne.s32.totalorder %s355, %s357
    %p361 = scmp.eq.s32.totalorder %s69, 0
    %p362 = por %p360, %p361
    %p363 = scmp.ne.s32.totalorder %s355, %s357
    %p364 = scmp.eq.s32.totalorder %s74, 1
    %p365 = por %p363, %p364
    %p366 = scmp.ne.s32.totalorder %s357, %s358
    %p367 = scmp.eq.s32.totalorder %s74, 0
    %p368 = por %p366, %p367
    %p369 = scmp.ne.s32.totalorder %s357, %s358
    %p370 = scmp.eq.s32.totalorder %s75, 1
    %p371 = por %p369, %p370
    %p373 = scmp.ne.s32.totalorder %s358, %s372
    %p374 = scmp.eq.s32.totalorder %s75, 0
    %p375 = por %p373, %p374
    %s377 = sadd.s32 %s376, 1
    %p380 = scmp.eq.s32.totalorder %s69, 1
    %p381 = scmp.ne.s32.totalorder %s376, %s378
    %p382 = scmp.eq.s32.totalorder %s69, 0
    %p383 = por %p381, %p382
    %p384 = scmp.ne.s32.totalorder %s376, %s378
    %p385 = scmp.eq.s32.totalorder %s74, 1
    %p386 = por %p384, %p385
    %p387 = scmp.ne.s32.totalorder %s378, %s379
    %p388 = scmp.eq.s32.totalorder %s74, 0
    %p389 = por %p387, %p388
    %p390 = scmp.ne.s32.totalorder %s378, %s379
    %p391 = scmp.eq.s32.totalorder %s75, 1
    %p392 = por %p390, %p391
    %p394 = scmp.ne.s32.totalorder %s379, %s393
    %p395 = scmp.eq.s32.totalorder %s75, 0
    %p396 = por %p394, %p395
    %s398 = sadd.s32 %s397, 1
    %p401 = scmp.eq.s32.totalorder %s69, 1
    %p402 = scmp.ne.s32.totalorder %s397, %s399
    %p403 = scmp.eq.s32.totalorder %s69, 0
    %p404 = por %p402, %p403
    %p405 = scmp.ne.s32.totalorder %s397, %s399
    %p406 = scmp.eq.s32.totalorder %s74, 1
    %p407 = por %p405, %p406
    %p408 = scmp.ne.s32.totalorder %s399, %s400
    %p409 = scmp.eq.s32.totalorder %s74, 0
    %p410 = por %p408, %p409
    %p411 = scmp.ne.s32.totalorder %s399, %s400
    %p412 = scmp.eq.s32.totalorder %s75, 1
    %p413 = por %p411, %p412
    %p415 = scmp.ne.s32.totalorder %s400, %s414
    %p416 = scmp.eq.s32.totalorder %s75, 0
    %p417 = por %p415, %p416
    %s419 = sadd.s32 %s418, 1
    %p422 = scmp.eq.s32.totalorder %s69, 1
    %p423 = scmp.ne.s32.totalorder %s418, %s420
    %p424 = scmp.eq.s32.totalorder %s69, 0
    %p425 = por %p423, %p424
    %p426 = scmp.ne.s32.totalorder %s418, %s420
    %p427 = scmp.eq.s32.totalorder %s74, 1
    %p428 = por %p426, %p427
    %p429 = scmp.ne.s32.totalorder %s420, %s421
    %p430 = scmp.eq.s32.totalorder %s74, 0
    %p431 = por %p429, %p430
    %p432 = scmp.ne.s32.totalorder %s420, %s421
    %p433 = scmp.eq.s32.totalorder %s75, 1
    %p434 = por %p432, %p433
    %p436 = scmp.ne.s32.totalorder %s421, %s435
    %p437 = scmp.eq.s32.totalorder %s75, 0
    %p438 = por %p436, %p437
    %s440 = sadd.s32 %s439, 1
    %p443 = scmp.eq.s32.totalorder %s69, 1
    %p444 = scmp.ne.s32.totalorder %s439, %s441
    %p445 = scmp.eq.s32.totalorder %s69, 0
    %p446 = por %p444, %p445
    %p447 = scmp.ne.s32.totalorder %s439, %s441
    %p448 = scmp.eq.s32.totalorder %s74, 1
    %p449 = por %p447, %p448
    %p450 = scmp.ne.s32.totalorder %s441, %s442
    %p451 = scmp.eq.s32.totalorder %s74, 0
    %p452 = por %p450, %p451
    %p453 = scmp.ne.s32.totalorder %s441, %s442
    %p454 = scmp.eq.s32.totalorder %s75, 1
    %p455 = por %p453, %p454
    %p457 = scmp.ne.s32.totalorder %s442, %s456
    %p458 = scmp.eq.s32.totalorder %s75, 0
    %p459 = por %p457, %p458
    %s461 = sadd.s32 %s460, 1
    %p464 = scmp.eq.s32.totalorder %s69, 1
    %p465 = scmp.ne.s32.totalorder %s460, %s462
    %p466 = scmp.eq.s32.totalorder %s69, 0
    %p467 = por %p465, %p466
    %p468 = scmp.ne.s32.totalorder %s460, %s462
    %p469 = scmp.eq.s32.totalorder %s74, 1
    %p470 = por %p468, %p469
    %p471 = scmp.ne.s32.totalorder %s462, %s463
    %p472 = scmp.eq.s32.totalorder %s74, 0
    %p473 = por %p471, %p472
    %p474 = scmp.ne.s32.totalorder %s462, %s463
    %p475 = scmp.eq.s32.totalorder %s75, 1
    %p476 = por %p474, %p475
    %p478 = scmp.ne.s32.totalorder %s463, %s477
    %p479 = scmp.eq.s32.totalorder %s75, 0
    %p480 = por %p478, %p479
    %s482 = sadd.s32 %s481, 1
    %p485 = scmp.eq.s32.totalorder %s69, 1
    %p486 = scmp.ne.s32.totalorder %s481, %s483
    %p487 = scmp.eq.s32.totalorder %s69, 0
    %p488 = por %p486, %p487
    %p489 = scmp.ne.s32.totalorder %s481, %s483
    %p490 = scmp.eq.s32.totalorder %s74, 1
    %p491 = por %p489, %p490
    %p492 = scmp.ne.s32.totalorder %s483, %s484
    %p493 = scmp.eq.s32.totalorder %s74, 0
    %p494 = por %p492, %p493
    %p495 = scmp.ne.s32.totalorder %s483, %s484
    %p496 = scmp.eq.s32.totalorder %s75, 1
    %p497 = por %p495, %p496
    %p499 = scmp.ne.s32.totalorder %s484, %s498
    %p500 = scmp.eq.s32.totalorder %s75, 0
    %p501 = por %p499, %p500
    %s503 = sadd.s32 %s502, 1
    %p506 = scmp.eq.s32.totalorder %s69, 1
    %p507 = scmp.ne.s32.totalorder %s502, %s504
    %p508 = scmp.eq.s32.totalorder %s69, 0
    %p509 = por %p507, %p508
    %p510 = scmp.ne.s32.totalorder %s502, %s504
    %p511 = scmp.eq.s32.totalorder %s74, 1
    %p512 = por %p510, %p511
    %p513 = scmp.ne.s32.totalorder %s504, %s505
    %p514 = scmp.eq.s32.totalorder %s74, 0
    %p515 = por %p513, %p514
    %p516 = scmp.ne.s32.totalorder %s504, %s505
    %p517 = scmp.eq.s32.totalorder %s75, 1
    %p518 = por %p516, %p517
    %p520 = scmp.ne.s32.totalorder %s505, %s519
    %p521 = scmp.eq.s32.totalorder %s75, 0
    %p522 = por %p520, %p521
    %s524 = sadd.s32 %s523, 1
    %p527 = scmp.eq.s32.totalorder %s69, 1
    %p528 = scmp.ne.s32.totalorder %s523, %s525
    %p529 = scmp.eq.s32.totalorder %s69, 0
    %p530 = por %p528, %p529
    %p531 = scmp.ne.s32.totalorder %s523, %s525
    %p532 = scmp.eq.s32.totalorder %s74, 1
    %p533 = por %p531, %p532
    %p534 = scmp.ne.s32.totalorder %s525, %s526
    %p535 = scmp.eq.s32.totalorder %s74, 0
    %p536 = por %p534, %p535
    %p537 = scmp.ne.s32.totalorder %s525, %s526
    %p538 = scmp.eq.s32.totalorder %s75, 1
    %p539 = por %p537, %p538
    %p541 = scmp.ne.s32.totalorder %s526, %s540
    %p542 = scmp.eq.s32.totalorder %s75, 0
    %p543 = por %p541, %p542
    %s545 = sadd.s32 %s544, 1
    %p548 = scmp.eq.s32.totalorder %s69, 1
    %p549 = scmp.ne.s32.totalorder %s544, %s546
    %p550 = scmp.eq.s32.totalorder %s69, 0
    %p551 = por %p549, %p550
    %p552 = scmp.ne.s32.totalorder %s544, %s546
    %p553 = scmp.eq.s32.totalorder %s74, 1
    %p554 = por %p552, %p553
    %p555 = scmp.ne.s32.totalorder %s546, %s547
    %p556 = scmp.eq.s32.totalorder %s74, 0
    %p557 = por %p555, %p556
    %p558 = scmp.ne.s32.totalorder %s546, %s547
    %p559 = scmp.eq.s32.totalorder %s75, 1
    %p560 = por %p558, %p559
    %p562 = scmp.ne.s32.totalorder %s547, %s561
    %p563 = scmp.eq.s32.totalorder %s75, 0
    %p564 = por %p562, %p563
    %s566 = sadd.s32 %s565, 1
    %p569 = scmp.eq.s32.totalorder %s69, 1
    %p570 = scmp.ne.s32.totalorder %s565, %s567
    %p571 = scmp.eq.s32.totalorder %s69, 0
    %p572 = por %p570, %p571
    %p573 = scmp.ne.s32.totalorder %s565, %s567
    %p574 = scmp.eq.s32.totalorder %s74, 1
    %p575 = por %p573, %p574
    %p576 = scmp.ne.s32.totalorder %s567, %s568
    %p577 = scmp.eq.s32.totalorder %s74, 0
    %p578 = por %p576, %p577
    %p579 = scmp.ne.s32.totalorder %s567, %s568
    %p580 = scmp.eq.s32.totalorder %s75, 1
    %p581 = por %p579, %p580
    %p583 = scmp.ne.s32.totalorder %s568, %s582
    %p584 = scmp.eq.s32.totalorder %s75, 0
    %p585 = por %p583, %p584
    %s587 = sadd.s32 %s586, 1
    %p590 = scmp.eq.s32.totalorder %s69, 1
    %p591 = scmp.ne.s32.totalorder %s586, %s588
    %p592 = scmp.eq.s32.totalorder %s69, 0
    %p593 = por %p591, %p592
    %p594 = scmp.ne.s32.totalorder %s586, %s588
    %p595 = scmp.eq.s32.totalorder %s74, 1
    %p596 = por %p594, %p595
    %p597 = scmp.ne.s32.totalorder %s588, %s589
    %p598 = scmp.eq.s32.totalorder %s74, 0
    %p599 = por %p597, %p598
    %p600 = scmp.ne.s32.totalorder %s588, %s589
    %p601 = scmp.eq.s32.totalorder %s75, 1
    %p602 = por %p600, %p601
    %p604 = scmp.ne.s32.totalorder %s589, %s603
    %p605 = scmp.eq.s32.totalorder %s75, 0
    %p606 = por %p604, %p605
    %s608 = sadd.s32 %s607, 1
    %p611 = scmp.eq.s32.totalorder %s69, 1
    %p612 = scmp.ne.s32.totalorder %s607, %s609
    %p613 = scmp.eq.s32.totalorder %s69, 0
    %p614 = por %p612, %p613
    %p615 = scmp.ne.s32.totalorder %s607, %s609
    %p616 = scmp.eq.s32.totalorder %s74, 1
    %p617 = por %p615, %p616
    %p618 = scmp.ne.s32.totalorder %s609, %s610
    %p619 = scmp.eq.s32.totalorder %s74, 0
    %p620 = por %p618, %p619
    %p621 = scmp.ne.s32.totalorder %s609, %s610
    %p622 = scmp.eq.s32.totalorder %s75, 1
    %p623 = por %p621, %p622
    %p625 = scmp.ne.s32.totalorder %s610, %s624
    %p626 = scmp.eq.s32.totalorder %s75, 0
    %p627 = por %p625, %p626
    %s629 = sadd.s32 %s628, 1
    %p632 = scmp.eq.s32.totalorder %s69, 1
    %p633 = scmp.ne.s32.totalorder %s628, %s630
    %p634 = scmp.eq.s32.totalorder %s69, 0
    %p635 = por %p633, %p634
    %p636 = scmp.ne.s32.totalorder %s628, %s630
    %p637 = scmp.eq.s32.totalorder %s74, 1
    %p638 = por %p636, %p637
    %p639 = scmp.ne.s32.totalorder %s630, %s631
    %p640 = scmp.eq.s32.totalorder %s74, 0
    %p641 = por %p639, %p640
    %p642 = scmp.ne.s32.totalorder %s630, %s631
    %p643 = scmp.eq.s32.totalorder %s75, 1
    %p644 = por %p642, %p643
    %p646 = scmp.ne.s32.totalorder %s631, %s645
    %p647 = scmp.eq.s32.totalorder %s75, 0
    %p648 = por %p646, %p647
    %s650 = sadd.s32 %s649, 1
    %p653 = scmp.eq.s32.totalorder %s69, 1
    %p654 = scmp.ne.s32.totalorder %s649, %s651
    %p655 = scmp.eq.s32.totalorder %s69, 0
    %p656 = por %p654, %p655
    %p657 = scmp.ne.s32.totalorder %s649, %s651
    %p658 = scmp.eq.s32.totalorder %s74, 1
    %p659 = por %p657, %p658
    %p660 = scmp.ne.s32.totalorder %s651, %s652
    %p661 = scmp.eq.s32.totalorder %s74, 0
    %p662 = por %p660, %p661
    %p663 = scmp.ne.s32.totalorder %s651, %s652
    %p664 = scmp.eq.s32.totalorder %s75, 1
    %p665 = por %p663, %p664
    %p667 = scmp.ne.s32.totalorder %s652, %s666
    %p668 = scmp.eq.s32.totalorder %s75, 0
    %p669 = por %p667, %p668
    %s671 = sadd.s32 %s670, 1
    %p674 = scmp.eq.s32.totalorder %s69, 1
    %p675 = scmp.ne.s32.totalorder %s670, %s672
    %p676 = scmp.eq.s32.totalorder %s69, 0
    %p677 = por %p675, %p676
    %p678 = scmp.ne.s32.totalorder %s670, %s672
    %p679 = scmp.eq.s32.totalorder %s74, 1
    %p680 = por %p678, %p679
    %p681 = scmp.ne.s32.totalorder %s672, %s673
    %p682 = scmp.eq.s32.totalorder %s74, 0
    %p683 = por %p681, %p682
    %p684 = scmp.ne.s32.totalorder %s672, %s673
    %p685 = scmp.eq.s32.totalorder %s75, 1
    %p686 = por %p684, %p685
    %p688 = scmp.ne.s32.totalorder %s673, %s687
    %p689 = scmp.eq.s32.totalorder %s75, 0
    %p690 = por %p688, %p689
    %s692 = sadd.s32 %s691, 1
    %p695 = scmp.eq.s32.totalorder %s69, 1
    %p696 = scmp.ne.s32.totalorder %s691, %s693
    %p697 = scmp.eq.s32.totalorder %s69, 0
    %p698 = por %p696, %p697
    %p699 = scmp.ne.s32.totalorder %s691, %s693
    %p700 = scmp.eq.s32.totalorder %s74, 1
    %p701 = por %p699, %p700
    %p702 = scmp.ne.s32.totalorder %s693, %s694
    %p703 = scmp.eq.s32.totalorder %s74, 0
    %p704 = por %p702, %p703
    %p705 = scmp.ne.s32.totalorder %s693, %s694
    %p706 = scmp.eq.s32.totalorder %s75, 1
    %p707 = por %p705, %p706
    %p709 = scmp.ne.s32.totalorder %s694, %s708
    %p710 = scmp.eq.s32.totalorder %s75, 0
    %p711 = por %p709, %p710
    %s713 = sadd.s32 %s712, 1
    %p716 = scmp.eq.s32.totalorder %s69, 1
    %p717 = scmp.ne.s32.totalorder %s712, %s714
    %p718 = scmp.eq.s32.totalorder %s69, 0
    %p719 = por %p717, %p718
    %p720 = scmp.ne.s32.totalorder %s712, %s714
    %p721 = scmp.eq.s32.totalorder %s74, 1
    %p722 = por %p720, %p721
    %p723 = scmp.ne.s32.totalorder %s714, %s715
    %p724 = scmp.eq.s32.totalorder %s74, 0
    %p725 = por %p723, %p724
    %p726 = scmp.ne.s32.totalorder %s714, %s715
    %p727 = scmp.eq.s32.totalorder %s75, 1
    %p728 = por %p726, %p727
    %p730 = scmp.ne.s32.totalorder %s715, %s729
    %p731 = scmp.eq.s32.totalorder %s75, 0
    %p732 = por %p730, %p731
    %s733 = ssub.s32 %s69, %s76
    %p734 = scmp.eq.s32.totalorder %s733, 0
    %s736 = sadd.s32 %s735, 1
    %s737 = scalar_select %p734, %s735, %s736
    %p740 = pneg %p734
    %p741 = scmp.eq.s32.totalorder %s69, 1
    %p742 = por %p740, %p741
    %p743 = scmp.ne.s32.totalorder %s735, %s738
    %p744 = scmp.eq.s32.totalorder %s69, 0
    %p745 = por %p743, %p744
    %p746 = scmp.ne.s32.totalorder %s735, %s738
    %p747 = scmp.eq.s32.totalorder %s74, 1
    %p748 = por %p746, %p747
    %p749 = scmp.ne.s32.totalorder %s738, %s739
    %p750 = scmp.eq.s32.totalorder %s74, 0
    %p751 = por %p749, %p750
    %p752 = scmp.ne.s32.totalorder %s738, %s739
    %p753 = scmp.eq.s32.totalorder %s75, 1
    %p754 = por %p752, %p753
    %p756 = scmp.ne.s32.totalorder %s739, %s755
    %p757 = scmp.eq.s32.totalorder %s75, 0
    %p758 = por %p756, %p757
    %p759 = scmp.le.s32.totalorder 1, %s69
    %p760 = scmp.lt.s32.totalorder %s69, 3
    %p761 = pnand %p759, %p760
    %p762 = pneg %p761
    // Predicated region
    $region9: #{heimdall_detector_picker.1} parent=5 // pred_check
      _
    $region10: #{heimdall_detector_picker.1} parent=5 // pred_check_branch
      %764 = sbr.rel (%p761) target = $region12
    $region11: #{heimdall_detector_picker.1} parent=5 // pred_region
      %s765 = ssub.s32 %s69, 1
      // Predicated region
      $region13: #{heimdall_detector_picker.1} parent=11 // pred_check
        %p766 = pneg %p116
      $region14: #{heimdall_detector_picker.1} parent=11 // pred_check_branch
        %768 = sbr.rel (%p766) target = $region16
      $region15: #{heimdall_detector_picker.1} parent=11 // pred_region
        _
      $region16: #{heimdall_detector_picker.1} parent=11 // pred_fallthru
        _
      // Predicated region
      $region17: #{heimdall_detector_picker.1} parent=11 // pred_check
        %p769 = pneg %p137
      $region18: #{heimdall_detector_picker.1} parent=11 // pred_check_branch
        %771 = sbr.rel (%p769) target = $region20
      $region19: #{heimdall_detector_picker.1} parent=11 // pred_region
        _
      $region20: #{heimdall_detector_picker.1} parent=11 // pred_fallthru
        _
      // Predicated region
      $region21: #{heimdall_detector_picker.1} parent=11 // pred_check
        %p772 = pneg %p158
      $region22: #{heimdall_detector_picker.1} parent=11 // pred_check_branch
        %774 = sbr.rel (%p772) target = $region24
      $region23: #{heimdall_detector_picker.1} parent=11 // pred_region
        _
      $region24: #{heimdall_detector_picker.1} parent=11 // pred_fallthru
        _
      // Predicated region
      $region25: #{heimdall_detector_picker.1} parent=11 // pred_check
        %p775 = pneg %p179
      $region26: #{heimdall_detector_picker.1} parent=11 // pred_check_branch
        %777 = sbr.rel (%p775) target = $region28
      $region27: #{heimdall_detector_picker.1} parent=11 // pred_region
        _
      $region28: #{heimdall_detector_picker.1} parent=11 // pred_fallthru
        _
      // Predicated region
      $region29: #{heimdall_detector_picker.1} parent=11 // pred_check
        %p778 = pneg %p200
      $region30: #{heimdall_detector_picker.1} parent=11 // pred_check_branch
        %780 = sbr.rel (%p778) target = $region32
      $region31: #{heimdall_detector_picker.1} parent=11 // pred_region
        _
      $region32: #{heimdall_detector_picker.1} parent=11 // pred_fallthru
        _
      // Predicated region
      $region33: #{heimdall_detector_picker.1} parent=11 // pred_check
        %p781 = pneg %p221
      $region34: #{heimdall_detector_picker.1} parent=11 // pred_check_branch
        %783 = sbr.rel (%p781) target = $region36
      $region35: #{heimdall_detector_picker.1} parent=11 // pred_region
        _
      $region36: #{heimdall_detector_picker.1} parent=11 // pred_fallthru
        _
      // Predicated region
      $region37: #{heimdall_detector_picker.1} parent=11 // pred_check
        %p784 = pneg %p242
      $region38: #{heimdall_detector_picker.1} parent=11 // pred_check_branch
        %786 = sbr.rel (%p784) target = $region40
      $region39: #{heimdall_detector_picker.1} parent=11 // pred_region
        _
      $region40: #{heimdall_detector_picker.1} parent=11 // pred_fallthru
        _
      // Predicated region
      $region41: #{heimdall_detector_picker.1} parent=11 // pred_check
        %p787 = pneg %p263
      $region42: #{heimdall_detector_picker.1} parent=11 // pred_check_branch
        %789 = sbr.rel (%p787) target = $region44
      $region43: #{heimdall_detector_picker.1} parent=11 // pred_region
        _
      $region44: #{heimdall_detector_picker.1} parent=11 // pred_fallthru
        _
      // Predicated region
      $region45: #{heimdall_detector_picker.1} parent=11 // pred_check
        %p790 = pneg %p284
      $region46: #{heimdall_detector_picker.1} parent=11 // pred_check_branch
        %792 = sbr.rel (%p790) target = $region48
      $region47: #{heimdall_detector_picker.1} parent=11 // pred_region
        _
      $region48: #{heimdall_detector_picker.1} parent=11 // pred_fallthru
        _
      // Predicated region
      $region49: #{heimdall_detector_picker.1} parent=11 // pred_check
        %p793 = pneg %p305
      $region50: #{heimdall_detector_picker.1} parent=11 // pred_check_branch
        %795 = sbr.rel (%p793) target = $region52
      $region51: #{heimdall_detector_picker.1} parent=11 // pred_region
        _
      $region52: #{heimdall_detector_picker.1} parent=11 // pred_fallthru
        _
      // Predicated region
      $region53: #{heimdall_detector_picker.1} parent=11 // pred_check
        %p796 = pneg %p326
      $region54: #{heimdall_detector_picker.1} parent=11 // pred_check_branch
        %798 = sbr.rel (%p796) target = $region56
      $region55: #{heimdall_detector_picker.1} parent=11 // pred_region
        _
      $region56: #{heimdall_detector_picker.1} parent=11 // pred_fallthru
        _
      // Predicated region
      $region57: #{heimdall_detector_picker.1} parent=11 // pred_check
        %p799 = pneg %p347
      $region58: #{heimdall_detector_picker.1} parent=11 // pred_check_branch
        %801 = sbr.rel (%p799) target = $region60
      $region59: #{heimdall_detector_picker.1} parent=11 // pred_region
        _
      $region60: #{heimdall_detector_picker.1} parent=11 // pred_fallthru
        _
      // Predicated region
      $region61: #{heimdall_detector_picker.1} parent=11 // pred_check
        %p802 = pneg %p368
      $region62: #{heimdall_detector_picker.1} parent=11 // pred_check_branch
        %804 = sbr.rel (%p802) target = $region64
      $region63: #{heimdall_detector_picker.1} parent=11 // pred_region
        _
      $region64: #{heimdall_detector_picker.1} parent=11 // pred_fallthru
        _
      // Predicated region
      $region65: #{heimdall_detector_picker.1} parent=11 // pred_check
        %p805 = pneg %p389
      $region66: #{heimdall_detector_picker.1} parent=11 // pred_check_branch
        %807 = sbr.rel (%p805) target = $region68
      $region67: #{heimdall_detector_picker.1} parent=11 // pred_region
        _
      $region68: #{heimdall_detector_picker.1} parent=11 // pred_fallthru
        _
      // Predicated region
      $region69: #{heimdall_detector_picker.1} parent=11 // pred_check
        %p808 = pneg %p410
      $region70: #{heimdall_detector_picker.1} parent=11 // pred_check_branch
        %810 = sbr.rel (%p808) target = $region72
      $region71: #{heimdall_detector_picker.1} parent=11 // pred_region
        _
      $region72: #{heimdall_detector_picker.1} parent=11 // pred_fallthru
        _
      // Predicated region
      $region73: #{heimdall_detector_picker.1} parent=11 // pred_check
        %p811 = pneg %p431
      $region74: #{heimdall_detector_picker.1} parent=11 // pred_check_branch
        %813 = sbr.rel (%p811) target = $region76
      $region75: #{heimdall_detector_picker.1} parent=11 // pred_region
        _
      $region76: #{heimdall_detector_picker.1} parent=11 // pred_fallthru
        _
      // Predicated region
      $region77: #{heimdall_detector_picker.1} parent=11 // pred_check
        %p814 = pneg %p452
      $region78: #{heimdall_detector_picker.1} parent=11 // pred_check_branch
        %816 = sbr.rel (%p814) target = $region80
      $region79: #{heimdall_detector_picker.1} parent=11 // pred_region
        _
      $region80: #{heimdall_detector_picker.1} parent=11 // pred_fallthru
        _
      // Predicated region
      $region81: #{heimdall_detector_picker.1} parent=11 // pred_check
        %p817 = pneg %p473
      $region82: #{heimdall_detector_picker.1} parent=11 // pred_check_branch
        %819 = sbr.rel (%p817) target = $region84
      $region83: #{heimdall_detector_picker.1} parent=11 // pred_region
        _
      $region84: #{heimdall_detector_picker.1} parent=11 // pred_fallthru
        _
      // Predicated region
      $region85: #{heimdall_detector_picker.1} parent=11 // pred_check
        %p820 = pneg %p494
      $region86: #{heimdall_detector_picker.1} parent=11 // pred_check_branch
        %822 = sbr.rel (%p820) target = $region88
      $region87: #{heimdall_detector_picker.1} parent=11 // pred_region
        _
      $region88: #{heimdall_detector_picker.1} parent=11 // pred_fallthru
        _
      // Predicated region
      $region89: #{heimdall_detector_picker.1} parent=11 // pred_check
        %p823 = pneg %p515
      $region90: #{heimdall_detector_picker.1} parent=11 // pred_check_branch
        %825 = sbr.rel (%p823) target = $region92
      $region91: #{heimdall_detector_picker.1} parent=11 // pred_region
        _
      $region92: #{heimdall_detector_picker.1} parent=11 // pred_fallthru
        _
      // Predicated region
      $region93: #{heimdall_detector_picker.1} parent=11 // pred_check
        %p826 = pneg %p536
      $region94: #{heimdall_detector_picker.1} parent=11 // pred_check_branch
        %828 = sbr.rel (%p826) target = $region96
      $region95: #{heimdall_detector_picker.1} parent=11 // pred_region
        _
      $region96: #{heimdall_detector_picker.1} parent=11 // pred_fallthru
        _
      // Predicated region
      $region97: #{heimdall_detector_picker.1} parent=11 // pred_check
        %p829 = pneg %p557
      $region98: #{heimdall_detector_picker.1} parent=11 // pred_check_branch
        %831 = sbr.rel (%p829) target = $region100
      $region99: #{heimdall_detector_picker.1} parent=11 // pred_region
        _
      $region100: #{heimdall_detector_picker.1} parent=11 // pred_fallthru
        _
      // Predicated region
      $region101: #{heimdall_detector_picker.1} parent=11 // pred_check
        %p832 = pneg %p578
      $region102: #{heimdall_detector_picker.1} parent=11 // pred_check_branch
        %834 = sbr.rel (%p832) target = $region104
      $region103: #{heimdall_detector_picker.1} parent=11 // pred_region
        _
      $region104: #{heimdall_detector_picker.1} parent=11 // pred_fallthru
        _
      // Predicated region
      $region105: #{heimdall_detector_picker.1} parent=11 // pred_check
        %p835 = pneg %p599
      $region106: #{heimdall_detector_picker.1} parent=11 // pred_check_branch
        %837 = sbr.rel (%p835) target = $region108
      $region107: #{heimdall_detector_picker.1} parent=11 // pred_region
        _
      $region108: #{heimdall_detector_picker.1} parent=11 // pred_fallthru
        _
      // Predicated region
      $region109: #{heimdall_detector_picker.1} parent=11 // pred_check
        %p838 = pneg %p620
      $region110: #{heimdall_detector_picker.1} parent=11 // pred_check_branch
        %840 = sbr.rel (%p838) target = $region112
      $region111: #{heimdall_detector_picker.1} parent=11 // pred_region
        _
      $region112: #{heimdall_detector_picker.1} parent=11 // pred_fallthru
        _
      // Predicated region
      $region113: #{heimdall_detector_picker.1} parent=11 // pred_check
        %p841 = pneg %p641
      $region114: #{heimdall_detector_picker.1} parent=11 // pred_check_branch
        %843 = sbr.rel (%p841) target = $region116
      $region115: #{heimdall_detector_picker.1} parent=11 // pred_region
        _
      $region116: #{heimdall_detector_picker.1} parent=11 // pred_fallthru
        _
      // Predicated region
      $region117: #{heimdall_detector_picker.1} parent=11 // pred_check
        %p844 = pneg %p662
      $region118: #{heimdall_detector_picker.1} parent=11 // pred_check_branch
        %846 = sbr.rel (%p844) target = $region120
      $region119: #{heimdall_detector_picker.1} parent=11 // pred_region
        _
      $region120: #{heimdall_detector_picker.1} parent=11 // pred_fallthru
        _
      // Predicated region
      $region121: #{heimdall_detector_picker.1} parent=11 // pred_check
        %p847 = pneg %p683
      $region122: #{heimdall_detector_picker.1} parent=11 // pred_check_branch
        %849 = sbr.rel (%p847) target = $region124
      $region123: #{heimdall_detector_picker.1} parent=11 // pred_region
        _
      $region124: #{heimdall_detector_picker.1} parent=11 // pred_fallthru
        _
      // Predicated region
      $region125: #{heimdall_detector_picker.1} parent=11 // pred_check
        %p850 = pneg %p704
      $region126: #{heimdall_detector_picker.1} parent=11 // pred_check_branch
        %852 = sbr.rel (%p850) target = $region128
      $region127: #{heimdall_detector_picker.1} parent=11 // pred_region
        _
      $region128: #{heimdall_detector_picker.1} parent=11 // pred_fallthru
        _
      // Predicated region
      $region129: #{heimdall_detector_picker.1} parent=11 // pred_check
        %p853 = pneg %p725
      $region130: #{heimdall_detector_picker.1} parent=11 // pred_check_branch
        %855 = sbr.rel (%p853) target = $region132
      $region131: #{heimdall_detector_picker.1} parent=11 // pred_region
        _
      $region132: #{heimdall_detector_picker.1} parent=11 // pred_fallthru
        _
    $region12: #{heimdall_detector_picker.1} parent=5 // pred_fallthru
      _
    %p856 = scmp.lt.s32.totalorder %s69, 2
    // Predicated region
    $region133: #{heimdall_detector_picker.1} parent=5 // pred_check
      %p857 = pneg %p856
    $region134: #{heimdall_detector_picker.1} parent=5 // pred_check_branch
      %859 = sbr.rel (%p857) target = $region136
    $region135: #{heimdall_detector_picker.1} parent=5 // pred_region
      // Predicated region
      $region137: #{heimdall_detector_picker.1} parent=135 // pred_check
        %p860 = pneg %p89
      $region138: #{heimdall_detector_picker.1} parent=135 // pred_check_branch
        %862 = sbr.rel (%p860) target = $region140
      $region139: #{heimdall_detector_picker.1} parent=135 // pred_region
        %p863 = scmp.lt.s32.totalorder %s69, 1
        %s864 = scalar_select %p863, %s69, 1
        %s865 = smul.addr %s864, 2
        %s866 = smul.addr %s865, 8
        %s867 = scalar_lea.vmem %s1, %s866
      $region140: #{heimdall_detector_picker.1} parent=135 // pred_fallthru
        _
    $region136: #{heimdall_detector_picker.1} parent=5 // pred_fallthru
      _
    %p868 = scmp.le.s32.totalorder 1, %s69
    %p869 = scmp.lt.s32.totalorder %s69, 3
    %p870 = pnand %p868, %p869
    %p871 = pneg %p870
    // Predicated region
    $region141: #{heimdall_detector_picker.1} parent=5 // pred_check
      _
    $region142: #{heimdall_detector_picker.1} parent=5 // pred_check_branch
      %873 = sbr.rel (%p870) target = $region144
    $region143: #{heimdall_detector_picker.1} parent=5 // pred_region
      %s874 = ssub.s32 %s69, 1
      %p875 = scmp.lt.s32.totalorder %s74, 1
      %s876 = scalar_select %p875, %s74, 1
      %s877 = smul.addr %s876, 2
      %s878 = smul.addr %s877, 8
      %s879 = scalar_lea.vmem %s1, %s878
      %p880 = pneg %p95
      %p881 = pneg %p92
      %p882 = pneg %p116
      %p883 = pneg %p113
      %p884 = pneg %p137
      %p885 = pneg %p134
      %p886 = pneg %p158
      %p887 = pneg %p155
      %p888 = pneg %p179
      %p889 = pneg %p176
      %p890 = pneg %p200
      %p891 = pneg %p197
      %p892 = pneg %p221
      %p893 = pneg %p218
      %p894 = pneg %p242
      %p895 = pneg %p239
      %p896 = pneg %p263
      %p897 = pneg %p260
      %p898 = pneg %p284
      %p899 = pneg %p281
      %p900 = pneg %p305
      %p901 = pneg %p302
      %p902 = pneg %p326
      %p903 = pneg %p323
      %p904 = pneg %p347
      %p905 = pneg %p344
      %p906 = pneg %p368
      %p907 = pneg %p365
      %p908 = pneg %p389
      %p909 = pneg %p386
      %p910 = pneg %p410
      %p911 = pneg %p407
      %p912 = pneg %p431
      %p913 = pneg %p428
      %p914 = pneg %p452
      %p915 = pneg %p449
      %p916 = pneg %p473
      %p917 = pneg %p470
      %p918 = pneg %p494
      %p919 = pneg %p491
      %p920 = pneg %p515
      %p921 = pneg %p512
      %p922 = pneg %p536
      %p923 = pneg %p533
      %p924 = pneg %p557
      %p925 = pneg %p554
      %p926 = pneg %p578
      %p927 = pneg %p575
      %p928 = pneg %p599
      %p929 = pneg %p596
      %p930 = pneg %p620
      %p931 = pneg %p617
      %p932 = pneg %p641
      %p933 = pneg %p638
      %p934 = pneg %p662
      %p935 = pneg %p659
      %p936 = pneg %p683
      %p937 = pneg %p680
      %p938 = pneg %p704
      %p939 = pneg %p701
      %p940 = pneg %p725
      %p941 = pneg %p722
      %p942 = pneg %p751
      %p943 = pneg %p748
      %p944 = scmp.lt.s32.totalorder %s74, 1
      %s945 = scalar_select %p944, %s74, 1
      %s946 = smul.addr %s945, 4
      %s947 = scalar_lea.vmem %s63, %s946
      %p948 = scmp.lt.s32.totalorder %s74, 1
      %s949 = scalar_select %p948, %s74, 1
      %s950 = smul.addr %s949, 2
      %s951 = smul.addr %s950, 8
      %s952 = scalar_lea.vmem %s1, %s951
      %p953 = scmp.lt.s32.totalorder %s74, 1
      %s954 = scalar_select %p953, %s74, 1
      %s955 = smul.addr %s954, 4
      %s956 = scalar_lea.vmem %s63, %s955
      %958 = vst [vmem:[#allocation4] sm:$0xff] 0.0
      %959 = vst [vmem:[#allocation4 + $0x8] sm:$0xff] 0.0
      %960 = vst [vmem:[#allocation4 + $0x10] sm:$0xff] 0.0
      %961 = vst [vmem:[#allocation4 + $0x18] sm:$0xff] 0.0
      %962 = vst [vmem:[#allocation4 + $0x20] sm:$0xff] 0.0
      %963 = vst [vmem:[#allocation4 + $0x28] sm:$0xff] 0.0
      %964 = vst [vmem:[#allocation4 + $0x30] sm:$0xff] 0.0
      %965 = vst [vmem:[#allocation4 + $0x38] sm:$0xff] 0.0
      %966 = vst [vmem:[#allocation4 + $0x40] sm:$0xff] 0.0
      %967 = vst [vmem:[#allocation4 + $0x48] sm:$0xff] 0.0
      %968 = vst [vmem:[#allocation4 + $0x50] sm:$0xff] 0.0
      %969 = vst [vmem:[#allocation4 + $0x58] sm:$0xff] 0.0
      %970 = vst [vmem:[#allocation4 + $0x60] sm:$0xff] 0.0
      %971 = vst [vmem:[#allocation4 + $0x68] sm:$0xff] 0.0
      %972 = vst [vmem:[#allocation4 + $0x70] sm:$0xff] 0.0
      %973 = vst [vmem:[#allocation4 + $0x78] sm:$0xff] 0.0
      %974 = vst [vmem:[#allocation4 + $0x80] sm:$0xff] 0.0
      %975 = vst [vmem:[#allocation4 + $0x88] sm:$0xff] 0.0
      %v976 = vld [vmem:[%s952] sm:$0xff]
      %v977 = vld [vmem:[%s952 + $0x8] sm:$0xff]
      %v978 = vpack.c.bf16 %v977, %v976
      %v979 = vld [vmem:[%s3] sm:$0xff]
      %v980 = vld [vmem:[%s3 + $0x8] sm:$0xff]
      %v981 = vld [vmem:[%s3 + $0x10] sm:$0xff]
      %v982 = vld [vmem:[%s3 + $0x18] sm:$0xff]
      %v983 = vld [vmem:[%s5] sm:$0x3]
      %v985 = vperm.slane %v983, 0
      %v986 = vperm.slane %v983, 1
      %v993 = vunpack.c.l.b16 %v979
      %v994 = vunpack.c.h.b16 %v979
      %v995 = vunpack.c.l.b16 %v980
      %v996 = vunpack.c.h.b16 %v980
      %v997 = vunpack.c.l.b16 %v981
      %v998 = vunpack.c.h.b16 %v981
      %v999 = vunpack.c.l.b16 %v982
      %v1000 = vunpack.c.h.b16 %v982
      %v1001 = vpack.c.b16 %v995, %v993
      %v1002 = vpack.c.b16 %v996, %v994
      %v1003 = vpack.c.b16 %v999, %v997
      %v1004 = vpack.c.b16 %v1000, %v998
      %vm1009 = vcmask 261120
      %v1011 = vsel %vm1009, %v978, 0
      %1013 = vmatpush.bf16.msra.mxu0 0
      %1014 = vmatpush.bf16.msra.mxu0 0
      %1015 = vmatpush.bf16.msra.mxu0 0
      %1016 = vmatpush.bf16.msra.mxu0 0
      %1017 = vmatpush.bf16.msra.mxu0 0
      %1018 = vmatpush.bf16.msra.mxu0 0
      %1019 = vmatpush.bf16.msra.mxu0 %v1003
      %1020 = vmatpush.bf16.msra.mxu0 %v1001
      %1021 = vmatmul.bf16.gmra.mxu0 %v1011
      %v1022 = vpop.f32.mrf.mxu0
      %v1023 = vadd.f32 %v985, %v1022
      %v1024 = vpop.f32.mrf.mxu0
      %v1025 = vadd.f32 %v985, %v1024
      %1026 = vdwg.mxu0
      %1027 = vmatpush.bf16.msra.mxu0 0
      %1028 = vmatpush.bf16.msra.mxu0 0
      %1029 = vmatpush.bf16.msra.mxu0 0
      %1030 = vmatpush.bf16.msra.mxu0 0
      %1031 = vmatpush.bf16.msra.mxu0 0
      %1032 = vmatpush.bf16.msra.mxu0 0
      %1033 = vmatpush.bf16.msra.mxu0 %v1004
      %1034 = vmatpush.bf16.msra.mxu0 %v1002
      %1035 = vmatmul.bf16.gmra.mxu0 %v1011
      %v1036 = vpop.f32.mrf.mxu0
      %v1037 = vadd.f32 %v986, %v1036
      %v1038 = vpop.f32.mrf.mxu0
      %v1039 = vadd.f32 %v986, %v1038
      %1040 = vdwg.mxu0
      %1041 = vst [vmem:[#allocation2] sm:$0xff] %v1023
      %1042 = vst [vmem:[#allocation2 + $0x8] sm:$0xff] %v1037
      %1043 = vst [vmem:[#allocation2 + $0x10] sm:$0xff] %v1025
      %1044 = vst [vmem:[#allocation2 + $0x18] sm:$0xff] %v1039
      %v1045 = vld [vmem:[%s7] sm:$0xf]
      %v1046 = vld [vmem:[%s7 + $0x4] sm:$0xf]
      %v1047 = vld [vmem:[%s7 + $0x8] sm:$0xf]
      %v1048 = vld [vmem:[%s7 + $0xc] sm:$0xf]
      %v1049 = vld [vmem:[#allocation2] ss:$0 sm:$0xff]
      %v1050 = vld [vmem:[#allocation2 + $0x1f] ss:$0 sm:$0xff]
      %v1051 = vadd.f32 %v1049, %v1050
      %v1056 = vunpack.c.l.b16 %v1045
      %v1057 = vunpack.c.l.b16 %v1046
      %v1058 = vunpack.c.l.b16 %v1047
      %v1059 = vunpack.c.l.b16 %v1048
      %v1060 = vpack.c.b16 %v1057, %v1056
      %v1061 = vpack.c.b16 %v1059, %v1058
      %v1065 = vsel %vm1009, 0, 0
      %1067 = vmatpush.bf16.msra.mxu0 0
      %1068 = vmatpush.bf16.msra.mxu0 0
      %1069 = vmatpush.bf16.msra.mxu0 0
      %1070 = vmatpush.bf16.msra.mxu0 0
      %1071 = vmatpush.bf16.msra.mxu0 0
      %1072 = vmatpush.bf16.msra.mxu0 0
      %1073 = vmatpush.bf16.msra.mxu0 %v1061
      %1074 = vmatpush.bf16.msra.mxu0 %v1060
      %1075 = vmatmul.bf16.gmra.mxu0 %v1065
      %v1076 = vpop.f32.mrf.mxu0
      %v1077 = vadd.f32 0.0, %v1076
      %v1078 = vpop.f32.mrf.mxu0
      %1079 = vdwg.mxu0
      %v1080 = vadd.f32 %v1051, %v1077
      %v1081 = vxor.u32 %v1080, 2147483648
      %v1082 = vmul.f32 %v1081, 1.442695
      %v1083 = vpow.pop %v1082
      %v1084 = vadd.f32 %v1083, 1.0
      %v1085 = vrcp.pop %v1084
      %v1086 = vmul.f32 %v1084, %v1085
      %v1087 = vsub.f32 1.0, %v1086
      %v1088 = vmul.f32 %v1085, %v1087
      %v1089 = vadd.f32 %v1085, %v1088
      %vm1090 = vweird.f32 %v1084
      %vm1091 = vweird.f32 %v1085
      %vm1092 = vmor %vm1090, %vm1091
      %v1093 = vsel %vm1092, %v1085, %v1089
      %v1094 = vand.u32 2147483647, %v1084
      %vm1095 = vcmp.eq.f32.partialorder %v1094, 8.507059e+37
      %v1096 = vand.u32 %v1084, 2147483648
      %v1097 = vor.u32 1.1754944e-38, %v1096
      %v1098 = vsel %vm1095, %v1097, %v1093
      %v1099 = vmul.f32 1.0, %v1098
      %v1100 = vtanh.pop %v1080
      %v1101 = vmul.f32 %v1099, 0.0
      %1103 = vrot.lane.b32.xlu0 %v1100, 64
      %v1104 = vpop.permute.xlu0 %1103
      %v1106 = vmul.f32 %v1099, %v1104
      %1108 = vrot.lane.b32.xlu0 %v1106, 32
      %v1109 = vpop.permute.xlu0 %1108
      %v1111 = vadd.f32 %v1101, %v1109
      %v1112 = vtanh.pop %v1111
      %1114 = vrot.lane.b32.xlu0 %v1112, 64
      %v1115 = vpop.permute.xlu0 %1114
      %v1117 = vmul.f32 %v1099, %v1115
      %1119 = vrot.lane.b32.xlu0 %v1117, 32
      %v1120 = vpop.permute.xlu0 %1119
      %vm1122 = vcmask 253952
      %1123 = vst.msk [vmem:[#allocation3] sm:$0x1] %vm1122, %v1120
      %v1124 = vld [vmem:[#allocation2 + $0x1] ss:$0 sm:$0xff]
      %v1125 = vld [vmem:[#allocation2 + $0x1e] ss:$0 sm:$0xff]
      %v1126 = vadd.f32 %v1124, %v1125
      %v1127 = vpack.c.bf16 %v1117, %v1117
      %1129 = vrot.lane.b32.xlu0 %v1127, 32
      %v1130 = vpop.permute.xlu0 %1129
      %v1132 = vsel %vm1009, %v1130, 0
      %1134 = vmatpush.bf16.msra.mxu0 0
      %1135 = vmatpush.bf16.msra.mxu0 0
      %1136 = vmatpush.bf16.msra.mxu0 0
      %1137 = vmatpush.bf16.msra.mxu0 0
      %1138 = vmatpush.bf16.msra.mxu0 0
      %1139 = vmatpush.bf16.msra.mxu0 0
      %1140 = vmatpush.bf16.msra.mxu0 %v1061
      %1141 = vmatpush.bf16.msra.mxu0 %v1060
      %1142 = vmatmul.bf16.gmra.mxu0 %v1132
      %v1143 = vpop.f32.mrf.mxu0
      %v1144 = vadd.f32 0.0, %v1143
      %v1145 = vpop.f32.mrf.mxu0
      %1146 = vdwg.mxu0
      %v1147 = vadd.f32 %v1126, %v1144
      %v1148 = vxor.u32 %v1147, 2147483648
      %v1149 = vmul.f32 %v1148, 1.442695
      %v1150 = vpow.pop %v1149
      %v1151 = vadd.f32 %v1150, 1.0
      %v1152 = vrcp.pop %v1151
      %v1153 = vmul.f32 %v1151, %v1152
      %v1154 = vsub.f32 1.0, %v1153
      %v1155 = vmul.f32 %v1152, %v1154
      %v1156 = vadd.f32 %v1152, %v1155
      %vm1157 = vweird.f32 %v1151
      %vm1158 = vweird.f32 %v1152
      %vm1159 = vmor %vm1157, %vm1158
      %v1160 = vsel %vm1159, %v1152, %v1156
      %v1161 = vand.u32 2147483647, %v1151
      %vm1162 = vcmp.eq.f32.partialorder %v1161, 8.507059e+37
      %v1163 = vand.u32 %v1151, 2147483648
      %v1164 = vor.u32 1.1754944e-38, %v1163
      %v1165 = vsel %vm1162, %v1164, %v1160
      %v1166 = vmul.f32 1.0, %v1165
      %v1167 = vtanh.pop %v1147
      %v1168 = vmul.f32 %v1166, %v1111
      %1170 = vrot.lane.b32.xlu0 %v1167, 64
      %v1171 = vpop.permute.xlu0 %1170
      %v1173 = vmul.f32 %v1166, %v1171
      %1175 = vrot.lane.b32.xlu0 %v1173, 32
      %v1176 = vpop.permute.xlu0 %1175
      %v1178 = vadd.f32 %v1168, %v1176
      %v1179 = vtanh.pop %v1178
      %1181 = vrot.lane.b32.xlu0 %v1179, 64
      %v1182 = vpop.permute.xlu0 %1181
      %v1184 = vmul.f32 %v1166, %v1182
      %1186 = vrot.lane.b32.xlu0 %v1184, 32
      %v1187 = vpop.permute.xlu0 %1186
      %1189 = vst.msk [vmem:[#allocation3 + $0x1] sm:$0x1] %vm1122, %v1187
      %v1190 = vld [vmem:[#allocation2 + $0x2] ss:$0 sm:$0xff]
      %v1191 = vld [vmem:[#allocation2 + $0x1d] ss:$0 sm:$0xff]
      %v1192 = vadd.f32 %v1190, %v1191
      %v1193 = vpack.c.bf16 %v1184, %v1184
      %1195 = vrot.lane.b32.xlu0 %v1193, 32
      %v1196 = vpop.permute.xlu0 %1195
      %v1198 = vsel %vm1009, %v1196, 0
      %1200 = vmatpush.bf16.msra.mxu0 0
      %1201 = vmatpush.bf16.msra.mxu0 0
      %1202 = vmatpush.bf16.msra.mxu0 0
      %1203 = vmatpush.bf16.msra.mxu0 0
      %1204 = vmatpush.bf16.msra.mxu0 0
      %1205 = vmatpush.bf16.msra.mxu0 0
      %1206 = vmatpush.bf16.msra.mxu0 %v1061
      %1207 = vmatpush.bf16.msra.mxu0 %v1060
      %1208 = vmatmul.bf16.gmra.mxu0 %v1198
      %v1209 = vpop.f32.mrf.mxu0
      %v1210 = vadd.f32 0.0, %v1209
      %v1211 = vpop.f32.mrf.mxu0
      %1212 = vdwg.mxu0
      %v1213 = vadd.f32 %v1192, %v1210
      %v1214 = vxor.u32 %v1213, 2147483648
      %v1215 = vmul.f32 %v1214, 1.442695
      %v1216 = vpow.pop %v1215
      %v1217 = vadd.f32 %v1216, 1.0
      %v1218 = vrcp.pop %v1217
      %v1219 = vmul.f32 %v1217, %v1218
      %v1220 = vsub.f32 1.0, %v1219
      %v1221 = vmul.f32 %v1218, %v1220
      %v1222 = vadd.f32 %v1218, %v1221
      %vm1223 = vweird.f32 %v1217
      %vm1224 = vweird.f32 %v1218
      %vm1225 = vmor %vm1223, %vm1224
      %v1226 = vsel %vm1225, %v1218, %v1222
      %v1227 = vand.u32 2147483647, %v1217
      %vm1228 = vcmp.eq.f32.partialorder %v1227, 8.507059e+37
      %v1229 = vand.u32 %v1217, 2147483648
      %v1230 = vor.u32 1.1754944e-38, %v1229
      %v1231 = vsel %vm1228, %v1230, %v1226
      %v1232 = vmul.f32 1.0, %v1231
      %v1233 = vtanh.pop %v1213
      %v1234 = vmul.f32 %v1232, %v1178
      %1236 = vrot.lane.b32.xlu0 %v1233, 64
      %v1237 = vpop.permute.xlu0 %1236
      %v1239 = vmul.f32 %v1232, %v1237
      %1241 = vrot.lane.b32.xlu0 %v1239, 32
      %v1242 = vpop.permute.xlu0 %1241
      %v1244 = vadd.f32 %v1234, %v1242
      %v1245 = vtanh.pop %v1244
      %1247 = vrot.lane.b32.xlu0 %v1245, 64
      %v1248 = vpop.permute.xlu0 %1247
      %v1250 = vmul.f32 %v1232, %v1248
      %1252 = vrot.lane.b32.xlu0 %v1250, 32
      %v1253 = vpop.permute.xlu0 %1252
      %1255 = vst.msk [vmem:[#allocation3 + $0x2] sm:$0x1] %vm1122, %v1253
      %v1256 = vld [vmem:[#allocation2 + $0x3] ss:$0 sm:$0xff]
      %v1257 = vld [vmem:[#allocation2 + $0x1c] ss:$0 sm:$0xff]
      %v1258 = vadd.f32 %v1256, %v1257
      %v1259 = vpack.c.bf16 %v1250, %v1250
      %1261 = vrot.lane.b32.xlu0 %v1259, 32
      %v1262 = vpop.permute.xlu0 %1261
      %v1264 = vsel %vm1009, %v1262, 0
      %1266 = vmatpush.bf16.msra.mxu0 0
      %1267 = vmatpush.bf16.msra.mxu0 0
      %1268 = vmatpush.bf16.msra.mxu0 0
      %1269 = vmatpush.bf16.msra.mxu0 0
      %1270 = vmatpush.bf16.msra.mxu0 0
      %1271 = vmatpush.bf16.msra.mxu0 0
      %1272 = vmatpush.bf16.msra.mxu0 %v1061
      %1273 = vmatpush.bf16.msra.mxu0 %v1060
      %1274 = vmatmul.bf16.gmra.mxu0 %v1264
      %v1275 = vpop.f32.mrf.mxu0
      %v1276 = vadd.f32 0.0, %v1275
      %v1277 = vpop.f32.mrf.mxu0
      %1278 = vdwg.mxu0
      %v1279 = vadd.f32 %v1258, %v1276
      %v1280 = vxor.u32 %v1279, 2147483648
      %v1281 = vmul.f32 %v1280, 1.442695
      %v1282 = vpow.pop %v1281
      %v1283 = vadd.f32 %v1282, 1.0
      %v1284 = vrcp.pop %v1283
      %v1285 = vmul.f32 %v1283, %v1284
      %v1286 = vsub.f32 1.0, %v1285
      %v1287 = vmul.f32 %v1284, %v1286
      %v1288 = vadd.f32 %v1284, %v1287
      %vm1289 = vweird.f32 %v1283
      %vm1290 = vweird.f32 %v1284
      %vm1291 = vmor %vm1289, %vm1290
      %v1292 = vsel %vm1291, %v1284, %v1288
      %v1293 = vand.u32 2147483647, %v1283
      %vm1294 = vcmp.eq.f32.partialorder %v1293, 8.507059e+37
      %v1295 = vand.u32 %v1283, 2147483648
      %v1296 = vor.u32 1.1754944e-38, %v1295
      %v1297 = vsel %vm1294, %v1296, %v1292
      %v1298 = vmul.f32 1.0, %v1297
      %v1299 = vtanh.pop %v1279
      %v1300 = vmul.f32 %v1298, %v1244
      %1302 = vrot.lane.b32.xlu0 %v1299, 64
      %v1303 = vpop.permute.xlu0 %1302
      %v1305 = vmul.f32 %v1298, %v1303
      %1307 = vrot.lane.b32.xlu0 %v1305, 32
      %v1308 = vpop.permute.xlu0 %1307
      %v1310 = vadd.f32 %v1300, %v1308
      %v1311 = vtanh.pop %v1310
      %1313 = vrot.lane.b32.xlu0 %v1311, 64
      %v1314 = vpop.permute.xlu0 %1313
      %v1316 = vmul.f32 %v1298, %v1314
      %1318 = vrot.lane.b32.xlu0 %v1316, 32
      %v1319 = vpop.permute.xlu0 %1318
      %1321 = vst.msk [vmem:[#allocation3 + $0x3] sm:$0x1] %vm1122, %v1319
      %v1322 = vld [vmem:[#allocation2 + $0x4] ss:$0 sm:$0xff]
      %v1323 = vld [vmem:[#allocation2 + $0x1b] ss:$0 sm:$0xff]
      %v1324 = vadd.f32 %v1322, %v1323
      %v1325 = vpack.c.bf16 %v1316, %v1316
      %1327 = vrot.lane.b32.xlu0 %v1325, 32
      %v1328 = vpop.permute.xlu0 %1327
      %v1330 = vsel %vm1009, %v1328, 0
      %1332 = vmatpush.bf16.msra.mxu0 0
      %1333 = vmatpush.bf16.msra.mxu0 0
      %1334 = vmatpush.bf16.msra.mxu0 0
      %1335 = vmatpush.bf16.msra.mxu0 0
      %1336 = vmatpush.bf16.msra.mxu0 0
      %1337 = vmatpush.bf16.msra.mxu0 0
      %1338 = vmatpush.bf16.msra.mxu0 %v1061
      %1339 = vmatpush.bf16.msra.mxu0 %v1060
      %1340 = vmatmul.bf16.gmra.mxu0 %v1330
      %v1341 = vpop.f32.mrf.mxu0
      %v1342 = vadd.f32 0.0, %v1341
      %v1343 = vpop.f32.mrf.mxu0
      %1344 = vdwg.mxu0
      %v1345 = vadd.f32 %v1324, %v1342
      %v1346 = vxor.u32 %v1345, 2147483648
      %v1347 = vmul.f32 %v1346, 1.442695
      %v1348 = vpow.pop %v1347
      %v1349 = vadd.f32 %v1348, 1.0
      %v1350 = vrcp.pop %v1349
      %v1351 = vmul.f32 %v1349, %v1350
      %v1352 = vsub.f32 1.0, %v1351
      %v1353 = vmul.f32 %v1350, %v1352
      %v1354 = vadd.f32 %v1350, %v1353
      %vm1355 = vweird.f32 %v1349
      %vm1356 = vweird.f32 %v1350
      %vm1357 = vmor %vm1355, %vm1356
      %v1358 = vsel %vm1357, %v1350, %v1354
      %v1359 = vand.u32 2147483647, %v1349
      %vm1360 = vcmp.eq.f32.partialorder %v1359, 8.507059e+37
      %v1361 = vand.u32 %v1349, 2147483648
      %v1362 = vor.u32 1.1754944e-38, %v1361
      %v1363 = vsel %vm1360, %v1362, %v1358
      %v1364 = vmul.f32 1.0, %v1363
      %v1365 = vtanh.pop %v1345
      %v1366 = vmul.f32 %v1364, %v1310
      %1368 = vrot.lane.b32.xlu0 %v1365, 64
      %v1369 = vpop.permute.xlu0 %1368
      %v1371 = vmul.f32 %v1364, %v1369
      %1373 = vrot.lane.b32.xlu0 %v1371, 32
      %v1374 = vpop.permute.xlu0 %1373
      %v1376 = vadd.f32 %v1366, %v1374
      %v1377 = vtanh.pop %v1376
      %1379 = vrot.lane.b32.xlu0 %v1377, 64
      %v1380 = vpop.permute.xlu0 %1379
      %v1382 = vmul.f32 %v1364, %v1380
      %1384 = vrot.lane.b32.xlu0 %v1382, 32
      %v1385 = vpop.permute.xlu0 %1384
      %1387 = vst.msk [vmem:[#allocation3 + $0x4] sm:$0x1] %vm1122, %v1385
      %v1388 = vld [vmem:[#allocation2 + $0x5] ss:$0 sm:$0xff]
      %v1389 = vld [vmem:[#allocation2 + $0x1a] ss:$0 sm:$0xff]
      %v1390 = vadd.f32 %v1388, %v1389
      %v1391 = vpack.c.bf16 %v1382, %v1382
      %1393 = vrot.lane.b32.xlu0 %v1391, 32
      %v1394 = vpop.permute.xlu0 %1393
      %v1396 = vsel %vm1009, %v1394, 0
      %1398 = vmatpush.bf16.msra.mxu0 0
      %1399 = vmatpush.bf16.msra.mxu0 0
      %1400 = vmatpush.bf16.msra.mxu0 0
      %1401 = vmatpush.bf16.msra.mxu0 0
      %1402 = vmatpush.bf16.msra.mxu0 0
      %1403 = vmatpush.bf16.msra.mxu0 0
      %1404 = vmatpush.bf16.msra.mxu0 %v1061
      %1405 = vmatpush.bf16.msra.mxu0 %v1060
      %1406 = vmatmul.bf16.gmra.mxu0 %v1396
      %v1407 = vpop.f32.mrf.mxu0
      %v1408 = vadd.f32 0.0, %v1407
      %v1409 = vpop.f32.mrf.mxu0
      %1410 = vdwg.mxu0
      %v1411 = vadd.f32 %v1390, %v1408
      %v1412 = vxor.u32 %v1411, 2147483648
      %v1413 = vmul.f32 %v1412, 1.442695
      %v1414 = vpow.pop %v1413
      %v1415 = vadd.f32 %v1414, 1.0
      %v1416 = vrcp.pop %v1415
      %v1417 = vmul.f32 %v1415, %v1416
      %v1418 = vsub.f32 1.0, %v1417
      %v1419 = vmul.f32 %v1416, %v1418
      %v1420 = vadd.f32 %v1416, %v1419
      %vm1421 = vweird.f32 %v1415
      %vm1422 = vweird.f32 %v1416
      %vm1423 = vmor %vm1421, %vm1422
      %v1424 = vsel %vm1423, %v1416, %v1420
      %v1425 = vand.u32 2147483647, %v1415
      %vm1426 = vcmp.eq.f32.partialorder %v1425, 8.507059e+37
      %v1427 = vand.u32 %v1415, 2147483648
      %v1428 = vor.u32 1.1754944e-38, %v1427
      %v1429 = vsel %vm1426, %v1428, %v1424
      %v1430 = vmul.f32 1.0, %v1429
      %v1431 = vtanh.pop %v1411
      %v1432 = vmul.f32 %v1430, %v1376
      %1434 = vrot.lane.b32.xlu0 %v1431, 64
      %v1435 = vpop.permute.xlu0 %1434
      %v1437 = vmul.f32 %v1430, %v1435
      %1439 = vrot.lane.b32.xlu0 %v1437, 32
      %v1440 = vpop.permute.xlu0 %1439
      %v1442 = vadd.f32 %v1432, %v1440
      %v1443 = vtanh.pop %v1442
      %1445 = vrot.lane.b32.xlu0 %v1443, 64
      %v1446 = vpop.permute.xlu0 %1445
      %v1448 = vmul.f32 %v1430, %v1446
      %1450 = vrot.lane.b32.xlu0 %v1448, 32
      %v1451 = vpop.permute.xlu0 %1450
      %1453 = vst.msk [vmem:[#allocation3 + $0x5] sm:$0x1] %vm1122, %v1451
      %v1454 = vld [vmem:[#allocation2 + $0x6] ss:$0 sm:$0xff]
      %v1455 = vld [vmem:[#allocation2 + $0x19] ss:$0 sm:$0xff]
      %v1456 = vadd.f32 %v1454, %v1455
      %v1457 = vpack.c.bf16 %v1448, %v1448
      %1459 = vrot.lane.b32.xlu0 %v1457, 32
      %v1460 = vpop.permute.xlu0 %1459
      %v1462 = vsel %vm1009, %v1460, 0
      %1464 = vmatpush.bf16.msra.mxu0 0
      %1465 = vmatpush.bf16.msra.mxu0 0
      %1466 = vmatpush.bf16.msra.mxu0 0
      %1467 = vmatpush.bf16.msra.mxu0 0
      %1468 = vmatpush.bf16.msra.mxu0 0
      %1469 = vmatpush.bf16.msra.mxu0 0
      %1470 = vmatpush.bf16.msra.mxu0 %v1061
      %1471 = vmatpush.bf16.msra.mxu0 %v1060
      %1472 = vmatmul.bf16.gmra.mxu0 %v1462
      %v1473 = vpop.f32.mrf.mxu0
      %v1474 = vadd.f32 0.0, %v1473
      %v1475 = vpop.f32.mrf.mxu0
      %1476 = vdwg.mxu0
      %v1477 = vadd.f32 %v1456, %v1474
      %v1478 = vxor.u32 %v1477, 2147483648
      %v1479 = vmul.f32 %v1478, 1.442695
      %v1480 = vpow.pop %v1479
      %v1481 = vadd.f32 %v1480, 1.0
      %v1482 = vrcp.pop %v1481
      %v1483 = vmul.f32 %v1481, %v1482
      %v1484 = vsub.f32 1.0, %v1483
      %v1485 = vmul.f32 %v1482, %v1484
      %v1486 = vadd.f32 %v1482, %v1485
      %vm1487 = vweird.f32 %v1481
      %vm1488 = vweird.f32 %v1482
      %vm1489 = vmor %vm1487, %vm1488
      %v1490 = vsel %vm1489, %v1482, %v1486
      %v1491 = vand.u32 2147483647, %v1481
      %vm1492 = vcmp.eq.f32.partialorder %v1491, 8.507059e+37
      %v1493 = vand.u32 %v1481, 2147483648
      %v1494 = vor.u32 1.1754944e-38, %v1493
      %v1495 = vsel %vm1492, %v1494, %v1490
      %v1496 = vmul.f32 1.0, %v1495
      %v1497 = vtanh.pop %v1477
      %v1498 = vmul.f32 %v1496, %v1442
      %1500 = vrot.lane.b32.xlu0 %v1497, 64
      %v1501 = vpop.permute.xlu0 %1500
      %v1503 = vmul.f32 %v1496, %v1501
      %1505 = vrot.lane.b32.xlu0 %v1503, 32
      %v1506 = vpop.permute.xlu0 %1505
      %v1508 = vadd.f32 %v1498, %v1506
      %v1509 = vtanh.pop %v1508
      %1511 = vrot.lane.b32.xlu0 %v1509, 64
      %v1512 = vpop.permute.xlu0 %1511
      %v1514 = vmul.f32 %v1496, %v1512
      %1516 = vrot.lane.b32.xlu0 %v1514, 32
      %v1517 = vpop.permute.xlu0 %1516
      %1519 = vst.msk [vmem:[#allocation3 + $0x6] sm:$0x1] %vm1122, %v1517
      %v1520 = vld [vmem:[#allocation2 + $0x7] ss:$0 sm:$0xff]
      %v1521 = vld [vmem:[#allocation2 + $0x18] ss:$0 sm:$0xff]
      %v1522 = vadd.f32 %v1520, %v1521
      %v1523 = vpack.c.bf16 %v1514, %v1514
      %1525 = vrot.lane.b32.xlu0 %v1523, 32
      %v1526 = vpop.permute.xlu0 %1525
      %v1528 = vsel %vm1009, %v1526, 0
      %1530 = vmatpush.bf16.msra.mxu0 0
      %1531 = vmatpush.bf16.msra.mxu0 0
      %1532 = vmatpush.bf16.msra.mxu0 0
      %1533 = vmatpush.bf16.msra.mxu0 0
      %1534 = vmatpush.bf16.msra.mxu0 0
      %1535 = vmatpush.bf16.msra.mxu0 0
      %1536 = vmatpush.bf16.msra.mxu0 %v1061
      %1537 = vmatpush.bf16.msra.mxu0 %v1060
      %1538 = vmatmul.bf16.gmra.mxu0 %v1528
      %v1539 = vpop.f32.mrf.mxu0
      %v1540 = vadd.f32 0.0, %v1539
      %v1541 = vpop.f32.mrf.mxu0
      %1542 = vdwg.mxu0
      %v1543 = vadd.f32 %v1522, %v1540
      %v1544 = vxor.u32 %v1543, 2147483648
      %v1545 = vmul.f32 %v1544, 1.442695
      %v1546 = vpow.pop %v1545
      %v1547 = vadd.f32 %v1546, 1.0
      %v1548 = vrcp.pop %v1547
      %v1549 = vmul.f32 %v1547, %v1548
      %v1550 = vsub.f32 1.0, %v1549
      %v1551 = vmul.f32 %v1548, %v1550
      %v1552 = vadd.f32 %v1548, %v1551
      %vm1553 = vweird.f32 %v1547
      %vm1554 = vweird.f32 %v1548
      %vm1555 = vmor %vm1553, %vm1554
      %v1556 = vsel %vm1555, %v1548, %v1552
      %v1557 = vand.u32 2147483647, %v1547
      %vm1558 = vcmp.eq.f32.partialorder %v1557, 8.507059e+37
      %v1559 = vand.u32 %v1547, 2147483648
      %v1560 = vor.u32 1.1754944e-38, %v1559
      %v1561 = vsel %vm1558, %v1560, %v1556
      %v1562 = vmul.f32 1.0, %v1561
      %v1563 = vtanh.pop %v1543
      %v1564 = vmul.f32 %v1562, %v1508
      %1566 = vrot.lane.b32.xlu0 %v1563, 64
      %v1567 = vpop.permute.xlu0 %1566
      %v1569 = vmul.f32 %v1562, %v1567
      %1571 = vrot.lane.b32.xlu0 %v1569, 32
      %v1572 = vpop.permute.xlu0 %1571
      %v1574 = vadd.f32 %v1564, %v1572
      %v1575 = vtanh.pop %v1574
      %1577 = vrot.lane.b32.xlu0 %v1575, 64
      %v1578 = vpop.permute.xlu0 %1577
      %v1580 = vmul.f32 %v1562, %v1578
      %1582 = vrot.lane.b32.xlu0 %v1580, 32
      %v1583 = vpop.permute.xlu0 %1582
      %1585 = vst.msk [vmem:[#allocation3 + $0x7] sm:$0x1] %vm1122, %v1583
      %v1586 = vld [vmem:[#allocation2 + $0x10] ss:$0 sm:$0xff]
      %v1587 = vld [vmem:[#allocation2 + $0xf] ss:$0 sm:$0xff]
      %v1588 = vadd.f32 %v1586, %v1587
      %v1589 = vpack.c.bf16 %v1580, %v1580
      %1591 = vrot.lane.b32.xlu0 %v1589, 32
      %v1592 = vpop.permute.xlu0 %1591
      %v1594 = vsel %vm1009, %v1592, 0
      %1596 = vmatpush.bf16.msra.mxu0 0
      %1597 = vmatpush.bf16.msra.mxu0 0
      %1598 = vmatpush.bf16.msra.mxu0 0
      %1599 = vmatpush.bf16.msra.mxu0 0
      %1600 = vmatpush.bf16.msra.mxu0 0
      %1601 = vmatpush.bf16.msra.mxu0 0
      %1602 = vmatpush.bf16.msra.mxu0 %v1061
      %1603 = vmatpush.bf16.msra.mxu0 %v1060
      %1604 = vmatmul.bf16.gmra.mxu0 %v1594
      %v1605 = vpop.f32.mrf.mxu0
      %v1606 = vadd.f32 0.0, %v1605
      %v1607 = vpop.f32.mrf.mxu0
      %1608 = vdwg.mxu0
      %v1609 = vadd.f32 %v1588, %v1606
      %v1610 = vxor.u32 %v1609, 2147483648
      %v1611 = vmul.f32 %v1610, 1.442695
      %v1612 = vpow.pop %v1611
      %v1613 = vadd.f32 %v1612, 1.0
      %v1614 = vrcp.pop %v1613
      %v1615 = vmul.f32 %v1613, %v1614
      %v1616 = vsub.f32 1.0, %v1615
      %v1617 = vmul.f32 %v1614, %v1616
      %v1618 = vadd.f32 %v1614, %v1617
      %vm1619 = vweird.f32 %v1613
      %vm1620 = vweird.f32 %v1614
      %vm1621 = vmor %vm1619, %vm1620
      %v1622 = vsel %vm1621, %v1614, %v1618
      %v1623 = vand.u32 2147483647, %v1613
      %vm1624 = vcmp.eq.f32.partialorder %v1623, 8.507059e+37
      %v1625 = vand.u32 %v1613, 2147483648
      %v1626 = vor.u32 1.1754944e-38, %v1625
      %v1627 = vsel %vm1624, %v1626, %v1622
      %v1628 = vmul.f32 1.0, %v1627
      %v1629 = vtanh.pop %v1609
      %v1630 = vmul.f32 %v1628, %v1574
      %1632 = vrot.lane.b32.xlu0 %v1629, 64
      %v1633 = vpop.permute.xlu0 %1632
      %v1635 = vmul.f32 %v1628, %v1633
      %1637 = vrot.lane.b32.xlu0 %v1635, 32
      %v1638 = vpop.permute.xlu0 %1637
      %v1640 = vadd.f32 %v1630, %v1638
      %v1641 = vtanh.pop %v1640
      %1643 = vrot.lane.b32.xlu0 %v1641, 64
      %v1644 = vpop.permute.xlu0 %1643
      %v1646 = vmul.f32 %v1628, %v1644
      %1648 = vrot.lane.b32.xlu0 %v1646, 32
      %v1649 = vpop.permute.xlu0 %1648
      %1651 = vst.msk [vmem:[#allocation3 + $0x8] sm:$0x1] %vm1122, %v1649
      %v1652 = vld [vmem:[#allocation2 + $0x11] ss:$0 sm:$0xff]
      %v1653 = vld [vmem:[#allocation2 + $0xe] ss:$0 sm:$0xff]
      %v1654 = vadd.f32 %v1652, %v1653
      %v1655 = vpack.c.bf16 %v1646, %v1646
      %1657 = vrot.lane.b32.xlu0 %v1655, 32
      %v1658 = vpop.permute.xlu0 %1657
      %v1660 = vsel %vm1009, %v1658, 0
      %1662 = vmatpush.bf16.msra.mxu0 0
      %1663 = vmatpush.bf16.msra.mxu0 0
      %1664 = vmatpush.bf16.msra.mxu0 0
      %1665 = vmatpush.bf16.msra.mxu0 0
      %1666 = vmatpush.bf16.msra.mxu0 0
      %1667 = vmatpush.bf16.msra.mxu0 0
      %1668 = vmatpush.bf16.msra.mxu0 %v1061
      %1669 = vmatpush.bf16.msra.mxu0 %v1060
      %1670 = vmatmul.bf16.gmra.mxu0 %v1660
      %v1671 = vpop.f32.mrf.mxu0
      %v1672 = vadd.f32 0.0, %v1671
      %v1673 = vpop.f32.mrf.mxu0
      %1674 = vdwg.mxu0
      %v1675 = vadd.f32 %v1654, %v1672
      %v1676 = vxor.u32 %v1675, 2147483648
      %v1677 = vmul.f32 %v1676, 1.442695
      %v1678 = vpow.pop %v1677
      %v1679 = vadd.f32 %v1678, 1.0
      %v1680 = vrcp.pop %v1679
      %v1681 = vmul.f32 %v1679, %v1680
      %v1682 = vsub.f32 1.0, %v1681
      %v1683 = vmul.f32 %v1680, %v1682
      %v1684 = vadd.f32 %v1680, %v1683
      %vm1685 = vweird.f32 %v1679
      %vm1686 = vweird.f32 %v1680
      %vm1687 = vmor %vm1685, %vm1686
      %v1688 = vsel %vm1687, %v1680, %v1684
      %v1689 = vand.u32 2147483647, %v1679
      %vm1690 = vcmp.eq.f32.partialorder %v1689, 8.507059e+37
      %v1691 = vand.u32 %v1679, 2147483648
      %v1692 = vor.u32 1.1754944e-38, %v1691
      %v1693 = vsel %vm1690, %v1692, %v1688
      %v1694 = vmul.f32 1.0, %v1693
      %v1695 = vtanh.pop %v1675
      %v1696 = vmul.f32 %v1694, %v1640
      %1698 = vrot.lane.b32.xlu0 %v1695, 64
      %v1699 = vpop.permute.xlu0 %1698
      %v1701 = vmul.f32 %v1694, %v1699
      %1703 = vrot.lane.b32.xlu0 %v1701, 32
      %v1704 = vpop.permute.xlu0 %1703
      %v1706 = vadd.f32 %v1696, %v1704
      %v1707 = vtanh.pop %v1706
      %1709 = vrot.lane.b32.xlu0 %v1707, 64
      %v1710 = vpop.permute.xlu0 %1709
      %v1712 = vmul.f32 %v1694, %v1710
      %1714 = vrot.lane.b32.xlu0 %v1712, 32
      %v1715 = vpop.permute.xlu0 %1714
      %1717 = vst.msk [vmem:[#allocation3 + $0x9] sm:$0x1] %vm1122, %v1715
      %v1718 = vld [vmem:[#allocation2 + $0x12] ss:$0 sm:$0xff]
      %v1719 = vld [vmem:[#allocation2 + $0xd] ss:$0 sm:$0xff]
      %v1720 = vadd.f32 %v1718, %v1719
      %v1721 = vpack.c.bf16 %v1712, %v1712
      %1723 = vrot.lane.b32.xlu0 %v1721, 32
      %v1724 = vpop.permute.xlu0 %1723
      %v1726 = vsel %vm1009, %v1724, 0
      %1728 = vmatpush.bf16.msra.mxu0 0
      %1729 = vmatpush.bf16.msra.mxu0 0
      %1730 = vmatpush.bf16.msra.mxu0 0
      %1731 = vmatpush.bf16.msra.mxu0 0
      %1732 = vmatpush.bf16.msra.mxu0 0
      %1733 = vmatpush.bf16.msra.mxu0 0
      %1734 = vmatpush.bf16.msra.mxu0 %v1061
      %1735 = vmatpush.bf16.msra.mxu0 %v1060
      %1736 = vmatmul.bf16.gmra.mxu0 %v1726
      %v1737 = vpop.f32.mrf.mxu0
      %v1738 = vadd.f32 0.0, %v1737
      %v1739 = vpop.f32.mrf.mxu0
      %1740 = vdwg.mxu0
      %v1741 = vadd.f32 %v1720, %v1738
      %v1742 = vxor.u32 %v1741, 2147483648
      %v1743 = vmul.f32 %v1742, 1.442695
      %v1744 = vpow.pop %v1743
      %v1745 = vadd.f32 %v1744, 1.0
      %v1746 = vrcp.pop %v1745
      %v1747 = vmul.f32 %v1745, %v1746
      %v1748 = vsub.f32 1.0, %v1747
      %v1749 = vmul.f32 %v1746, %v1748
      %v1750 = vadd.f32 %v1746, %v1749
      %vm1751 = vweird.f32 %v1745
      %vm1752 = vweird.f32 %v1746
      %vm1753 = vmor %vm1751, %vm1752
      %v1754 = vsel %vm1753, %v1746, %v1750
      %v1755 = vand.u32 2147483647, %v1745
      %vm1756 = vcmp.eq.f32.partialorder %v1755, 8.507059e+37
      %v1757 = vand.u32 %v1745, 2147483648
      %v1758 = vor.u32 1.1754944e-38, %v1757
      %v1759 = vsel %vm1756, %v1758, %v1754
      %v1760 = vmul.f32 1.0, %v1759
      %v1761 = vtanh.pop %v1741
      %v1762 = vmul.f32 %v1760, %v1706
      %1764 = vrot.lane.b32.xlu0 %v1761, 64
      %v1765 = vpop.permute.xlu0 %1764
      %v1767 = vmul.f32 %v1760, %v1765
      %1769 = vrot.lane.b32.xlu0 %v1767, 32
      %v1770 = vpop.permute.xlu0 %1769
      %v1772 = vadd.f32 %v1762, %v1770
      %v1773 = vtanh.pop %v1772
      %1775 = vrot.lane.b32.xlu0 %v1773, 64
      %v1776 = vpop.permute.xlu0 %1775
      %v1778 = vmul.f32 %v1760, %v1776
      %1780 = vrot.lane.b32.xlu0 %v1778, 32
      %v1781 = vpop.permute.xlu0 %1780
      %1783 = vst.msk [vmem:[#allocation3 + $0xa] sm:$0x1] %vm1122, %v1781
      %v1784 = vld [vmem:[#allocation2 + $0x13] ss:$0 sm:$0xff]
      %v1785 = vld [vmem:[#allocation2 + $0xc] ss:$0 sm:$0xff]
      %v1786 = vadd.f32 %v1784, %v1785
      %v1787 = vpack.c.bf16 %v1778, %v1778
      %1789 = vrot.lane.b32.xlu0 %v1787, 32
      %v1790 = vpop.permute.xlu0 %1789
      %v1792 = vsel %vm1009, %v1790, 0
      %1794 = vmatpush.bf16.msra.mxu0 0
      %1795 = vmatpush.bf16.msra.mxu0 0
      %1796 = vmatpush.bf16.msra.mxu0 0
      %1797 = vmatpush.bf16.msra.mxu0 0
      %1798 = vmatpush.bf16.msra.mxu0 0
      %1799 = vmatpush.bf16.msra.mxu0 0
      %1800 = vmatpush.bf16.msra.mxu0 %v1061
      %1801 = vmatpush.bf16.msra.mxu0 %v1060
      %1802 = vmatmul.bf16.gmra.mxu0 %v1792
      %v1803 = vpop.f32.mrf.mxu0
      %v1804 = vadd.f32 0.0, %v1803
      %v1805 = vpop.f32.mrf.mxu0
      %1806 = vdwg.mxu0
      %v1807 = vadd.f32 %v1786, %v1804
      %v1808 = vxor.u32 %v1807, 2147483648
      %v1809 = vmul.f32 %v1808, 1.442695
      %v1810 = vpow.pop %v1809
      %v1811 = vadd.f32 %v1810, 1.0
      %v1812 = vrcp.pop %v1811
      %v1813 = vmul.f32 %v1811, %v1812
      %v1814 = vsub.f32 1.0, %v1813
      %v1815 = vmul.f32 %v1812, %v1814
      %v1816 = vadd.f32 %v1812, %v1815
      %vm1817 = vweird.f32 %v1811
      %vm1818 = vweird.f32 %v1812
      %vm1819 = vmor %vm1817, %vm1818
      %v1820 = vsel %vm1819, %v1812, %v1816
      %v1821 = vand.u32 2147483647, %v1811
      %vm1822 = vcmp.eq.f32.partialorder %v1821, 8.507059e+37
      %v1823 = vand.u32 %v1811, 2147483648
      %v1824 = vor.u32 1.1754944e-38, %v1823
      %v1825 = vsel %vm1822, %v1824, %v1820
      %v1826 = vmul.f32 1.0, %v1825
      %v1827 = vtanh.pop %v1807
      %v1828 = vmul.f32 %v1826, %v1772
      %1830 = vrot.lane.b32.xlu0 %v1827, 64
      %v1831 = vpop.permute.xlu0 %1830
      %v1833 = vmul.f32 %v1826, %v1831
      %1835 = vrot.lane.b32.xlu0 %v1833, 32
      %v1836 = vpop.permute.xlu0 %1835
      %v1838 = vadd.f32 %v1828, %v1836
      %v1839 = vtanh.pop %v1838
      %1841 = vrot.lane.b32.xlu0 %v1839, 64
      %v1842 = vpop.permute.xlu0 %1841
      %v1844 = vmul.f32 %v1826, %v1842
      %1846 = vrot.lane.b32.xlu0 %v1844, 32
      %v1847 = vpop.permute.xlu0 %1846
      %1849 = vst.msk [vmem:[#allocation3 + $0xb] sm:$0x1] %vm1122, %v1847
      %v1850 = vld [vmem:[#allocation2 + $0x14] ss:$0 sm:$0xff]
      %v1851 = vld [vmem:[#allocation2 + $0xb] ss:$0 sm:$0xff]
      %v1852 = vadd.f32 %v1850, %v1851
      %v1853 = vpack.c.bf16 %v1844, %v1844
      %1855 = vrot.lane.b32.xlu0 %v1853, 32
      %v1856 = vpop.permute.xlu0 %1855
      %v1858 = vsel %vm1009, %v1856, 0
      %1860 = vmatpush.bf16.msra.mxu0 0
      %1861 = vmatpush.bf16.msra.mxu0 0
      %1862 = vmatpush.bf16.msra.mxu0 0
      %1863 = vmatpush.bf16.msra.mxu0 0
      %1864 = vmatpush.bf16.msra.mxu0 0
      %1865 = vmatpush.bf16.msra.mxu0 0
      %1866 = vmatpush.bf16.msra.mxu0 %v1061
      %1867 = vmatpush.bf16.msra.mxu0 %v1060
      %1868 = vmatmul.bf16.gmra.mxu0 %v1858
      %v1869 = vpop.f32.mrf.mxu0
      %v1870 = vadd.f32 0.0, %v1869
      %v1871 = vpop.f32.mrf.mxu0
      %1872 = vdwg.mxu0
      %v1873 = vadd.f32 %v1852, %v1870
      %v1874 = vxor.u32 %v1873, 2147483648
      %v1875 = vmul.f32 %v1874, 1.442695
      %v1876 = vpow.pop %v1875
      %v1877 = vadd.f32 %v1876, 1.0
      %v1878 = vrcp.pop %v1877
      %v1879 = vmul.f32 %v1877, %v1878
      %v1880 = vsub.f32 1.0, %v1879
      %v1881 = vmul.f32 %v1878, %v1880
      %v1882 = vadd.f32 %v1878, %v1881
      %vm1883 = vweird.f32 %v1877
      %vm1884 = vweird.f32 %v1878
      %vm1885 = vmor %vm1883, %vm1884
      %v1886 = vsel %vm1885, %v1878, %v1882
      %v1887 = vand.u32 2147483647, %v1877
      %vm1888 = vcmp.eq.f32.partialorder %v1887, 8.507059e+37
      %v1889 = vand.u32 %v1877, 2147483648
      %v1890 = vor.u32 1.1754944e-38, %v1889
      %v1891 = vsel %vm1888, %v1890, %v1886
      %v1892 = vmul.f32 1.0, %v1891
      %v1893 = vtanh.pop %v1873
      %v1894 = vmul.f32 %v1892, %v1838
      %1896 = vrot.lane.b32.xlu0 %v1893, 64
      %v1897 = vpop.permute.xlu0 %1896
      %v1899 = vmul.f32 %v1892, %v1897
      %1901 = vrot.lane.b32.xlu0 %v1899, 32
      %v1902 = vpop.permute.xlu0 %1901
      %v1904 = vadd.f32 %v1894, %v1902
      %v1905 = vtanh.pop %v1904
      %1907 = vrot.lane.b32.xlu0 %v1905, 64
      %v1908 = vpop.permute.xlu0 %1907
      %v1910 = vmul.f32 %v1892, %v1908
      %1912 = vrot.lane.b32.xlu0 %v1910, 32
      %v1913 = vpop.permute.xlu0 %1912
      %1915 = vst.msk [vmem:[#allocation3 + $0xc] sm:$0x1] %vm1122, %v1913
      %v1916 = vld [vmem:[#allocation2 + $0x15] ss:$0 sm:$0xff]
      %v1917 = vld [vmem:[#allocation2 + $0xa] ss:$0 sm:$0xff]
      %v1918 = vadd.f32 %v1916, %v1917
      %v1919 = vpack.c.bf16 %v1910, %v1910
      %1921 = vrot.lane.b32.xlu0 %v1919, 32
      %v1922 = vpop.permute.xlu0 %1921
      %v1924 = vsel %vm1009, %v1922, 0
      %1926 = vmatpush.bf16.msra.mxu0 0
      %1927 = vmatpush.bf16.msra.mxu0 0
      %1928 = vmatpush.bf16.msra.mxu0 0
      %1929 = vmatpush.bf16.msra.mxu0 0
      %1930 = vmatpush.bf16.msra.mxu0 0
      %1931 = vmatpush.bf16.msra.mxu0 0
      %1932 = vmatpush.bf16.msra.mxu0 %v1061
      %1933 = vmatpush.bf16.msra.mxu0 %v1060
      %1934 = vmatmul.bf16.gmra.mxu0 %v1924
      %v1935 = vpop.f32.mrf.mxu0
      %v1936 = vadd.f32 0.0, %v1935
      %v1937 = vpop.f32.mrf.mxu0
      %1938 = vdwg.mxu0
      %v1939 = vadd.f32 %v1918, %v1936
      %v1940 = vxor.u32 %v1939, 2147483648
      %v1941 = vmul.f32 %v1940, 1.442695
      %v1942 = vpow.pop %v1941
      %v1943 = vadd.f32 %v1942, 1.0
      %v1944 = vrcp.pop %v1943
      %v1945 = vmul.f32 %v1943, %v1944
      %v1946 = vsub.f32 1.0, %v1945
      %v1947 = vmul.f32 %v1944, %v1946
      %v1948 = vadd.f32 %v1944, %v1947
      %vm1949 = vweird.f32 %v1943
      %vm1950 = vweird.f32 %v1944
      %vm1951 = vmor %vm1949, %vm1950
      %v1952 = vsel %vm1951, %v1944, %v1948
      %v1953 = vand.u32 2147483647, %v1943
      %vm1954 = vcmp.eq.f32.partialorder %v1953, 8.507059e+37
      %v1955 = vand.u32 %v1943, 2147483648
      %v1956 = vor.u32 1.1754944e-38, %v1955
      %v1957 = vsel %vm1954, %v1956, %v1952
      %v1958 = vmul.f32 1.0, %v1957
      %v1959 = vtanh.pop %v1939
      %v1960 = vmul.f32 %v1958, %v1904
      %1962 = vrot.lane.b32.xlu0 %v1959, 64
      %v1963 = vpop.permute.xlu0 %1962
      %v1965 = vmul.f32 %v1958, %v1963
      %1967 = vrot.lane.b32.xlu0 %v1965, 32
      %v1968 = vpop.permute.xlu0 %1967
      %v1970 = vadd.f32 %v1960, %v1968
      %v1971 = vtanh.pop %v1970
      %1973 = vrot.lane.b32.xlu0 %v1971, 64
      %v1974 = vpop.permute.xlu0 %1973
      %v1976 = vmul.f32 %v1958, %v1974
      %1978 = vrot.lane.b32.xlu0 %v1976, 32
      %v1979 = vpop.permute.xlu0 %1978
      %1981 = vst.msk [vmem:[#allocation3 + $0xd] sm:$0x1] %vm1122, %v1979
      %v1982 = vld [vmem:[#allocation2 + $0x16] ss:$0 sm:$0xff]
      %v1983 = vld [vmem:[#allocation2 + $0x9] ss:$0 sm:$0xff]
      %v1984 = vadd.f32 %v1982, %v1983
      %v1985 = vpack.c.bf16 %v1976, %v1976
      %1987 = vrot.lane.b32.xlu0 %v1985, 32
      %v1988 = vpop.permute.xlu0 %1987
      %v1990 = vsel %vm1009, %v1988, 0
      %1992 = vmatpush.bf16.msra.mxu0 0
      %1993 = vmatpush.bf16.msra.mxu0 0
      %1994 = vmatpush.bf16.msra.mxu0 0
      %1995 = vmatpush.bf16.msra.mxu0 0
      %1996 = vmatpush.bf16.msra.mxu0 0
      %1997 = vmatpush.bf16.msra.mxu0 0
      %1998 = vmatpush.bf16.msra.mxu0 %v1061
      %1999 = vmatpush.bf16.msra.mxu0 %v1060
      %2000 = vmatmul.bf16.gmra.mxu0 %v1990
      %v2001 = vpop.f32.mrf.mxu0
      %v2002 = vadd.f32 0.0, %v2001
      %v2003 = vpop.f32.mrf.mxu0
      %2004 = vdwg.mxu0
      %v2005 = vadd.f32 %v1984, %v2002
      %v2006 = vxor.u32 %v2005, 2147483648
      %v2007 = vmul.f32 %v2006, 1.442695
      %v2008 = vpow.pop %v2007
      %v2009 = vadd.f32 %v2008, 1.0
      %v2010 = vrcp.pop %v2009
      %v2011 = vmul.f32 %v2009, %v2010
      %v2012 = vsub.f32 1.0, %v2011
      %v2013 = vmul.f32 %v2010, %v2012
      %v2014 = vadd.f32 %v2010, %v2013
      %vm2015 = vweird.f32 %v2009
      %vm2016 = vweird.f32 %v2010
      %vm2017 = vmor %vm2015, %vm2016
      %v2018 = vsel %vm2017, %v2010, %v2014
      %v2019 = vand.u32 2147483647, %v2009
      %vm2020 = vcmp.eq.f32.partialorder %v2019, 8.507059e+37
      %v2021 = vand.u32 %v2009, 2147483648
      %v2022 = vor.u32 1.1754944e-38, %v2021
      %v2023 = vsel %vm2020, %v2022, %v2018
      %v2024 = vmul.f32 1.0, %v2023
      %v2025 = vtanh.pop %v2005
      %v2026 = vmul.f32 %v2024, %v1970
      %2028 = vrot.lane.b32.xlu0 %v2025, 64
      %v2029 = vpop.permute.xlu0 %2028
      %v2031 = vmul.f32 %v2024, %v2029
      %2033 = vrot.lane.b32.xlu0 %v2031, 32
      %v2034 = vpop.permute.xlu0 %2033
      %v2036 = vadd.f32 %v2026, %v2034
      %v2037 = vtanh.pop %v2036
      %2039 = vrot.lane.b32.xlu0 %v2037, 64
      %v2040 = vpop.permute.xlu0 %2039
      %v2042 = vmul.f32 %v2024, %v2040
      %2044 = vrot.lane.b32.xlu0 %v2042, 32
      %v2045 = vpop.permute.xlu0 %2044
      %2047 = vst.msk [vmem:[#allocation3 + $0xe] sm:$0x1] %vm1122, %v2045
      %v2048 = vld [vmem:[#allocation2 + $0x17] ss:$0 sm:$0xff]
      %v2049 = vld [vmem:[#allocation2 + $0x8] ss:$0 sm:$0xff]
      %v2050 = vadd.f32 %v2048, %v2049
      %v2051 = vpack.c.bf16 %v2042, %v2042
      %2053 = vrot.lane.b32.xlu0 %v2051, 32
      %v2054 = vpop.permute.xlu0 %2053
      %v2056 = vsel %vm1009, %v2054, 0
      %2058 = vmatpush.bf16.msra.mxu0 0
      %2059 = vmatpush.bf16.msra.mxu0 0
      %2060 = vmatpush.bf16.msra.mxu0 0
      %2061 = vmatpush.bf16.msra.mxu0 0
      %2062 = vmatpush.bf16.msra.mxu0 0
      %2063 = vmatpush.bf16.msra.mxu0 0
      %2064 = vmatpush.bf16.msra.mxu0 %v1061
      %2065 = vmatpush.bf16.msra.mxu0 %v1060
      %2066 = vmatmul.bf16.gmra.mxu0 %v2056
      %v2067 = vpop.f32.mrf.mxu0
      %v2068 = vadd.f32 0.0, %v2067
      %v2069 = vpop.f32.mrf.mxu0
      %2070 = vdwg.mxu0
      %v2071 = vadd.f32 %v2050, %v2068
      %v2072 = vxor.u32 %v2071, 2147483648
      %v2073 = vmul.f32 %v2072, 1.442695
      %v2074 = vpow.pop %v2073
      %v2075 = vadd.f32 %v2074, 1.0
      %v2076 = vrcp.pop %v2075
      %v2077 = vmul.f32 %v2075, %v2076
      %v2078 = vsub.f32 1.0, %v2077
      %v2079 = vmul.f32 %v2076, %v2078
      %v2080 = vadd.f32 %v2076, %v2079
      %vm2081 = vweird.f32 %v2075
      %vm2082 = vweird.f32 %v2076
      %vm2083 = vmor %vm2081, %vm2082
      %v2084 = vsel %vm2083, %v2076, %v2080
      %v2085 = vand.u32 2147483647, %v2075
      %vm2086 = vcmp.eq.f32.partialorder %v2085, 8.507059e+37
      %v2087 = vand.u32 %v2075, 2147483648
      %v2088 = vor.u32 1.1754944e-38, %v2087
      %v2089 = vsel %vm2086, %v2088, %v2084
      %v2090 = vmul.f32 1.0, %v2089
      %v2091 = vtanh.pop %v2071
      %v2092 = vmul.f32 %v2090, %v2036
      %2094 = vrot.lane.b32.xlu0 %v2091, 64
      %v2095 = vpop.permute.xlu0 %2094
      %v2097 = vmul.f32 %v2090, %v2095
      %2099 = vrot.lane.b32.xlu0 %v2097, 32
      %v2100 = vpop.permute.xlu0 %2099
      %v2102 = vadd.f32 %v2092, %v2100
      %v2103 = vtanh.pop %v2102
      %2105 = vrot.lane.b32.xlu0 %v2103, 64
      %v2106 = vpop.permute.xlu0 %2105
      %v2108 = vmul.f32 %v2090, %v2106
      %2110 = vrot.lane.b32.xlu0 %v2108, 32
      %v2111 = vpop.permute.xlu0 %2110
      %2113 = vst.msk [vmem:[#allocation3 + $0xf] sm:$0x1] %vm1122, %v2111
      %v2114 = vld [vmem:[#allocation3] sm:$0xff]
      %v2115 = vld [vmem:[#allocation3 + $0x8] sm:$0xff]
      %vm2116 = vcmask 130048
      %2117 = vst.msk [vmem:[#allocation4 + $0x1] sm:$0xff] %vm2116, %v2114
      %2118 = vst.msk [vmem:[#allocation4 + $0x9] sm:$0xff] %vm2116, %v2115
      %v2119 = vld [vmem:[%s9] sm:$0xf]
      %v2120 = vld [vmem:[%s9 + $0x4] sm:$0xf]
      %v2121 = vld [vmem:[#allocation3] sm:$0xff]
      %v2122 = vld [vmem:[#allocation3 + $0x8] sm:$0xff]
      %v2123 = vpack.c.bf16 %v2122, %v2121
      %v2126 = vunpack.c.l.b16 %v2119
      %v2127 = vunpack.c.l.b16 %v2120
      %v2128 = vpack.c.b16 %v2127, %v2126
      %2130 = vrot.lane.b32.xlu0 %v2123, 112
      %v2131 = vpop.permute.xlu0 %2130
      %v2134 = vsel %vm2116, %v2128, 0
      %2136 = vmatpush.bf16.msra.mxu0 0
      %2137 = vmatpush.bf16.msra.mxu0 0
      %2138 = vmatpush.bf16.msra.mxu0 0
      %2139 = vmatpush.bf16.msra.mxu0 0
      %2140 = vmatpush.bf16.msra.mxu0 0
      %2141 = vmatpush.bf16.msra.mxu0 0
      %2142 = vmatpush.bf16.msra.mxu0 0
      %2143 = vmatpush.bf16.msra.mxu0 %v2131
      %2144 = vmatmul.bf16.gmra.mxu0 %v2134
      %v2145 = vpop.f32.mrf.mxu0
      %v2146 = vadd.f32 0.0, %v2145
      %v2147 = vpop.f32.mrf.mxu0
      %v2148 = vadd.f32 0.0, %v2147
      %2149 = vdwg.mxu0
      %2152 = vrot.lane.b32.xlu0 %v2146, 16
      %v2153 = vpop.permute.xlu0 %2152
      %2154 = vrot.lane.b32.xlu0 %v2148, 16
      %v2155 = vpop.permute.xlu0 %2154
      %vm2158 = vcmask 261248
      %2159 = vst.msk [vmem:[#allocation4 + $0x1] sm:$0xff] %vm2158, %v2153
      %2160 = vst.msk [vmem:[#allocation4 + $0x9] sm:$0xff] %vm2158, %v2155
      %v2161 = vld [vmem:[#allocation4] sm:$0xff]
      %v2162 = vld [vmem:[#allocation4 + $0x8] sm:$0xff]
      %v2163 = vpack.c.bf16 %v2162, %v2161
      %v2164 = vld [vmem:[#allocation4 + $0x1] sm:$0xff]
      %v2165 = vld [vmem:[#allocation4 + $0x9] sm:$0xff]
      %v2166 = vpack.c.bf16 %v2165, %v2164
      %v2167 = vld [vmem:[#allocation4 + $0x2] sm:$0xff]
      %v2168 = vld [vmem:[#allocation4 + $0xa] sm:$0xff]
      %v2169 = vpack.c.bf16 %v2168, %v2167
      %v2170 = vld [vmem:[%s11] sm:$0xf]
      %v2171 = vld [vmem:[%s11 + $0x4] sm:$0xf]
      %v2172 = vld [vmem:[%s11 + $0x8] sm:$0xf]
      %v2173 = vld [vmem:[%s11 + $0xc] sm:$0xf]
      %v2174 = vld [vmem:[%s11 + $0x10] sm:$0xf]
      %v2175 = vld [vmem:[%s11 + $0x14] sm:$0xf]
      %v2176 = vld [vmem:[%s11 + $0x18] sm:$0xf]
      %v2177 = vld [vmem:[%s11 + $0x1c] sm:$0xf]
      %v2182 = vunpack.c.l.b16 %v2174
      %v2183 = vunpack.c.l.b16 %v2175
      %v2184 = vunpack.c.l.b16 %v2176
      %v2185 = vunpack.c.l.b16 %v2177
      %v2186 = vpack.c.b16 %v2183, %v2182
      %v2187 = vpack.c.b16 %v2185, %v2184
      %v2191 = vsel %vm1009, %v2166, 0
      %2193 = vmatpush.bf16.msra.mxu0 0
      %2194 = vmatpush.bf16.msra.mxu0 0
      %2195 = vmatpush.bf16.msra.mxu0 0
      %2196 = vmatpush.bf16.msra.mxu0 0
      %2197 = vmatpush.bf16.msra.mxu0 0
      %2198 = vmatpush.bf16.msra.mxu0 0
      %2199 = vmatpush.bf16.msra.mxu0 %v2187
      %2200 = vmatpush.bf16.msra.mxu0 %v2186
      %2201 = vmatmul.bf16.gmra.mxu0 %v2191
      %v2202 = vpop.f32.mrf.mxu0
      %v2203 = vadd.f32 0.0, %v2202
      %v2204 = vpop.f32.mrf.mxu0
      %v2205 = vadd.f32 0.0, %v2204
      %2206 = vdwg.mxu0
      %v2211 = vunpack.c.l.b16 %v2170
      %v2212 = vunpack.c.l.b16 %v2171
      %v2213 = vunpack.c.l.b16 %v2172
      %v2214 = vunpack.c.l.b16 %v2173
      %v2215 = vpack.c.b16 %v2212, %v2211
      %v2216 = vpack.c.b16 %v2214, %v2213
      %v2220 = vsel %vm1009, %v2163, 0
      %2222 = vmatpush.bf16.msra.mxu0 0
      %2223 = vmatpush.bf16.msra.mxu0 0
      %2224 = vmatpush.bf16.msra.mxu0 0
      %2225 = vmatpush.bf16.msra.mxu0 0
      %2226 = vmatpush.bf16.msra.mxu0 0
      %2227 = vmatpush.bf16.msra.mxu0 0
      %2228 = vmatpush.bf16.msra.mxu0 %v2216
      %2229 = vmatpush.bf16.msra.mxu0 %v2215
      %2230 = vmatmul.bf16.gmra.mxu0 %v2220
      %v2231 = vpop.f32.mrf.mxu0
      %v2232 = vadd.f32 %v2203, %v2231
      %v2233 = vpop.f32.mrf.mxu0
      %v2234 = vadd.f32 %v2205, %v2233
      %2235 = vdwg.mxu0
      %v2236 = vld [vmem:[%s11 + $0x20] sm:$0xf]
      %v2237 = vld [vmem:[%s11 + $0x24] sm:$0xf]
      %v2238 = vld [vmem:[%s11 + $0x28] sm:$0xf]
      %v2239 = vld [vmem:[%s11 + $0x2c] sm:$0xf]
      %v2244 = vunpack.c.l.b16 %v2236
      %v2245 = vunpack.c.l.b16 %v2237
      %v2246 = vunpack.c.l.b16 %v2238
      %v2247 = vunpack.c.l.b16 %v2239
      %v2248 = vpack.c.b16 %v2245, %v2244
      %v2249 = vpack.c.b16 %v2247, %v2246
      %v2253 = vsel %vm1009, %v2169, 0
      %2255 = vmatpush.bf16.msra.mxu0 0
      %2256 = vmatpush.bf16.msra.mxu0 0
      %2257 = vmatpush.bf16.msra.mxu0 0
      %2258 = vmatpush.bf16.msra.mxu0 0
      %2259 = vmatpush.bf16.msra.mxu0 0
      %2260 = vmatpush.bf16.msra.mxu0 0
      %2261 = vmatpush.bf16.msra.mxu0 %v2249
      %2262 = vmatpush.bf16.msra.mxu0 %v2248
      %2263 = vmatmul.bf16.gmra.mxu0 %v2253
      %v2264 = vpop.f32.mrf.mxu0
      %v2265 = vadd.f32 0.0, %v2264
      %v2266 = vpop.f32.mrf.mxu0
      %v2267 = vadd.f32 0.0, %v2266
      %2268 = vdwg.mxu0
      %v2269 = vadd.f32 %v2232, %v2265
      %v2270 = vadd.f32 %v2234, %v2267
      %v2271 = vld [vmem:[%s13] sm:$0x1]
      %v2273 = vperm.slane %v2271, 0
      %v2275 = vadd.f32 %v2269, %v2273
      %v2276 = vadd.f32 %v2270, %v2273
      %v2277 = vld [vmem:[%s19] sm:$0xff]
      %v2278 = vld [vmem:[%s19 + $0x8] sm:$0xff]
      %v2279 = vld [vmem:[%s19 + $0x10] sm:$0xff]
      %v2280 = vld [vmem:[%s19 + $0x18] sm:$0xff]
      %v2281 = vld [vmem:[%s21] sm:$0xf]
      %v2282 = vsel %vm1009, %v2275, 0.0
      %v2283 = vsel %vm1009, %v2276, 0.0
      %v2284 = vadd.f32 %v2282, %v2283
      %v2285 = vrot.slane %v2284, 4
      %v2286 = vadd.f32 %v2284, %v2285
      %v2287 = vrot.slane %v2286, 2
      %v2288 = vadd.f32 %v2286, %v2287
      %v2289 = vrot.slane %v2288, 1
      %v2290 = vadd.f32 %v2288, %v2289
      %v2292 = vsel %vm1009, %v2290, 0
      %2294 = vmatpush.msra.mxu0 0.0
      %2295 = vmatpush.msra.mxu0 0.0
      %2296 = vmatpush.msra.mxu0 0.0
      %2297 = vmatpush.msra.mxu0 0.0
      %2298 = vmatpush.msra.mxu0 0.0
      %2299 = vmatpush.msra.mxu0 0.0
      %2300 = vmatpush.msra.mxu0 0.0
      %2301 = vmatpush.msra.mxu0 0.0
      %2302 = vmatpush.msra.mxu0 0.0
      %2303 = vmatpush.msra.mxu0 0.0
      %2304 = vmatpush.msra.mxu0 0.0
      %2305 = vmatpush.msra.mxu0 0.0
      %2306 = vmatpush.msra.mxu0 %v2280
      %2307 = vmatpush.msra.mxu0 %v2279
      %2308 = vmatpush.msra.mxu0 %v2278
      %2309 = vmatpush.msra.mxu0 %v2277
      %2310 = vmatmul.f32.gmra.mxu0 %v2292
      %v2311 = vpop.f32.mrf.mxu0
      %v2312 = vadd.f32 0.0, %v2311
      %2313 = vdwg.mxu0
      %v2314 = vrcp.pop 128.0
      %v2315 = vmul.f32 128.0, %v2314
      %v2316 = vsub.f32 1.0, %v2315
      %v2317 = vmul.f32 %v2314, %v2316
      %v2318 = vadd.f32 %v2314, %v2317
      %vm2319 = vweird.f32 %v2314
      %v2320 = vsel %vm2319, %v2314, %v2318
      %v2321 = vmul.f32 %v2312, %v2320
      %vm2322 = vcmask 31744
      %v2324 = vsel %vm2322, %v2321, 0
      %vm2326 = vcmask 1043456
      %v2328 = vsel %vm2326, %v2281, 0
      %2330 = vmatpush.msra.mxu0 0.0
      %2331 = vmatpush.msra.mxu0 0.0
      %2332 = vmatpush.msra.mxu0 0.0
      %2333 = vmatpush.msra.mxu0 0.0
      %2334 = vmatpush.msra.mxu0 0.0
      %2335 = vmatpush.msra.mxu0 0.0
      %2336 = vmatpush.msra.mxu0 0.0
      %2337 = vmatpush.msra.mxu0 0.0
      %2338 = vmatpush.msra.mxu0 0.0
      %2339 = vmatpush.msra.mxu0 0.0
      %2340 = vmatpush.msra.mxu0 0.0
      %2341 = vmatpush.msra.mxu0 0.0
      %2342 = vmatpush.msra.mxu0 0.0
      %2343 = vmatpush.msra.mxu0 0.0
      %2344 = vmatpush.msra.mxu0 0.0
      %2345 = vmatpush.msra.mxu0 %v2328
      %2346 = vmatmul.f32.gmra.mxu0 %v2324
      %v2347 = vpop.f32.mrf.mxu0
      %v2348 = vadd.f32 0.0, %v2347
      %2349 = vdwg.mxu0
      %v2350 = vperm.slane %v2348, 0
      %v2351 = vsub.f32 %v2275, %v2350
      %v2352 = vsub.f32 %v2276, %v2350
      %v2353 = vmul.f32 %v2351, %v2351
      %v2354 = vmul.f32 %v2352, %v2352
      %v2355 = vsel %vm1009, %v2353, 0.0
      %v2356 = vsel %vm1009, %v2354, 0.0
      %v2357 = vadd.f32 %v2355, %v2356
      %v2358 = vrot.slane %v2357, 4
      %v2359 = vadd.f32 %v2357, %v2358
      %v2360 = vrot.slane %v2359, 2
      %v2361 = vadd.f32 %v2359, %v2360
      %v2362 = vrot.slane %v2361, 1
      %v2363 = vadd.f32 %v2361, %v2362
      %v2365 = vsel %vm1009, %v2363, 0
      %2367 = vmatpush.msra.mxu0 0.0
      %2368 = vmatpush.msra.mxu0 0.0
      %2369 = vmatpush.msra.mxu0 0.0
      %2370 = vmatpush.msra.mxu0 0.0
      %2371 = vmatpush.msra.mxu0 0.0
      %2372 = vmatpush.msra.mxu0 0.0
      %2373 = vmatpush.msra.mxu0 0.0
      %2374 = vmatpush.msra.mxu0 0.0
      %2375 = vmatpush.msra.mxu0 0.0
      %2376 = vmatpush.msra.mxu0 0.0
      %2377 = vmatpush.msra.mxu0 0.0
      %2378 = vmatpush.msra.mxu0 0.0
      %2379 = vmatpush.msra.mxu0 %v2280
      %2380 = vmatpush.msra.mxu0 %v2279
      %2381 = vmatpush.msra.mxu0 %v2278
      %2382 = vmatpush.msra.mxu0 %v2277
      %2383 = vmatmul.f32.gmra.mxu0 %v2365
      %v2384 = vpop.f32.mrf.mxu0
      %v2385 = vadd.f32 0.0, %v2384
      %2386 = vdwg.mxu0
      %v2387 = vmul.f32 %v2385, %v2320
      %v2388 = vadd.f32 %v2387, 1e-05
      %v2389 = vrsqrt.pop %v2388
      %v2390 = vmul.f32 %v2389, %v2388
      %v2391 = vmul.f32 %v2390, %v2389
      %v2392 = vmul.f32 0.5, %v2391
      %v2393 = vsub.f32 1.5, %v2392
      %v2394 = vmul.f32 %v2389, %v2393
      %vm2395 = vweird.f32 %v2388
      %vm2396 = vweird.f32 %v2389
      %vm2397 = vmor %vm2395, %vm2396
      %v2398 = vsel %vm2397, %v2389, %v2394
      %v2400 = vsel %vm2322, %v2398, 0
      %2402 = vmatpush.msra.mxu0 0.0
      %2403 = vmatpush.msra.mxu0 0.0
      %2404 = vmatpush.msra.mxu0 0.0
      %2405 = vmatpush.msra.mxu0 0.0
      %2406 = vmatpush.msra.mxu0 0.0
      %2407 = vmatpush.msra.mxu0 0.0
      %2408 = vmatpush.msra.mxu0 0.0
      %2409 = vmatpush.msra.mxu0 0.0
      %2410 = vmatpush.msra.mxu0 0.0
      %2411 = vmatpush.msra.mxu0 0.0
      %2412 = vmatpush.msra.mxu0 0.0
      %2413 = vmatpush.msra.mxu0 0.0
      %2414 = vmatpush.msra.mxu0 0.0
      %2415 = vmatpush.msra.mxu0 0.0
      %2416 = vmatpush.msra.mxu0 0.0
      %2417 = vmatpush.msra.mxu0 %v2328
      %2418 = vmatmul.f32.gmra.mxu0 %v2400
      %v2419 = vpop.f32.mrf.mxu0
      %v2420 = vadd.f32 0.0, %v2419
      %2421 = vdwg.mxu0
      %v2422 = vperm.slane %v2420, 0
      %v2423 = vmul.f32 %v2351, %v2422
      %v2424 = vmul.f32 %v2352, %v2422
      %v2425 = vld [vmem:[%s15] sm:$0x1]
      %v2427 = vperm.slane %v2425, 0
      %v2429 = vmul.f32 %v2423, %v2427
      %v2430 = vmul.f32 %v2424, %v2427
      %v2431 = vld [vmem:[%s17] sm:$0x1]
      %v2433 = vperm.slane %v2431, 0
      %v2435 = vadd.f32 %v2429, %v2433
      %v2436 = vadd.f32 %v2430, %v2433
      %v2437 = vmax.f32 %v2435, 0.0
      %v2438 = vmax.f32 %v2436, 0.0
      %v2439 = vpack.c.bf16 %v2437, %v2437
      %v2440 = vpack.c.bf16 %v2438, %v2438
      %v2441 = vld [vmem:[%s23] sm:$0xf]
      %v2442 = vld [vmem:[%s23 + $0x4] sm:$0xf]
      %v2443 = vld [vmem:[%s23 + $0x8] sm:$0xf]
      %v2444 = vld [vmem:[%s23 + $0xc] sm:$0xf]
      %v2445 = vld [vmem:[%s25] sm:$0xf]
      %v2446 = vld [vmem:[%s25 + $0x4] sm:$0xf]
      %v2447 = vld [vmem:[%s25 + $0x8] sm:$0xf]
      %v2448 = vld [vmem:[%s25 + $0xc] sm:$0xf]
      %v2453 = vunpack.c.l.b16 %v2445
      %v2454 = vunpack.c.l.b16 %v2446
      %v2455 = vunpack.c.l.b16 %v2447
      %v2456 = vunpack.c.l.b16 %v2448
      %v2457 = vpack.c.b16 %v2454, %v2453
      %v2458 = vpack.c.b16 %v2456, %v2455
      %v2461 = vunpack.c.l.b16 %v2439
      %v2462 = vunpack.c.l.b16 %v2440
      %v2463 = vpack.c.b16 %v2462, %v2461
      %2464 = vrot.lane.b32.xlu0 %v2463, 112
      %v2465 = vpop.permute.xlu0 %2464
      %v2468 = vsel %vm2116, %v2457, 0
      %v2471 = vsel %vm2116, %v2458, 0
      %2473 = vmatpush.bf16.msra.mxu0 0
      %2474 = vmatpush.bf16.msra.mxu0 0
      %2475 = vmatpush.bf16.msra.mxu0 0
      %2476 = vmatpush.bf16.msra.mxu0 0
      %2477 = vmatpush.bf16.msra.mxu0 0
      %2478 = vmatpush.bf16.msra.mxu0 0
      %2479 = vmatpush.bf16.msra.mxu0 0
      %2480 = vmatpush.bf16.msra.mxu0 %v2465
      %2481 = vmatmul.bf16.gmra.mxu0 %v2468
      %v2482 = vpop.f32.mrf.mxu0
      %v2483 = vadd.f32 0.0, %v2482
      %v2484 = vpop.f32.mrf.mxu0
      %v2485 = vadd.f32 0.0, %v2484
      %2486 = vmatmul.bf16.gmra.mxu0 %v2471
      %v2487 = vpop.f32.mrf.mxu0
      %v2488 = vadd.f32 0.0, %v2487
      %v2489 = vpop.f32.mrf.mxu0
      %v2490 = vadd.f32 0.0, %v2489
      %2491 = vdwg.mxu0
      %v2496 = vunpack.c.l.b16 %v2441
      %v2497 = vunpack.c.l.b16 %v2442
      %v2498 = vunpack.c.l.b16 %v2443
      %v2499 = vunpack.c.l.b16 %v2444
      %v2500 = vpack.c.b16 %v2497, %v2496
      %v2501 = vpack.c.b16 %v2499, %v2498
      %v2504 = vsel %vm2116, %v2500, 0
      %v2507 = vsel %vm2116, %v2501, 0
      %2509 = vmatpush.bf16.msra.mxu0 0
      %2510 = vmatpush.bf16.msra.mxu0 0
      %2511 = vmatpush.bf16.msra.mxu0 0
      %2512 = vmatpush.bf16.msra.mxu0 0
      %2513 = vmatpush.bf16.msra.mxu0 0
      %2514 = vmatpush.bf16.msra.mxu0 0
      %2515 = vmatpush.bf16.msra.mxu0 0
      %2516 = vmatpush.bf16.msra.mxu0 %v2463
      %2517 = vmatmul.bf16.gmra.mxu0 %v2504
      %v2518 = vpop.f32.mrf.mxu0
      %v2519 = vadd.f32 %v2483, %v2518
      %v2520 = vpop.f32.mrf.mxu0
      %v2521 = vadd.f32 %v2485, %v2520
      %2522 = vmatmul.bf16.gmra.mxu0 %v2507
      %v2523 = vpop.f32.mrf.mxu0
      %v2524 = vadd.f32 %v2488, %v2523
      %v2525 = vpop.f32.mrf.mxu0
      %v2526 = vadd.f32 %v2490, %v2525
      %2527 = vdwg.mxu0
      %2528 = vst.msk [vmem:[#allocation4 + $0x1] sm:$0xff] %vm2116, %v2519
      %2529 = vst.msk [vmem:[#allocation4 + $0x9] sm:$0xff] %vm2116, %v2521
      %2530 = vst.msk [vmem:[#allocation4 + $0x11] sm:$0xff] %vm2116, %v2524
      %2531 = vst.msk [vmem:[#allocation4 + $0x19] sm:$0xff] %vm2116, %v2526
      %v2532 = vld [vmem:[#allocation4] sm:$0xff]
      %v2533 = vld [vmem:[#allocation4 + $0x8] sm:$0xff]
      %v2534 = vld [vmem:[#allocation4 + $0x10] sm:$0xff]
      %v2535 = vld [vmem:[#allocation4 + $0x18] sm:$0xff]
      %v2536 = vpack.c.bf16 %v2533, %v2532
      %v2537 = vpack.c.bf16 %v2535, %v2534
      %v2538 = vld [vmem:[#allocation4 + $0x1] sm:$0xff]
      %v2539 = vld [vmem:[#allocation4 + $0x9] sm:$0xff]
      %v2540 = vld [vmem:[#allocation4 + $0x11] sm:$0xff]
      %v2541 = vld [vmem:[#allocation4 + $0x19] sm:$0xff]
      %v2542 = vpack.c.bf16 %v2539, %v2538
      %v2543 = vpack.c.bf16 %v2541, %v2540
      %v2544 = vld [vmem:[#allocation4 + $0x2] sm:$0xff]
      %v2545 = vld [vmem:[#allocation4 + $0xa] sm:$0xff]
      %v2546 = vld [vmem:[#allocation4 + $0x12] sm:$0xff]
      %v2547 = vld [vmem:[#allocation4 + $0x1a] sm:$0xff]
      %v2548 = vpack.c.bf16 %v2545, %v2544
      %v2549 = vpack.c.bf16 %v2547, %v2546
      %v2550 = vld [vmem:[%s27] sm:$0xf]
      %v2551 = vld [vmem:[%s27 + $0x4] sm:$0xf]
      %v2552 = vld [vmem:[%s27 + $0x8] sm:$0xf]
      %v2553 = vld [vmem:[%s27 + $0xc] sm:$0xf]
      %v2556 = vunpack.c.l.b16 %v2552
      %v2557 = vunpack.c.l.b16 %v2553
      %v2558 = vpack.c.b16 %v2557, %v2556
      %v2561 = vsel %vm2116, %v2542, 0
      %v2564 = vsel %vm2116, %v2543, 0
      %2566 = vmatpush.bf16.msra.mxu0 0
      %2567 = vmatpush.bf16.msra.mxu0 0
      %2568 = vmatpush.bf16.msra.mxu0 0
      %2569 = vmatpush.bf16.msra.mxu0 0
      %2570 = vmatpush.bf16.msra.mxu0 0
      %2571 = vmatpush.bf16.msra.mxu0 0
      %2572 = vmatpush.bf16.msra.mxu0 0
      %2573 = vmatpush.bf16.msra.mxu0 %v2558
      %2574 = vmatmul.bf16.gmra.mxu0 %v2561
      %v2575 = vpop.f32.mrf.mxu0
      %v2576 = vadd.f32 0.0, %v2575
      %v2577 = vpop.f32.mrf.mxu0
      %v2578 = vadd.f32 0.0, %v2577
      %2579 = vmatmul.bf16.gmra.mxu0 %v2564
      %v2580 = vpop.f32.mrf.mxu0
      %v2581 = vadd.f32 0.0, %v2580
      %v2582 = vpop.f32.mrf.mxu0
      %v2583 = vadd.f32 0.0, %v2582
      %2584 = vdwg.mxu0
      %v2587 = vunpack.c.l.b16 %v2550
      %v2588 = vunpack.c.l.b16 %v2551
      %v2589 = vpack.c.b16 %v2588, %v2587
      %v2592 = vsel %vm2116, %v2536, 0
      %v2595 = vsel %vm2116, %v2537, 0
      %2597 = vmatpush.bf16.msra.mxu0 0
      %2598 = vmatpush.bf16.msra.mxu0 0
      %2599 = vmatpush.bf16.msra.mxu0 0
      %2600 = vmatpush.bf16.msra.mxu0 0
      %2601 = vmatpush.bf16.msra.mxu0 0
      %2602 = vmatpush.bf16.msra.mxu0 0
      %2603 = vmatpush.bf16.msra.mxu0 0
      %2604 = vmatpush.bf16.msra.mxu0 %v2589
      %2605 = vmatmul.bf16.gmra.mxu0 %v2592
      %v2606 = vpop.f32.mrf.mxu0
      %v2607 = vadd.f32 %v2576, %v2606
      %v2608 = vpop.f32.mrf.mxu0
      %v2609 = vadd.f32 %v2578, %v2608
      %2610 = vmatmul.bf16.gmra.mxu0 %v2595
      %v2611 = vpop.f32.mrf.mxu0
      %v2612 = vadd.f32 %v2581, %v2611
      %v2613 = vpop.f32.mrf.mxu0
      %v2614 = vadd.f32 %v2583, %v2613
      %2615 = vdwg.mxu0
      %v2616 = vld [vmem:[%s27 + $0x10] sm:$0xf]
      %v2617 = vld [vmem:[%s27 + $0x14] sm:$0xf]
      %v2620 = vunpack.c.l.b16 %v2616
      %v2621 = vunpack.c.l.b16 %v2617
      %v2622 = vpack.c.b16 %v2621, %v2620
      %v2625 = vsel %vm2116, %v2548, 0
      %v2628 = vsel %vm2116, %v2549, 0
      %2630 = vmatpush.bf16.msra.mxu0 0
      %2631 = vmatpush.bf16.msra.mxu0 0
      %2632 = vmatpush.bf16.msra.mxu0 0
      %2633 = vmatpush.bf16.msra.mxu0 0
      %2634 = vmatpush.bf16.msra.mxu0 0
      %2635 = vmatpush.bf16.msra.mxu0 0
      %2636 = vmatpush.bf16.msra.mxu0 0
      %2637 = vmatpush.bf16.msra.mxu0 %v2622
      %2638 = vmatmul.bf16.gmra.mxu0 %v2625
      %v2639 = vpop.f32.mrf.mxu0
      %v2640 = vadd.f32 0.0, %v2639
      %v2641 = vpop.f32.mrf.mxu0
      %v2642 = vadd.f32 0.0, %v2641
      %2643 = vmatmul.bf16.gmra.mxu0 %v2628
      %v2644 = vpop.f32.mrf.mxu0
      %v2645 = vadd.f32 0.0, %v2644
      %v2646 = vpop.f32.mrf.mxu0
      %v2647 = vadd.f32 0.0, %v2646
      %2648 = vdwg.mxu0
      %v2649 = vadd.f32 %v2607, %v2640
      %v2650 = vadd.f32 %v2609, %v2642
      %v2651 = vadd.f32 %v2612, %v2645
      %v2652 = vadd.f32 %v2614, %v2647
      %v2653 = vld [vmem:[%s29] sm:$0x1]
      %v2655 = vperm.slane %v2653, 0
      %v2657 = vadd.f32 %v2649, %v2655
      %v2658 = vadd.f32 %v2650, %v2655
      %v2659 = vadd.f32 %v2651, %v2655
      %v2660 = vadd.f32 %v2652, %v2655
      %v2661 = vld [vmem:[%s35] sm:$0xff]
      %v2662 = vld [vmem:[%s35 + $0x8] sm:$0xff]
      %v2663 = vld [vmem:[%s35 + $0x10] sm:$0xff]
      %v2664 = vld [vmem:[%s35 + $0x18] sm:$0xff]
      %v2665 = vld [vmem:[%s37] sm:$0xf]
      %v2666 = vsel %vm1009, %v2657, 0.0
      %v2667 = vsel %vm1009, %v2658, 0.0
      %v2668 = vadd.f32 %v2666, %v2667
      %v2669 = vsel %vm1009, %v2659, 0.0
      %v2670 = vadd.f32 %v2668, %v2669
      %v2671 = vsel %vm1009, %v2660, 0.0
      %v2672 = vadd.f32 %v2670, %v2671
      %v2673 = vrot.slane %v2672, 4
      %v2674 = vadd.f32 %v2672, %v2673
      %v2675 = vrot.slane %v2674, 2
      %v2676 = vadd.f32 %v2674, %v2675
      %v2677 = vrot.slane %v2676, 1
      %v2678 = vadd.f32 %v2676, %v2677
      %v2680 = vsel %vm1009, %v2678, 0
      %2682 = vmatpush.msra.mxu0 0.0
      %2683 = vmatpush.msra.mxu0 0.0
      %2684 = vmatpush.msra.mxu0 0.0
      %2685 = vmatpush.msra.mxu0 0.0
      %2686 = vmatpush.msra.mxu0 0.0
      %2687 = vmatpush.msra.mxu0 0.0
      %2688 = vmatpush.msra.mxu0 0.0
      %2689 = vmatpush.msra.mxu0 0.0
      %2690 = vmatpush.msra.mxu0 0.0
      %2691 = vmatpush.msra.mxu0 0.0
      %2692 = vmatpush.msra.mxu0 0.0
      %2693 = vmatpush.msra.mxu0 0.0
      %2694 = vmatpush.msra.mxu0 %v2664
      %2695 = vmatpush.msra.mxu0 %v2663
      %2696 = vmatpush.msra.mxu0 %v2662
      %2697 = vmatpush.msra.mxu0 %v2661
      %2698 = vmatmul.f32.gmra.mxu0 %v2680
      %v2699 = vpop.f32.mrf.mxu0
      %v2700 = vadd.f32 0.0, %v2699
      %2701 = vdwg.mxu0
      %v2702 = vrcp.pop 256.0
      %v2703 = vmul.f32 256.0, %v2702
      %v2704 = vsub.f32 1.0, %v2703
      %v2705 = vmul.f32 %v2702, %v2704
      %v2706 = vadd.f32 %v2702, %v2705
      %vm2707 = vweird.f32 %v2702
      %v2708 = vsel %vm2707, %v2702, %v2706
      %v2709 = vmul.f32 %v2700, %v2708
      %v2711 = vsel %vm2322, %v2709, 0
      %v2714 = vsel %vm2326, %v2665, 0
      %2716 = vmatpush.msra.mxu0 0.0
      %2717 = vmatpush.msra.mxu0 0.0
      %2718 = vmatpush.msra.mxu0 0.0
      %2719 = vmatpush.msra.mxu0 0.0
      %2720 = vmatpush.msra.mxu0 0.0
      %2721 = vmatpush.msra.mxu0 0.0
      %2722 = vmatpush.msra.mxu0 0.0
      %2723 = vmatpush.msra.mxu0 0.0
      %2724 = vmatpush.msra.mxu0 0.0
      %2725 = vmatpush.msra.mxu0 0.0
      %2726 = vmatpush.msra.mxu0 0.0
      %2727 = vmatpush.msra.mxu0 0.0
      %2728 = vmatpush.msra.mxu0 0.0
      %2729 = vmatpush.msra.mxu0 0.0
      %2730 = vmatpush.msra.mxu0 0.0
      %2731 = vmatpush.msra.mxu0 %v2714
      %2732 = vmatmul.f32.gmra.mxu0 %v2711
      %v2733 = vpop.f32.mrf.mxu0
      %v2734 = vadd.f32 0.0, %v2733
      %2735 = vdwg.mxu0
      %v2736 = vperm.slane %v2734, 0
      %v2737 = vsub.f32 %v2657, %v2736
      %v2738 = vsub.f32 %v2658, %v2736
      %v2739 = vsub.f32 %v2659, %v2736
      %v2740 = vsub.f32 %v2660, %v2736
      %v2741 = vmul.f32 %v2737, %v2737
      %v2742 = vmul.f32 %v2738, %v2738
      %v2743 = vmul.f32 %v2739, %v2739
      %v2744 = vmul.f32 %v2740, %v2740
      %v2745 = vsel %vm1009, %v2741, 0.0
      %v2746 = vsel %vm1009, %v2742, 0.0
      %v2747 = vadd.f32 %v2745, %v2746
      %v2748 = vsel %vm1009, %v2743, 0.0
      %v2749 = vadd.f32 %v2747, %v2748
      %v2750 = vsel %vm1009, %v2744, 0.0
      %v2751 = vadd.f32 %v2749, %v2750
      %v2752 = vrot.slane %v2751, 4
      %v2753 = vadd.f32 %v2751, %v2752
      %v2754 = vrot.slane %v2753, 2
      %v2755 = vadd.f32 %v2753, %v2754
      %v2756 = vrot.slane %v2755, 1
      %v2757 = vadd.f32 %v2755, %v2756
      %v2759 = vsel %vm1009, %v2757, 0
      %2761 = vmatpush.msra.mxu0 0.0
      %2762 = vmatpush.msra.mxu0 0.0
      %2763 = vmatpush.msra.mxu0 0.0
      %2764 = vmatpush.msra.mxu0 0.0
      %2765 = vmatpush.msra.mxu0 0.0
      %2766 = vmatpush.msra.mxu0 0.0
      %2767 = vmatpush.msra.mxu0 0.0
      %2768 = vmatpush.msra.mxu0 0.0
      %2769 = vmatpush.msra.mxu0 0.0
      %2770 = vmatpush.msra.mxu0 0.0
      %2771 = vmatpush.msra.mxu0 0.0
      %2772 = vmatpush.msra.mxu0 0.0
      %2773 = vmatpush.msra.mxu0 %v2664
      %2774 = vmatpush.msra.mxu0 %v2663
      %2775 = vmatpush.msra.mxu0 %v2662
      %2776 = vmatpush.msra.mxu0 %v2661
      %2777 = vmatmul.f32.gmra.mxu0 %v2759
      %v2778 = vpop.f32.mrf.mxu0
      %v2779 = vadd.f32 0.0, %v2778
      %2780 = vdwg.mxu0
      %v2781 = vmul.f32 %v2779, %v2708
      %v2782 = vadd.f32 %v2781, 1e-05
      %v2783 = vrsqrt.pop %v2782
      %v2784 = vmul.f32 %v2783, %v2782
      %v2785 = vmul.f32 %v2784, %v2783
      %v2786 = vmul.f32 0.5, %v2785
      %v2787 = vsub.f32 1.5, %v2786
      %v2788 = vmul.f32 %v2783, %v2787
      %vm2789 = vweird.f32 %v2782
      %vm2790 = vweird.f32 %v2783
      %vm2791 = vmor %vm2789, %vm2790
      %v2792 = vsel %vm2791, %v2783, %v2788
      %v2794 = vsel %vm2322, %v2792, 0
      %2796 = vmatpush.msra.mxu0 0.0
      %2797 = vmatpush.msra.mxu0 0.0
      %2798 = vmatpush.msra.mxu0 0.0
      %2799 = vmatpush.msra.mxu0 0.0
      %2800 = vmatpush.msra.mxu0 0.0
      %2801 = vmatpush.msra.mxu0 0.0
      %2802 = vmatpush.msra.mxu0 0.0
      %2803 = vmatpush.msra.mxu0 0.0
      %2804 = vmatpush.msra.mxu0 0.0
      %2805 = vmatpush.msra.mxu0 0.0
      %2806 = vmatpush.msra.mxu0 0.0
      %2807 = vmatpush.msra.mxu0 0.0
      %2808 = vmatpush.msra.mxu0 0.0
      %2809 = vmatpush.msra.mxu0 0.0
      %2810 = vmatpush.msra.mxu0 0.0
      %2811 = vmatpush.msra.mxu0 %v2714
      %2812 = vmatmul.f32.gmra.mxu0 %v2794
      %v2813 = vpop.f32.mrf.mxu0
      %v2814 = vadd.f32 0.0, %v2813
      %2815 = vdwg.mxu0
      %v2816 = vperm.slane %v2814, 0
      %v2817 = vmul.f32 %v2737, %v2816
      %v2818 = vmul.f32 %v2738, %v2816
      %v2819 = vmul.f32 %v2739, %v2816
      %v2820 = vmul.f32 %v2740, %v2816
      %v2821 = vld [vmem:[%s31] sm:$0x1]
      %v2823 = vperm.slane %v2821, 0
      %v2825 = vmul.f32 %v2817, %v2823
      %v2826 = vmul.f32 %v2818, %v2823
      %v2827 = vmul.f32 %v2819, %v2823
      %v2828 = vmul.f32 %v2820, %v2823
      %v2829 = vld [vmem:[%s33] sm:$0x1]
      %v2831 = vperm.slane %v2829, 0
      %v2833 = vadd.f32 %v2825, %v2831
      %v2834 = vadd.f32 %v2826, %v2831
      %v2835 = vadd.f32 %v2827, %v2831
      %v2836 = vadd.f32 %v2828, %v2831
      %v2837 = vmax.f32 %v2833, 0.0
      %v2838 = vmax.f32 %v2834, 0.0
      %v2839 = vmax.f32 %v2835, 0.0
      %v2840 = vmax.f32 %v2836, 0.0
      %v2841 = vpack.c.bf16 %v2837, %v2837
      %v2842 = vpack.c.bf16 %v2838, %v2838
      %v2843 = vpack.c.bf16 %v2839, %v2839
      %v2844 = vpack.c.bf16 %v2840, %v2840
      %v2845 = vld [vmem:[%s39] sm:$0xf]
      %v2846 = vld [vmem:[%s39 + $0x4] sm:$0xf]
      %v2847 = vld [vmem:[%s39 + $0x8] sm:$0xf]
      %v2848 = vld [vmem:[%s39 + $0xc] sm:$0xf]
      %v2849 = vld [vmem:[%s39 + $0x10] sm:$0xf]
      %v2850 = vld [vmem:[%s39 + $0x14] sm:$0xf]
      %v2851 = vld [vmem:[%s39 + $0x18] sm:$0xf]
      %v2852 = vld [vmem:[%s39 + $0x1c] sm:$0xf]
      %v2853 = vld [vmem:[%s41] sm:$0xf]
      %v2854 = vld [vmem:[%s41 + $0x4] sm:$0xf]
      %v2855 = vld [vmem:[%s41 + $0x8] sm:$0xf]
      %v2856 = vld [vmem:[%s41 + $0xc] sm:$0xf]
      %v2857 = vld [vmem:[%s41 + $0x10] sm:$0xf]
      %v2858 = vld [vmem:[%s41 + $0x14] sm:$0xf]
      %v2859 = vld [vmem:[%s41 + $0x18] sm:$0xf]
      %v2860 = vld [vmem:[%s41 + $0x1c] sm:$0xf]
      %v2869 = vunpack.c.l.b16 %v2853
      %v2870 = vunpack.c.l.b16 %v2854
      %v2871 = vunpack.c.l.b16 %v2855
      %v2872 = vunpack.c.l.b16 %v2856
      %v2873 = vunpack.c.l.b16 %v2857
      %v2874 = vunpack.c.l.b16 %v2858
      %v2875 = vunpack.c.l.b16 %v2859
      %v2876 = vunpack.c.l.b16 %v2860
      %v2877 = vpack.c.b16 %v2870, %v2869
      %v2878 = vpack.c.b16 %v2872, %v2871
      %v2879 = vpack.c.b16 %v2874, %v2873
      %v2880 = vpack.c.b16 %v2876, %v2875
      %v2885 = vunpack.c.l.b16 %v2841
      %v2886 = vunpack.c.l.b16 %v2842
      %v2887 = vunpack.c.l.b16 %v2843
      %v2888 = vunpack.c.l.b16 %v2844
      %v2889 = vpack.c.b16 %v2886, %v2885
      %v2890 = vpack.c.b16 %v2888, %v2887
      %2891 = vrot.lane.b32.xlu0 %v2889, 112
      %v2892 = vpop.permute.xlu0 %2891
      %2893 = vrot.lane.b32.xlu0 %v2890, 112
      %v2894 = vpop.permute.xlu0 %2893
      %v2898 = vsel %vm1009, %v2877, 0
      %v2901 = vsel %vm1009, %v2878, 0
      %v2904 = vsel %vm1009, %v2879, 0
      %v2907 = vsel %vm1009, %v2880, 0
      %2909 = vmatpush.bf16.msra.mxu0 0
      %2910 = vmatpush.bf16.msra.mxu0 0
      %2911 = vmatpush.bf16.msra.mxu0 0
      %2912 = vmatpush.bf16.msra.mxu0 0
      %2913 = vmatpush.bf16.msra.mxu0 0
      %2914 = vmatpush.bf16.msra.mxu0 0
      %2915 = vmatpush.bf16.msra.mxu0 %v2894
      %2916 = vmatpush.bf16.msra.mxu0 %v2892
      %2917 = vmatmul.bf16.gmra.mxu0 %v2898
      %v2918 = vpop.f32.mrf.mxu0
      %v2919 = vadd.f32 0.0, %v2918
      %v2920 = vpop.f32.mrf.mxu0
      %v2921 = vadd.f32 0.0, %v2920
      %2922 = vmatmul.bf16.gmra.mxu0 %v2901
      %v2923 = vpop.f32.mrf.mxu0
      %v2924 = vadd.f32 0.0, %v2923
      %v2925 = vpop.f32.mrf.mxu0
      %v2926 = vadd.f32 0.0, %v2925
      %2927 = vmatmul.bf16.gmra.mxu0 %v2904
      %v2928 = vpop.f32.mrf.mxu0
      %v2929 = vadd.f32 0.0, %v2928
      %v2930 = vpop.f32.mrf.mxu0
      %v2931 = vadd.f32 0.0, %v2930
      %2932 = vmatmul.bf16.gmra.mxu0 %v2907
      %v2933 = vpop.f32.mrf.mxu0
      %v2934 = vadd.f32 0.0, %v2933
      %v2935 = vpop.f32.mrf.mxu0
      %v2936 = vadd.f32 0.0, %v2935
      %2937 = vdwg.mxu0
      %v2946 = vunpack.c.l.b16 %v2845
      %v2947 = vunpack.c.l.b16 %v2846
      %v2948 = vunpack.c.l.b16 %v2847
      %v2949 = vunpack.c.l.b16 %v2848
      %v2950 = vunpack.c.l.b16 %v2849
      %v2951 = vunpack.c.l.b16 %v2850
      %v2952 = vunpack.c.l.b16 %v2851
      %v2953 = vunpack.c.l.b16 %v2852
      %v2954 = vpack.c.b16 %v2947, %v2946
      %v2955 = vpack.c.b16 %v2949, %v2948
      %v2956 = vpack.c.b16 %v2951, %v2950
      %v2957 = vpack.c.b16 %v2953, %v2952
      %v2961 = vsel %vm1009, %v2954, 0
      %v2964 = vsel %vm1009, %v2955, 0
      %v2967 = vsel %vm1009, %v2956, 0
      %v2970 = vsel %vm1009, %v2957, 0
      %2972 = vmatpush.bf16.msra.mxu0 0
      %2973 = vmatpush.bf16.msra.mxu0 0
      %2974 = vmatpush.bf16.msra.mxu0 0
      %2975 = vmatpush.bf16.msra.mxu0 0
      %2976 = vmatpush.bf16.msra.mxu0 0
      %2977 = vmatpush.bf16.msra.mxu0 0
      %2978 = vmatpush.bf16.msra.mxu0 %v2890
      %2979 = vmatpush.bf16.msra.mxu0 %v2889
      %2980 = vmatmul.bf16.gmra.mxu0 %v2961
      %v2981 = vpop.f32.mrf.mxu0
      %v2982 = vadd.f32 %v2919, %v2981
      %v2983 = vpop.f32.mrf.mxu0
      %v2984 = vadd.f32 %v2921, %v2983
      %2985 = vmatmul.bf16.gmra.mxu0 %v2964
      %v2986 = vpop.f32.mrf.mxu0
      %v2987 = vadd.f32 %v2924, %v2986
      %v2988 = vpop.f32.mrf.mxu0
      %v2989 = vadd.f32 %v2926, %v2988
      %2990 = vmatmul.bf16.gmra.mxu0 %v2967
      %v2991 = vpop.f32.mrf.mxu0
      %v2992 = vadd.f32 %v2929, %v2991
      %v2993 = vpop.f32.mrf.mxu0
      %v2994 = vadd.f32 %v2931, %v2993
      %2995 = vmatmul.bf16.gmra.mxu0 %v2970
      %v2996 = vpop.f32.mrf.mxu0
      %v2997 = vadd.f32 %v2934, %v2996
      %v2998 = vpop.f32.mrf.mxu0
      %v2999 = vadd.f32 %v2936, %v2998
      %3000 = vdwg.mxu0
      %3001 = vst.msk [vmem:[#allocation4 + $0x1] sm:$0xff] %vm2116, %v2982
      %3002 = vst.msk [vmem:[#allocation4 + $0x9] sm:$0xff] %vm2116, %v2984
      %3003 = vst.msk [vmem:[#allocation4 + $0x11] sm:$0xff] %vm2116, %v2987
      %3004 = vst.msk [vmem:[#allocation4 + $0x19] sm:$0xff] %vm2116, %v2989
      %3005 = vst.msk [vmem:[#allocation4 + $0x21] sm:$0xff] %vm2116, %v2992
      %3006 = vst.msk [vmem:[#allocation4 + $0x29] sm:$0xff] %vm2116, %v2994
      %3007 = vst.msk [vmem:[#allocation4 + $0x31] sm:$0xff] %vm2116, %v2997
      %3008 = vst.msk [vmem:[#allocation4 + $0x39] sm:$0xff] %vm2116, %v2999
      %v3009 = vld [vmem:[#allocation4] sm:$0xff]
      %v3010 = vld [vmem:[#allocation4 + $0x8] sm:$0xff]
      %v3011 = vld [vmem:[#allocation4 + $0x10] sm:$0xff]
      %v3012 = vld [vmem:[#allocation4 + $0x18] sm:$0xff]
      %v3013 = vld [vmem:[#allocation4 + $0x20] sm:$0xff]
      %v3014 = vld [vmem:[#allocation4 + $0x28] sm:$0xff]
      %v3015 = vld [vmem:[#allocation4 + $0x30] sm:$0xff]
      %v3016 = vld [vmem:[#allocation4 + $0x38] sm:$0xff]
      %v3017 = vpack.c.bf16 %v3010, %v3009
      %v3018 = vpack.c.bf16 %v3012, %v3011
      %v3019 = vpack.c.bf16 %v3014, %v3013
      %v3020 = vpack.c.bf16 %v3016, %v3015
      %v3021 = vld [vmem:[#allocation4 + $0x1] sm:$0xff]
      %v3022 = vld [vmem:[#allocation4 + $0x9] sm:$0xff]
      %v3023 = vld [vmem:[#allocation4 + $0x11] sm:$0xff]
      %v3024 = vld [vmem:[#allocation4 + $0x19] sm:$0xff]
      %v3025 = vld [vmem:[#allocation4 + $0x21] sm:$0xff]
      %v3026 = vld [vmem:[#allocation4 + $0x29] sm:$0xff]
      %v3027 = vld [vmem:[#allocation4 + $0x31] sm:$0xff]
      %v3028 = vld [vmem:[#allocation4 + $0x39] sm:$0xff]
      %v3029 = vpack.c.bf16 %v3022, %v3021
      %v3030 = vpack.c.bf16 %v3024, %v3023
      %v3031 = vpack.c.bf16 %v3026, %v3025
      %v3032 = vpack.c.bf16 %v3028, %v3027
      %v3033 = vld [vmem:[#allocation4 + $0x2] sm:$0xff]
      %v3034 = vld [vmem:[#allocation4 + $0xa] sm:$0xff]
      %v3035 = vld [vmem:[#allocation4 + $0x12] sm:$0xff]
      %v3036 = vld [vmem:[#allocation4 + $0x1a] sm:$0xff]
      %v3037 = vld [vmem:[#allocation4 + $0x22] sm:$0xff]
      %v3038 = vld [vmem:[#allocation4 + $0x2a] sm:$0xff]
      %v3039 = vld [vmem:[#allocation4 + $0x32] sm:$0xff]
      %v3040 = vld [vmem:[#allocation4 + $0x3a] sm:$0xff]
      %v3041 = vpack.c.bf16 %v3034, %v3033
      %v3042 = vpack.c.bf16 %v3036, %v3035
      %v3043 = vpack.c.bf16 %v3038, %v3037
      %v3044 = vpack.c.bf16 %v3040, %v3039
      %v3045 = vld [vmem:[%s43] sm:$0xf]
      %v3046 = vld [vmem:[%s43 + $0x4] sm:$0xf]
      %v3047 = vld [vmem:[%s43 + $0x8] sm:$0xf]
      %v3048 = vld [vmem:[%s43 + $0xc] sm:$0xf]
      %v3051 = vunpack.c.l.b16 %v3047
      %v3052 = vunpack.c.l.b16 %v3048
      %v3053 = vpack.c.b16 %v3052, %v3051
      %v3056 = vsel %vm2116, %v3029, 0
      %v3059 = vsel %vm2116, %v3030, 0
      %v3062 = vsel %vm2116, %v3031, 0
      %v3065 = vsel %vm2116, %v3032, 0
      %3067 = vmatpush.bf16.msra.mxu0 0
      %3068 = vmatpush.bf16.msra.mxu0 0
      %3069 = vmatpush.bf16.msra.mxu0 0
      %3070 = vmatpush.bf16.msra.mxu0 0
      %3071 = vmatpush.bf16.msra.mxu0 0
      %3072 = vmatpush.bf16.msra.mxu0 0
      %3073 = vmatpush.bf16.msra.mxu0 0
      %3074 = vmatpush.bf16.msra.mxu0 %v3053
      %3075 = vmatmul.bf16.gmra.mxu0 %v3056
      %v3076 = vpop.f32.mrf.mxu0
      %v3077 = vadd.f32 0.0, %v3076
      %v3078 = vpop.f32.mrf.mxu0
      %v3079 = vadd.f32 0.0, %v3078
      %3080 = vmatmul.bf16.gmra.mxu0 %v3059
      %v3081 = vpop.f32.mrf.mxu0
      %v3082 = vadd.f32 0.0, %v3081
      %v3083 = vpop.f32.mrf.mxu0
      %v3084 = vadd.f32 0.0, %v3083
      %3085 = vmatmul.bf16.gmra.mxu0 %v3062
      %v3086 = vpop.f32.mrf.mxu0
      %v3087 = vadd.f32 0.0, %v3086
      %v3088 = vpop.f32.mrf.mxu0
      %v3089 = vadd.f32 0.0, %v3088
      %3090 = vmatmul.bf16.gmra.mxu0 %v3065
      %v3091 = vpop.f32.mrf.mxu0
      %v3092 = vadd.f32 0.0, %v3091
      %v3093 = vpop.f32.mrf.mxu0
      %v3094 = vadd.f32 0.0, %v3093
      %3095 = vdwg.mxu0
      %v3098 = vunpack.c.l.b16 %v3045
      %v3099 = vunpack.c.l.b16 %v3046
      %v3100 = vpack.c.b16 %v3099, %v3098
      %v3103 = vsel %vm2116, %v3017, 0
      %v3106 = vsel %vm2116, %v3018, 0
      %v3109 = vsel %vm2116, %v3019, 0
      %v3112 = vsel %vm2116, %v3020, 0
      %3114 = vmatpush.bf16.msra.mxu0 0
      %3115 = vmatpush.bf16.msra.mxu0 0
      %3116 = vmatpush.bf16.msra.mxu0 0
      %3117 = vmatpush.bf16.msra.mxu0 0
      %3118 = vmatpush.bf16.msra.mxu0 0
      %3119 = vmatpush.bf16.msra.mxu0 0
      %3120 = vmatpush.bf16.msra.mxu0 0
      %3121 = vmatpush.bf16.msra.mxu0 %v3100
      %3122 = vmatmul.bf16.gmra.mxu0 %v3103
      %v3123 = vpop.f32.mrf.mxu0
      %v3124 = vadd.f32 %v3077, %v3123
      %v3125 = vpop.f32.mrf.mxu0
      %v3126 = vadd.f32 %v3079, %v3125
      %3127 = vmatmul.bf16.gmra.mxu0 %v3106
      %v3128 = vpop.f32.mrf.mxu0
      %v3129 = vadd.f32 %v3082, %v3128
      %v3130 = vpop.f32.mrf.mxu0
      %v3131 = vadd.f32 %v3084, %v3130
      %3132 = vmatmul.bf16.gmra.mxu0 %v3109
      %v3133 = vpop.f32.mrf.mxu0
      %v3134 = vadd.f32 %v3087, %v3133
      %v3135 = vpop.f32.mrf.mxu0
      %v3136 = vadd.f32 %v3089, %v3135
      %3137 = vmatmul.bf16.gmra.mxu0 %v3112
      %v3138 = vpop.f32.mrf.mxu0
      %v3139 = vadd.f32 %v3092, %v3138
      %v3140 = vpop.f32.mrf.mxu0
      %v3141 = vadd.f32 %v3094, %v3140
      %3142 = vdwg.mxu0
      %v3143 = vld [vmem:[%s43 + $0x10] sm:$0xf]
      %v3144 = vld [vmem:[%s43 + $0x14] sm:$0xf]
      %v3147 = vunpack.c.l.b16 %v3143
      %v3148 = vunpack.c.l.b16 %v3144
      %v3149 = vpack.c.b16 %v3148, %v3147
      %v3152 = vsel %vm2116, %v3041, 0
      %v3155 = vsel %vm2116, %v3042, 0
      %v3158 = vsel %vm2116, %v3043, 0
      %v3161 = vsel %vm2116, %v3044, 0
      %3163 = vmatpush.bf16.msra.mxu0 0
      %3164 = vmatpush.bf16.msra.mxu0 0
      %3165 = vmatpush.bf16.msra.mxu0 0
      %3166 = vmatpush.bf16.msra.mxu0 0
      %3167 = vmatpush.bf16.msra.mxu0 0
      %3168 = vmatpush.bf16.msra.mxu0 0
      %3169 = vmatpush.bf16.msra.mxu0 0
      %3170 = vmatpush.bf16.msra.mxu0 %v3149
      %3171 = vmatmul.bf16.gmra.mxu0 %v3152
      %v3172 = vpop.f32.mrf.mxu0
      %v3173 = vadd.f32 0.0, %v3172
      %v3174 = vpop.f32.mrf.mxu0
      %v3175 = vadd.f32 0.0, %v3174
      %3176 = vmatmul.bf16.gmra.mxu0 %v3155
      %v3177 = vpop.f32.mrf.mxu0
      %v3178 = vadd.f32 0.0, %v3177
      %v3179 = vpop.f32.mrf.mxu0
      %v3180 = vadd.f32 0.0, %v3179
      %3181 = vmatmul.bf16.gmra.mxu0 %v3158
      %v3182 = vpop.f32.mrf.mxu0
      %v3183 = vadd.f32 0.0, %v3182
      %v3184 = vpop.f32.mrf.mxu0
      %v3185 = vadd.f32 0.0, %v3184
      %3186 = vmatmul.bf16.gmra.mxu0 %v3161
      %v3187 = vpop.f32.mrf.mxu0
      %v3188 = vadd.f32 0.0, %v3187
      %v3189 = vpop.f32.mrf.mxu0
      %v3190 = vadd.f32 0.0, %v3189
      %3191 = vdwg.mxu0
      %v3192 = vadd.f32 %v3124, %v3173
      %v3193 = vadd.f32 %v3126, %v3175
      %v3194 = vadd.f32 %v3129, %v3178
      %v3195 = vadd.f32 %v3131, %v3180
      %v3196 = vadd.f32 %v3134, %v3183
      %v3197 = vadd.f32 %v3136, %v3185
      %v3198 = vadd.f32 %v3139, %v3188
      %v3199 = vadd.f32 %v3141, %v3190
      %v3200 = vld [vmem:[%s45] sm:$0x1]
      %v3202 = vperm.slane %v3200, 0
      %v3204 = vadd.f32 %v3192, %v3202
      %v3205 = vadd.f32 %v3193, %v3202
      %v3206 = vadd.f32 %v3194, %v3202
      %v3207 = vadd.f32 %v3195, %v3202
      %v3208 = vadd.f32 %v3196, %v3202
      %v3209 = vadd.f32 %v3197, %v3202
      %v3210 = vadd.f32 %v3198, %v3202
      %v3211 = vadd.f32 %v3199, %v3202
      %v3212 = vld [vmem:[%s51] sm:$0xff]
      %v3213 = vld [vmem:[%s51 + $0x8] sm:$0xff]
      %v3214 = vld [vmem:[%s53] sm:$0xf]
      %v3215 = vsel %vm2116, %v3204, 0.0
      %v3216 = vsel %vm2116, %v3205, 0.0
      %v3217 = vadd.f32 %v3215, %v3216
      %v3218 = vsel %vm2116, %v3206, 0.0
      %v3219 = vadd.f32 %v3217, %v3218
      %v3220 = vsel %vm2116, %v3207, 0.0
      %v3221 = vadd.f32 %v3219, %v3220
      %v3222 = vsel %vm2116, %v3208, 0.0
      %v3223 = vadd.f32 %v3221, %v3222
      %v3224 = vsel %vm2116, %v3209, 0.0
      %v3225 = vadd.f32 %v3223, %v3224
      %v3226 = vsel %vm2116, %v3210, 0.0
      %v3227 = vadd.f32 %v3225, %v3226
      %v3228 = vsel %vm2116, %v3211, 0.0
      %v3229 = vadd.f32 %v3227, %v3228
      %v3230 = vrot.slane %v3229, 4
      %v3231 = vadd.f32 %v3229, %v3230
      %v3232 = vrot.slane %v3231, 2
      %v3233 = vadd.f32 %v3231, %v3232
      %v3234 = vrot.slane %v3233, 1
      %v3235 = vadd.f32 %v3233, %v3234
      %v3237 = vsel %vm2116, %v3235, 0
      %3239 = vmatpush.msra.mxu0 0.0
      %3240 = vmatpush.msra.mxu0 0.0
      %3241 = vmatpush.msra.mxu0 0.0
      %3242 = vmatpush.msra.mxu0 0.0
      %3243 = vmatpush.msra.mxu0 0.0
      %3244 = vmatpush.msra.mxu0 0.0
      %3245 = vmatpush.msra.mxu0 0.0
      %3246 = vmatpush.msra.mxu0 0.0
      %3247 = vmatpush.msra.mxu0 0.0
      %3248 = vmatpush.msra.mxu0 0.0
      %3249 = vmatpush.msra.mxu0 0.0
      %3250 = vmatpush.msra.mxu0 0.0
      %3251 = vmatpush.msra.mxu0 0.0
      %3252 = vmatpush.msra.mxu0 0.0
      %3253 = vmatpush.msra.mxu0 %v3213
      %3254 = vmatpush.msra.mxu0 %v3212
      %3255 = vmatmul.f32.gmra.mxu0 %v3237
      %v3256 = vpop.f32.mrf.mxu0
      %v3257 = vadd.f32 0.0, %v3256
      %3258 = vdwg.mxu0
      %v3259 = vmul.f32 %v3257, %v2708
      %v3261 = vsel %vm2322, %v3259, 0
      %v3264 = vsel %vm2326, %v3214, 0
      %3266 = vmatpush.msra.mxu0 0.0
      %3267 = vmatpush.msra.mxu0 0.0
      %3268 = vmatpush.msra.mxu0 0.0
      %3269 = vmatpush.msra.mxu0 0.0
      %3270 = vmatpush.msra.mxu0 0.0
      %3271 = vmatpush.msra.mxu0 0.0
      %3272 = vmatpush.msra.mxu0 0.0
      %3273 = vmatpush.msra.mxu0 0.0
      %3274 = vmatpush.msra.mxu0 0.0
      %3275 = vmatpush.msra.mxu0 0.0
      %3276 = vmatpush.msra.mxu0 0.0
      %3277 = vmatpush.msra.mxu0 0.0
      %3278 = vmatpush.msra.mxu0 0.0
      %3279 = vmatpush.msra.mxu0 0.0
      %3280 = vmatpush.msra.mxu0 0.0
      %3281 = vmatpush.msra.mxu0 %v3264
      %3282 = vmatmul.f32.gmra.mxu0 %v3261
      %v3283 = vpop.f32.mrf.mxu0
      %v3284 = vadd.f32 0.0, %v3283
      %3285 = vdwg.mxu0
      %v3286 = vperm.slane %v3284, 0
      %v3287 = vsub.f32 %v3204, %v3286
      %v3288 = vsub.f32 %v3205, %v3286
      %v3289 = vsub.f32 %v3206, %v3286
      %v3290 = vsub.f32 %v3207, %v3286
      %v3291 = vsub.f32 %v3208, %v3286
      %v3292 = vsub.f32 %v3209, %v3286
      %v3293 = vsub.f32 %v3210, %v3286
      %v3294 = vsub.f32 %v3211, %v3286
      %v3295 = vmul.f32 %v3287, %v3287
      %v3296 = vmul.f32 %v3288, %v3288
      %v3297 = vmul.f32 %v3289, %v3289
      %v3298 = vmul.f32 %v3290, %v3290
      %v3299 = vmul.f32 %v3291, %v3291
      %v3300 = vmul.f32 %v3292, %v3292
      %v3301 = vmul.f32 %v3293, %v3293
      %v3302 = vmul.f32 %v3294, %v3294
      %v3303 = vsel %vm2116, %v3295, 0.0
      %v3304 = vsel %vm2116, %v3296, 0.0
      %v3305 = vadd.f32 %v3303, %v3304
      %v3306 = vsel %vm2116, %v3297, 0.0
      %v3307 = vadd.f32 %v3305, %v3306
      %v3308 = vsel %vm2116, %v3298, 0.0
      %v3309 = vadd.f32 %v3307, %v3308
      %v3310 = vsel %vm2116, %v3299, 0.0
      %v3311 = vadd.f32 %v3309, %v3310
      %v3312 = vsel %vm2116, %v3300, 0.0
      %v3313 = vadd.f32 %v3311, %v3312
      %v3314 = vsel %vm2116, %v3301, 0.0
      %v3315 = vadd.f32 %v3313, %v3314
      %v3316 = vsel %vm2116, %v3302, 0.0
      %v3317 = vadd.f32 %v3315, %v3316
      %v3318 = vrot.slane %v3317, 4
      %v3319 = vadd.f32 %v3317, %v3318
      %v3320 = vrot.slane %v3319, 2
      %v3321 = vadd.f32 %v3319, %v3320
      %v3322 = vrot.slane %v3321, 1
      %v3323 = vadd.f32 %v3321, %v3322
      %v3325 = vsel %vm2116, %v3323, 0
      %3327 = vmatpush.msra.mxu0 0.0
      %3328 = vmatpush.msra.mxu0 0.0
      %3329 = vmatpush.msra.mxu0 0.0
      %3330 = vmatpush.msra.mxu0 0.0
      %3331 = vmatpush.msra.mxu0 0.0
      %3332 = vmatpush.msra.mxu0 0.0
      %3333 = vmatpush.msra.mxu0 0.0
      %3334 = vmatpush.msra.mxu0 0.0
      %3335 = vmatpush.msra.mxu0 0.0
      %3336 = vmatpush.msra.mxu0 0.0
      %3337 = vmatpush.msra.mxu0 0.0
      %3338 = vmatpush.msra.mxu0 0.0
      %3339 = vmatpush.msra.mxu0 0.0
      %3340 = vmatpush.msra.mxu0 0.0
      %3341 = vmatpush.msra.mxu0 %v3213
      %3342 = vmatpush.msra.mxu0 %v3212
      %3343 = vmatmul.f32.gmra.mxu0 %v3325
      %v3344 = vpop.f32.mrf.mxu0
      %v3345 = vadd.f32 0.0, %v3344
      %3346 = vdwg.mxu0
      %v3347 = vmul.f32 %v3345, %v2708
      %v3348 = vadd.f32 %v3347, 1e-05
      %v3349 = vrsqrt.pop %v3348
      %v3350 = vmul.f32 %v3349, %v3348
      %v3351 = vmul.f32 %v3350, %v3349
      %v3352 = vmul.f32 0.5, %v3351
      %v3353 = vsub.f32 1.5, %v3352
      %v3354 = vmul.f32 %v3349, %v3353
      %vm3355 = vweird.f32 %v3348
      %vm3356 = vweird.f32 %v3349
      %vm3357 = vmor %vm3355, %vm3356
      %v3358 = vsel %vm3357, %v3349, %v3354
      %v3360 = vsel %vm2322, %v3358, 0
      %3362 = vmatpush.msra.mxu0 0.0
      %3363 = vmatpush.msra.mxu0 0.0
      %3364 = vmatpush.msra.mxu0 0.0
      %3365 = vmatpush.msra.mxu0 0.0
      %3366 = vmatpush.msra.mxu0 0.0
      %3367 = vmatpush.msra.mxu0 0.0
      %3368 = vmatpush.msra.mxu0 0.0
      %3369 = vmatpush.msra.mxu0 0.0
      %3370 = vmatpush.msra.mxu0 0.0
      %3371 = vmatpush.msra.mxu0 0.0
      %3372 = vmatpush.msra.mxu0 0.0
      %3373 = vmatpush.msra.mxu0 0.0
      %3374 = vmatpush.msra.mxu0 0.0
      %3375 = vmatpush.msra.mxu0 0.0
      %3376 = vmatpush.msra.mxu0 0.0
      %3377 = vmatpush.msra.mxu0 %v3264
      %3378 = vmatmul.f32.gmra.mxu0 %v3360
      %v3379 = vpop.f32.mrf.mxu0
      %v3380 = vadd.f32 0.0, %v3379
      %3381 = vdwg.mxu0
      %v3382 = vperm.slane %v3380, 0
      %v3383 = vmul.f32 %v3287, %v3382
      %v3384 = vmul.f32 %v3288, %v3382
      %v3385 = vmul.f32 %v3289, %v3382
      %v3386 = vmul.f32 %v3290, %v3382
      %v3387 = vmul.f32 %v3291, %v3382
      %v3388 = vmul.f32 %v3292, %v3382
      %v3389 = vmul.f32 %v3293, %v3382
      %v3390 = vmul.f32 %v3294, %v3382
      %v3391 = vld [vmem:[%s47] sm:$0x1]
      %v3393 = vperm.slane %v3391, 0
      %v3395 = vmul.f32 %v3383, %v3393
      %v3396 = vmul.f32 %v3384, %v3393
      %v3397 = vmul.f32 %v3385, %v3393
      %v3398 = vmul.f32 %v3386, %v3393
      %v3399 = vmul.f32 %v3387, %v3393
      %v3400 = vmul.f32 %v3388, %v3393
      %v3401 = vmul.f32 %v3389, %v3393
      %v3402 = vmul.f32 %v3390, %v3393
      %v3403 = vld [vmem:[%s49] sm:$0x1]
      %v3405 = vperm.slane %v3403, 0
      %v3407 = vadd.f32 %v3395, %v3405
      %v3408 = vadd.f32 %v3396, %v3405
      %v3409 = vadd.f32 %v3397, %v3405
      %v3410 = vadd.f32 %v3398, %v3405
      %v3411 = vadd.f32 %v3399, %v3405
      %v3412 = vadd.f32 %v3400, %v3405
      %v3413 = vadd.f32 %v3401, %v3405
      %v3414 = vadd.f32 %v3402, %v3405
      %v3415 = vmax.f32 %v3407, 0.0
      %v3416 = vmax.f32 %v3408, 0.0
      %v3417 = vmax.f32 %v3409, 0.0
      %v3418 = vmax.f32 %v3410, 0.0
      %v3419 = vmax.f32 %v3411, 0.0
      %v3420 = vmax.f32 %v3412, 0.0
      %v3421 = vmax.f32 %v3413, 0.0
      %v3422 = vmax.f32 %v3414, 0.0
      %v3423 = vpack.c.bf16 %v3415, %v3415
      %v3424 = vpack.c.bf16 %v3416, %v3416
      %v3425 = vpack.c.bf16 %v3417, %v3417
      %v3426 = vpack.c.bf16 %v3418, %v3418
      %v3427 = vpack.c.bf16 %v3419, %v3419
      %v3428 = vpack.c.bf16 %v3420, %v3420
      %v3429 = vpack.c.bf16 %v3421, %v3421
      %v3430 = vpack.c.bf16 %v3422, %v3422
      %v3431 = vld [vmem:[%s55] sm:$0xf]
      %v3432 = vld [vmem:[%s55 + $0x4] sm:$0xf]
      %v3433 = vld [vmem:[%s55 + $0x8] sm:$0xf]
      %v3434 = vld [vmem:[%s55 + $0xc] sm:$0xf]
      %v3435 = vld [vmem:[%s55 + $0x10] sm:$0xf]
      %v3436 = vld [vmem:[%s55 + $0x14] sm:$0xf]
      %v3437 = vld [vmem:[%s55 + $0x18] sm:$0xf]
      %v3438 = vld [vmem:[%s55 + $0x1c] sm:$0xf]
      %v3439 = vld [vmem:[%s55 + $0x20] sm:$0xf]
      %v3440 = vld [vmem:[%s55 + $0x24] sm:$0xf]
      %v3441 = vld [vmem:[%s55 + $0x28] sm:$0xf]
      %v3442 = vld [vmem:[%s55 + $0x2c] sm:$0xf]
      %v3443 = vld [vmem:[%s55 + $0x30] sm:$0xf]
      %v3444 = vld [vmem:[%s55 + $0x34] sm:$0xf]
      %v3445 = vld [vmem:[%s55 + $0x38] sm:$0xf]
      %v3446 = vld [vmem:[%s55 + $0x3c] sm:$0xf]
      %v3447 = vld [vmem:[%s57] sm:$0xf]
      %v3448 = vld [vmem:[%s57 + $0x4] sm:$0xf]
      %v3449 = vld [vmem:[%s57 + $0x8] sm:$0xf]
      %v3450 = vld [vmem:[%s57 + $0xc] sm:$0xf]
      %v3451 = vld [vmem:[%s57 + $0x10] sm:$0xf]
      %v3452 = vld [vmem:[%s57 + $0x14] sm:$0xf]
      %v3453 = vld [vmem:[%s57 + $0x18] sm:$0xf]
      %v3454 = vld [vmem:[%s57 + $0x1c] sm:$0xf]
      %v3455 = vld [vmem:[%s57 + $0x20] sm:$0xf]
      %v3456 = vld [vmem:[%s57 + $0x24] sm:$0xf]
      %v3457 = vld [vmem:[%s57 + $0x28] sm:$0xf]
      %v3458 = vld [vmem:[%s57 + $0x2c] sm:$0xf]
      %v3459 = vld [vmem:[%s57 + $0x30] sm:$0xf]
      %v3460 = vld [vmem:[%s57 + $0x34] sm:$0xf]
      %v3461 = vld [vmem:[%s57 + $0x38] sm:$0xf]
      %v3462 = vld [vmem:[%s57 + $0x3c] sm:$0xf]
      %v3479 = vunpack.c.l.b16 %v3447
      %v3480 = vunpack.c.l.b16 %v3448
      %v3481 = vunpack.c.l.b16 %v3449
      %v3482 = vunpack.c.l.b16 %v3450
      %v3483 = vunpack.c.l.b16 %v3451
      %v3484 = vunpack.c.l.b16 %v3452
      %v3485 = vunpack.c.l.b16 %v3453
      %v3486 = vunpack.c.l.b16 %v3454
      %v3487 = vunpack.c.l.b16 %v3455
      %v3488 = vunpack.c.l.b16 %v3456
      %v3489 = vunpack.c.l.b16 %v3457
      %v3490 = vunpack.c.l.b16 %v3458
      %v3491 = vunpack.c.l.b16 %v3459
      %v3492 = vunpack.c.l.b16 %v3460
      %v3493 = vunpack.c.l.b16 %v3461
      %v3494 = vunpack.c.l.b16 %v3462
      %v3495 = vpack.c.b16 %v3480, %v3479
      %v3496 = vpack.c.b16 %v3482, %v3481
      %v3497 = vpack.c.b16 %v3484, %v3483
      %v3498 = vpack.c.b16 %v3486, %v3485
      %v3499 = vpack.c.b16 %v3488, %v3487
      %v3500 = vpack.c.b16 %v3490, %v3489
      %v3501 = vpack.c.b16 %v3492, %v3491
      %v3502 = vpack.c.b16 %v3494, %v3493
      %v3511 = vunpack.c.l.b16 %v3423
      %v3512 = vunpack.c.l.b16 %v3424
      %v3513 = vunpack.c.l.b16 %v3425
      %v3514 = vunpack.c.l.b16 %v3426
      %v3515 = vunpack.c.l.b16 %v3427
      %v3516 = vunpack.c.l.b16 %v3428
      %v3517 = vunpack.c.l.b16 %v3429
      %v3518 = vunpack.c.l.b16 %v3430
      %v3519 = vpack.c.b16 %v3512, %v3511
      %v3520 = vpack.c.b16 %v3514, %v3513
      %v3521 = vpack.c.b16 %v3516, %v3515
      %v3522 = vpack.c.b16 %v3518, %v3517
      %3523 = vrot.lane.b32.xlu0 %v3519, 120
      %v3524 = vpop.permute.xlu0 %3523
      %3525 = vrot.lane.b32.xlu0 %v3520, 120
      %v3526 = vpop.permute.xlu0 %3525
      %3527 = vrot.lane.b32.xlu0 %v3521, 120
      %v3528 = vpop.permute.xlu0 %3527
      %3529 = vrot.lane.b32.xlu0 %v3522, 120
      %v3530 = vpop.permute.xlu0 %3529
      %vm3535 = vcmask 523264
      %v3537 = vsel %vm3535, %v3495, 0
      %v3540 = vsel %vm3535, %v3496, 0
      %v3543 = vsel %vm3535, %v3497, 0
      %v3546 = vsel %vm3535, %v3498, 0
      %v3549 = vsel %vm3535, %v3499, 0
      %v3552 = vsel %vm3535, %v3500, 0
      %v3555 = vsel %vm3535, %v3501, 0
      %v3558 = vsel %vm3535, %v3502, 0
      %3560 = vmatpush.bf16.msra.mxu0 0
      %3561 = vmatpush.bf16.msra.mxu0 0
      %3562 = vmatpush.bf16.msra.mxu0 0
      %3563 = vmatpush.bf16.msra.mxu0 0
      %3564 = vmatpush.bf16.msra.mxu0 %v3530
      %3565 = vmatpush.bf16.msra.mxu0 %v3528
      %3566 = vmatpush.bf16.msra.mxu0 %v3526
      %3567 = vmatpush.bf16.msra.mxu0 %v3524
      %3568 = vmatmul.bf16.gmra.mxu0 %v3537
      %v3569 = vpop.f32.mrf.mxu0
      %v3570 = vadd.f32 0.0, %v3569
      %v3571 = vpop.f32.mrf.mxu0
      %v3572 = vadd.f32 0.0, %v3571
      %3573 = vmatmul.bf16.gmra.mxu0 %v3540
      %v3574 = vpop.f32.mrf.mxu0
      %v3575 = vadd.f32 0.0, %v3574
      %v3576 = vpop.f32.mrf.mxu0
      %v3577 = vadd.f32 0.0, %v3576
      %3578 = vmatmul.bf16.gmra.mxu0 %v3543
      %v3579 = vpop.f32.mrf.mxu0
      %v3580 = vadd.f32 0.0, %v3579
      %v3581 = vpop.f32.mrf.mxu0
      %v3582 = vadd.f32 0.0, %v3581
      %3583 = vmatmul.bf16.gmra.mxu0 %v3546
      %v3584 = vpop.f32.mrf.mxu0
      %v3585 = vadd.f32 0.0, %v3584
      %v3586 = vpop.f32.mrf.mxu0
      %v3587 = vadd.f32 0.0, %v3586
      %3588 = vmatmul.bf16.gmra.mxu0 %v3549
      %v3589 = vpop.f32.mrf.mxu0
      %v3590 = vadd.f32 0.0, %v3589
      %v3591 = vpop.f32.mrf.mxu0
      %v3592 = vadd.f32 0.0, %v3591
      %3593 = vmatmul.bf16.gmra.mxu0 %v3552
      %v3594 = vpop.f32.mrf.mxu0
      %v3595 = vadd.f32 0.0, %v3594
      %v3596 = vpop.f32.mrf.mxu0
      %v3597 = vadd.f32 0.0, %v3596
      %3598 = vmatmul.bf16.gmra.mxu0 %v3555
      %v3599 = vpop.f32.mrf.mxu0
      %v3600 = vadd.f32 0.0, %v3599
      %v3601 = vpop.f32.mrf.mxu0
      %v3602 = vadd.f32 0.0, %v3601
      %3603 = vmatmul.bf16.gmra.mxu0 %v3558
      %v3604 = vpop.f32.mrf.mxu0
      %v3605 = vadd.f32 0.0, %v3604
      %v3606 = vpop.f32.mrf.mxu0
      %v3607 = vadd.f32 0.0, %v3606
      %3608 = vdwg.mxu0
      %v3625 = vunpack.c.l.b16 %v3431
      %v3626 = vunpack.c.l.b16 %v3432
      %v3627 = vunpack.c.l.b16 %v3433
      %v3628 = vunpack.c.l.b16 %v3434
      %v3629 = vunpack.c.l.b16 %v3435
      %v3630 = vunpack.c.l.b16 %v3436
      %v3631 = vunpack.c.l.b16 %v3437
      %v3632 = vunpack.c.l.b16 %v3438
      %v3633 = vunpack.c.l.b16 %v3439
      %v3634 = vunpack.c.l.b16 %v3440
      %v3635 = vunpack.c.l.b16 %v3441
      %v3636 = vunpack.c.l.b16 %v3442
      %v3637 = vunpack.c.l.b16 %v3443
      %v3638 = vunpack.c.l.b16 %v3444
      %v3639 = vunpack.c.l.b16 %v3445
      %v3640 = vunpack.c.l.b16 %v3446
      %v3641 = vpack.c.b16 %v3626, %v3625
      %v3642 = vpack.c.b16 %v3628, %v3627
      %v3643 = vpack.c.b16 %v3630, %v3629
      %v3644 = vpack.c.b16 %v3632, %v3631
      %v3645 = vpack.c.b16 %v3634, %v3633
      %v3646 = vpack.c.b16 %v3636, %v3635
      %v3647 = vpack.c.b16 %v3638, %v3637
      %v3648 = vpack.c.b16 %v3640, %v3639
      %v3654 = vsel %vm3535, %v3641, 0
      %v3657 = vsel %vm3535, %v3642, 0
      %v3660 = vsel %vm3535, %v3643, 0
      %v3663 = vsel %vm3535, %v3644, 0
      %v3666 = vsel %vm3535, %v3645, 0
      %v3669 = vsel %vm3535, %v3646, 0
      %v3672 = vsel %vm3535, %v3647, 0
      %v3675 = vsel %vm3535, %v3648, 0
      %3677 = vmatpush.bf16.msra.mxu0 0
      %3678 = vmatpush.bf16.msra.mxu0 0
      %3679 = vmatpush.bf16.msra.mxu0 0
      %3680 = vmatpush.bf16.msra.mxu0 0
      %3681 = vmatpush.bf16.msra.mxu0 %v3522
      %3682 = vmatpush.bf16.msra.mxu0 %v3521
      %3683 = vmatpush.bf16.msra.mxu0 %v3520
      %3684 = vmatpush.bf16.msra.mxu0 %v3519
      %3685 = vmatmul.bf16.gmra.mxu0 %v3654
      %v3686 = vpop.f32.mrf.mxu0
      %v3687 = vadd.f32 %v3570, %v3686
      %v3688 = vpop.f32.mrf.mxu0
      %v3689 = vadd.f32 %v3572, %v3688
      %3690 = vmatmul.bf16.gmra.mxu0 %v3657
      %v3691 = vpop.f32.mrf.mxu0
      %v3692 = vadd.f32 %v3575, %v3691
      %v3693 = vpop.f32.mrf.mxu0
      %v3694 = vadd.f32 %v3577, %v3693
      %3695 = vmatmul.bf16.gmra.mxu0 %v3660
      %v3696 = vpop.f32.mrf.mxu0
      %v3697 = vadd.f32 %v3580, %v3696
      %v3698 = vpop.f32.mrf.mxu0
      %v3699 = vadd.f32 %v3582, %v3698
      %3700 = vmatmul.bf16.gmra.mxu0 %v3663
      %v3701 = vpop.f32.mrf.mxu0
      %v3702 = vadd.f32 %v3585, %v3701
      %v3703 = vpop.f32.mrf.mxu0
      %v3704 = vadd.f32 %v3587, %v3703
      %3705 = vmatmul.bf16.gmra.mxu0 %v3666
      %v3706 = vpop.f32.mrf.mxu0
      %v3707 = vadd.f32 %v3590, %v3706
      %v3708 = vpop.f32.mrf.mxu0
      %v3709 = vadd.f32 %v3592, %v3708
      %3710 = vmatmul.bf16.gmra.mxu0 %v3669
      %v3711 = vpop.f32.mrf.mxu0
      %v3712 = vadd.f32 %v3595, %v3711
      %v3713 = vpop.f32.mrf.mxu0
      %v3714 = vadd.f32 %v3597, %v3713
      %3715 = vmatmul.bf16.gmra.mxu0 %v3672
      %v3716 = vpop.f32.mrf.mxu0
      %v3717 = vadd.f32 %v3600, %v3716
      %v3718 = vpop.f32.mrf.mxu0
      %v3719 = vadd.f32 %v3602, %v3718
      %3720 = vmatmul.bf16.gmra.mxu0 %v3675
      %v3721 = vpop.f32.mrf.mxu0
      %v3722 = vadd.f32 %v3605, %v3721
      %v3723 = vpop.f32.mrf.mxu0
      %v3724 = vadd.f32 %v3607, %v3723
      %3725 = vdwg.mxu0
      %vm3726 = vcmask 64512
      %3727 = vst.msk [vmem:[#allocation4 + $0x1] sm:$0xff] %vm3726, %v3687
      %3728 = vst.msk [vmem:[#allocation4 + $0x9] sm:$0xff] %vm3726, %v3689
      %3729 = vst.msk [vmem:[#allocation4 + $0x11] sm:$0xff] %vm3726, %v3692
      %3730 = vst.msk [vmem:[#allocation4 + $0x19] sm:$0xff] %vm3726, %v3694
      %3731 = vst.msk [vmem:[#allocation4 + $0x21] sm:$0xff] %vm3726, %v3697
      %3732 = vst.msk [vmem:[#allocation4 + $0x29] sm:$0xff] %vm3726, %v3699
      %3733 = vst.msk [vmem:[#allocation4 + $0x31] sm:$0xff] %vm3726, %v3702
      %3734 = vst.msk [vmem:[#allocation4 + $0x39] sm:$0xff] %vm3726, %v3704
      %3735 = vst.msk [vmem:[#allocation4 + $0x41] sm:$0xff] %vm3726, %v3707
      %3736 = vst.msk [vmem:[#allocation4 + $0x49] sm:$0xff] %vm3726, %v3709
      %3737 = vst.msk [vmem:[#allocation4 + $0x51] sm:$0xff] %vm3726, %v3712
      %3738 = vst.msk [vmem:[#allocation4 + $0x59] sm:$0xff] %vm3726, %v3714
      %3739 = vst.msk [vmem:[#allocation4 + $0x61] sm:$0xff] %vm3726, %v3717
      %3740 = vst.msk [vmem:[#allocation4 + $0x69] sm:$0xff] %vm3726, %v3719
      %3741 = vst.msk [vmem:[#allocation4 + $0x71] sm:$0xff] %vm3726, %v3722
      %3742 = vst.msk [vmem:[#allocation4 + $0x79] sm:$0xff] %vm3726, %v3724
      %v3743 = vld [vmem:[%s61] sm:$0x7]
      %3745 = vset.pattern.permute.xlu0 0
      %3746 = vperm.xlu0 %3745, %v3743
      %v3747 = vpop.permute.xlu0 %3746
      %v3749 = vadd.f32 %v3747, 0.0
      %v3750 = vld [vmem:[%s59] sm:$0x3]
      %v3751 = vld [vmem:[#allocation4 + $0x1] sm:$0xff]
      %v3752 = vld [vmem:[#allocation4 + $0x9] sm:$0xff]
      %v3753 = vld [vmem:[#allocation4 + $0x11] sm:$0xff]
      %v3754 = vld [vmem:[#allocation4 + $0x19] sm:$0xff]
      %v3755 = vld [vmem:[#allocation4 + $0x21] sm:$0xff]
      %v3756 = vld [vmem:[#allocation4 + $0x29] sm:$0xff]
      %v3757 = vld [vmem:[#allocation4 + $0x31] sm:$0xff]
      %v3758 = vld [vmem:[#allocation4 + $0x39] sm:$0xff]
      %v3759 = vld [vmem:[#allocation4 + $0x41] sm:$0xff]
      %v3760 = vld [vmem:[#allocation4 + $0x49] sm:$0xff]
      %v3761 = vld [vmem:[#allocation4 + $0x51] sm:$0xff]
      %v3762 = vld [vmem:[#allocation4 + $0x59] sm:$0xff]
      %v3763 = vld [vmem:[#allocation4 + $0x61] sm:$0xff]
      %v3764 = vld [vmem:[#allocation4 + $0x69] sm:$0xff]
      %v3765 = vld [vmem:[#allocation4 + $0x71] sm:$0xff]
      %v3766 = vld [vmem:[#allocation4 + $0x79] sm:$0xff]
      %v3767 = vpack.c.bf16 %v3752, %v3751
      %v3768 = vpack.c.bf16 %v3754, %v3753
      %v3769 = vpack.c.bf16 %v3756, %v3755
      %v3770 = vpack.c.bf16 %v3758, %v3757
      %v3771 = vpack.c.bf16 %v3760, %v3759
      %v3772 = vpack.c.bf16 %v3762, %v3761
      %v3773 = vpack.c.bf16 %v3764, %v3763
      %v3774 = vpack.c.bf16 %v3766, %v3765
      %v3776 = vsel %vm3726, %v3750, 0
      %v3779 = vsel %vm3726, %v3767, 0
      %v3782 = vsel %vm3726, %v3768, 0
      %v3785 = vsel %vm3726, %v3769, 0
      %v3788 = vsel %vm3726, %v3770, 0
      %v3791 = vsel %vm3726, %v3771, 0
      %v3794 = vsel %vm3726, %v3772, 0
      %v3797 = vsel %vm3726, %v3773, 0
      %v3800 = vsel %vm3726, %v3774, 0
      %3802 = vmatpush.bf16.xpose.msra.mxu0 %v3800
      %3803 = vmatpush.bf16.xpose.msra.mxu0 %v3797
      %3804 = vmatpush.bf16.xpose.msra.mxu0 %v3794
      %3805 = vmatpush.bf16.xpose.msra.mxu0 %v3791
      %3806 = vmatpush.bf16.xpose.msra.mxu0 %v3788
      %3807 = vmatpush.bf16.xpose.msra.mxu0 %v3785
      %3808 = vmatpush.bf16.xpose.msra.mxu0 %v3782
      %3809 = vmatpush.bf16.xpose.msra.mxu0 %v3779
      %3810 = vmatmul.bf16.gmra.mxu0 %v3776
      %v3811 = vpop.f32.mrf.mxu0
      %v3812 = vadd.f32 0.0, %v3811
      %v3813 = vpop.f32.mrf.mxu0
      %3814 = vdwg.mxu0
      %v3815 = vadd.f32 %v3749, %v3812
      %s3816 = scalar_lea.vmem %s59, 2
      %v3817 = vld [vmem:[%s3816] sm:$0x3]
      %v3818 = vld [vmem:[#allocation4 + $0x2] sm:$0xff]
      %v3819 = vld [vmem:[#allocation4 + $0xa] sm:$0xff]
      %v3820 = vld [vmem:[#allocation4 + $0x12] sm:$0xff]
      %v3821 = vld [vmem:[#allocation4 + $0x1a] sm:$0xff]
      %v3822 = vld [vmem:[#allocation4 + $0x22] sm:$0xff]
      %v3823 = vld [vmem:[#allocation4 + $0x2a] sm:$0xff]
      %v3824 = vld [vmem:[#allocation4 + $0x32] sm:$0xff]
      %v3825 = vld [vmem:[#allocation4 + $0x3a] sm:$0xff]
      %v3826 = vld [vmem:[#allocation4 + $0x42] sm:$0xff]
      %v3827 = vld [vmem:[#allocation4 + $0x4a] sm:$0xff]
      %v3828 = vld [vmem:[#allocation4 + $0x52] sm:$0xff]
      %v3829 = vld [vmem:[#allocation4 + $0x5a] sm:$0xff]
      %v3830 = vld [vmem:[#allocation4 + $0x62] sm:$0xff]
      %v3831 = vld [vmem:[#allocation4 + $0x6a] sm:$0xff]
      %v3832 = vld [vmem:[#allocation4 + $0x72] sm:$0xff]
      %v3833 = vld [vmem:[#allocation4 + $0x7a] sm:$0xff]
      %v3834 = vpack.c.bf16 %v3819, %v3818
      %v3835 = vpack.c.bf16 %v3821, %v3820
      %v3836 = vpack.c.bf16 %v3823, %v3822
      %v3837 = vpack.c.bf16 %v3825, %v3824
      %v3838 = vpack.c.bf16 %v3827, %v3826
      %v3839 = vpack.c.bf16 %v3829, %v3828
      %v3840 = vpack.c.bf16 %v3831, %v3830
      %v3841 = vpack.c.bf16 %v3833, %v3832
      %v3843 = vsel %vm3726, %v3817, 0
      %v3846 = vsel %vm3726, %v3834, 0
      %v3849 = vsel %vm3726, %v3835, 0
      %v3852 = vsel %vm3726, %v3836, 0
      %v3855 = vsel %vm3726, %v3837, 0
      %v3858 = vsel %vm3726, %v3838, 0
      %v3861 = vsel %vm3726, %v3839, 0
      %v3864 = vsel %vm3726, %v3840, 0
      %v3867 = vsel %vm3726, %v3841, 0
      %3869 = vmatpush.bf16.xpose.msra.mxu0 %v3867
      %3870 = vmatpush.bf16.xpose.msra.mxu0 %v3864
      %3871 = vmatpush.bf16.xpose.msra.mxu0 %v3861
      %3872 = vmatpush.bf16.xpose.msra.mxu0 %v3858
      %3873 = vmatpush.bf16.xpose.msra.mxu0 %v3855
      %3874 = vmatpush.bf16.xpose.msra.mxu0 %v3852
      %3875 = vmatpush.bf16.xpose.msra.mxu0 %v3849
      %3876 = vmatpush.bf16.xpose.msra.mxu0 %v3846
      %3877 = vmatmul.bf16.gmra.mxu0 %v3843
      %v3878 = vpop.f32.mrf.mxu0
      %v3879 = vadd.f32 0.0, %v3878
      %v3880 = vpop.f32.mrf.mxu0
      %3881 = vdwg.mxu0
      %v3882 = vadd.f32 %v3815, %v3879
      %s3883 = scalar_lea.vmem %s59, 4
      %v3884 = vld [vmem:[%s3883] sm:$0x3]
      %v3885 = vld [vmem:[#allocation4 + $0x3] sm:$0xff]
      %v3886 = vld [vmem:[#allocation4 + $0xb] sm:$0xff]
      %v3887 = vld [vmem:[#allocation4 + $0x13] sm:$0xff]
      %v3888 = vld [vmem:[#allocation4 + $0x1b] sm:$0xff]
      %v3889 = vld [vmem:[#allocation4 + $0x23] sm:$0xff]
      %v3890 = vld [vmem:[#allocation4 + $0x2b] sm:$0xff]
      %v3891 = vld [vmem:[#allocation4 + $0x33] sm:$0xff]
      %v3892 = vld [vmem:[#allocation4 + $0x3b] sm:$0xff]
      %v3893 = vld [vmem:[#allocation4 + $0x43] sm:$0xff]
      %v3894 = vld [vmem:[#allocation4 + $0x4b] sm:$0xff]
      %v3895 = vld [vmem:[#allocation4 + $0x53] sm:$0xff]
      %v3896 = vld [vmem:[#allocation4 + $0x5b] sm:$0xff]
      %v3897 = vld [vmem:[#allocation4 + $0x63] sm:$0xff]
      %v3898 = vld [vmem:[#allocation4 + $0x6b] sm:$0xff]
      %v3899 = vld [vmem:[#allocation4 + $0x73] sm:$0xff]
      %v3900 = vld [vmem:[#allocation4 + $0x7b] sm:$0xff]
      %v3901 = vpack.c.bf16 %v3886, %v3885
      %v3902 = vpack.c.bf16 %v3888, %v3887
      %v3903 = vpack.c.bf16 %v3890, %v3889
      %v3904 = vpack.c.bf16 %v3892, %v3891
      %v3905 = vpack.c.bf16 %v3894, %v3893
      %v3906 = vpack.c.bf16 %v3896, %v3895
      %v3907 = vpack.c.bf16 %v3898, %v3897
      %v3908 = vpack.c.bf16 %v3900, %v3899
      %v3910 = vsel %vm3726, %v3884, 0
      %v3913 = vsel %vm3726, %v3901, 0
      %v3916 = vsel %vm3726, %v3902, 0
      %v3919 = vsel %vm3726, %v3903, 0
      %v3922 = vsel %vm3726, %v3904, 0
      %v3925 = vsel %vm3726, %v3905, 0
      %v3928 = vsel %vm3726, %v3906, 0
      %v3931 = vsel %vm3726, %v3907, 0
      %v3934 = vsel %vm3726, %v3908, 0
      %3936 = vmatpush.bf16.xpose.msra.mxu0 %v3934
      %3937 = vmatpush.bf16.xpose.msra.mxu0 %v3931
      %3938 = vmatpush.bf16.xpose.msra.mxu0 %v3928
      %3939 = vmatpush.bf16.xpose.msra.mxu0 %v3925
      %3940 = vmatpush.bf16.xpose.msra.mxu0 %v3922
      %3941 = vmatpush.bf16.xpose.msra.mxu0 %v3919
      %3942 = vmatpush.bf16.xpose.msra.mxu0 %v3916
      %3943 = vmatpush.bf16.xpose.msra.mxu0 %v3913
      %3944 = vmatmul.bf16.gmra.mxu0 %v3910
      %v3945 = vpop.f32.mrf.mxu0
      %v3946 = vadd.f32 0.0, %v3945
      %v3947 = vpop.f32.mrf.mxu0
      %3948 = vdwg.mxu0
      %v3949 = vadd.f32 %v3882, %v3946
      %s3950 = scalar_lea.vmem %s59, 6
      %v3951 = vld [vmem:[%s3950] sm:$0x3]
      %v3952 = vld [vmem:[#allocation4 + $0x4] sm:$0xff]
      %v3953 = vld [vmem:[#allocation4 + $0xc] sm:$0xff]
      %v3954 = vld [vmem:[#allocation4 + $0x14] sm:$0xff]
      %v3955 = vld [vmem:[#allocation4 + $0x1c] sm:$0xff]
      %v3956 = vld [vmem:[#allocation4 + $0x24] sm:$0xff]
      %v3957 = vld [vmem:[#allocation4 + $0x2c] sm:$0xff]
      %v3958 = vld [vmem:[#allocation4 + $0x34] sm:$0xff]
      %v3959 = vld [vmem:[#allocation4 + $0x3c] sm:$0xff]
      %v3960 = vld [vmem:[#allocation4 + $0x44] sm:$0xff]
      %v3961 = vld [vmem:[#allocation4 + $0x4c] sm:$0xff]
      %v3962 = vld [vmem:[#allocation4 + $0x54] sm:$0xff]
      %v3963 = vld [vmem:[#allocation4 + $0x5c] sm:$0xff]
      %v3964 = vld [vmem:[#allocation4 + $0x64] sm:$0xff]
      %v3965 = vld [vmem:[#allocation4 + $0x6c] sm:$0xff]
      %v3966 = vld [vmem:[#allocation4 + $0x74] sm:$0xff]
      %v3967 = vld [vmem:[#allocation4 + $0x7c] sm:$0xff]
      %v3968 = vpack.c.bf16 %v3953, %v3952
      %v3969 = vpack.c.bf16 %v3955, %v3954
      %v3970 = vpack.c.bf16 %v3957, %v3956
      %v3971 = vpack.c.bf16 %v3959, %v3958
      %v3972 = vpack.c.bf16 %v3961, %v3960
      %v3973 = vpack.c.bf16 %v3963, %v3962
      %v3974 = vpack.c.bf16 %v3965, %v3964
      %v3975 = vpack.c.bf16 %v3967, %v3966
      %v3977 = vsel %vm3726, %v3951, 0
      %v3980 = vsel %vm3726, %v3968, 0
      %v3983 = vsel %vm3726, %v3969, 0
      %v3986 = vsel %vm3726, %v3970, 0
      %v3989 = vsel %vm3726, %v3971, 0
      %v3992 = vsel %vm3726, %v3972, 0
      %v3995 = vsel %vm3726, %v3973, 0
      %v3998 = vsel %vm3726, %v3974, 0
      %v4001 = vsel %vm3726, %v3975, 0
      %4003 = vmatpush.bf16.xpose.msra.mxu0 %v4001
      %4004 = vmatpush.bf16.xpose.msra.mxu0 %v3998
      %4005 = vmatpush.bf16.xpose.msra.mxu0 %v3995
      %4006 = vmatpush.bf16.xpose.msra.mxu0 %v3992
      %4007 = vmatpush.bf16.xpose.msra.mxu0 %v3989
      %4008 = vmatpush.bf16.xpose.msra.mxu0 %v3986
      %4009 = vmatpush.bf16.xpose.msra.mxu0 %v3983
      %4010 = vmatpush.bf16.xpose.msra.mxu0 %v3980
      %4011 = vmatmul.bf16.gmra.mxu0 %v3977
      %v4012 = vpop.f32.mrf.mxu0
      %v4013 = vadd.f32 0.0, %v4012
      %v4014 = vpop.f32.mrf.mxu0
      %4015 = vdwg.mxu0
      %v4016 = vadd.f32 %v3949, %v4013
      %s4017 = scalar_lea.vmem %s59, 8
      %v4018 = vld [vmem:[%s4017] sm:$0x3]
      %v4019 = vld [vmem:[#allocation4 + $0x5] sm:$0xff]
      %v4020 = vld [vmem:[#allocation4 + $0xd] sm:$0xff]
      %v4021 = vld [vmem:[#allocation4 + $0x15] sm:$0xff]
      %v4022 = vld [vmem:[#allocation4 + $0x1d] sm:$0xff]
      %v4023 = vld [vmem:[#allocation4 + $0x25] sm:$0xff]
      %v4024 = vld [vmem:[#allocation4 + $0x2d] sm:$0xff]
      %v4025 = vld [vmem:[#allocation4 + $0x35] sm:$0xff]
      %v4026 = vld [vmem:[#allocation4 + $0x3d] sm:$0xff]
      %v4027 = vld [vmem:[#allocation4 + $0x45] sm:$0xff]
      %v4028 = vld [vmem:[#allocation4 + $0x4d] sm:$0xff]
      %v4029 = vld [vmem:[#allocation4 + $0x55] sm:$0xff]
      %v4030 = vld [vmem:[#allocation4 + $0x5d] sm:$0xff]
      %v4031 = vld [vmem:[#allocation4 + $0x65] sm:$0xff]
      %v4032 = vld [vmem:[#allocation4 + $0x6d] sm:$0xff]
      %v4033 = vld [vmem:[#allocation4 + $0x75] sm:$0xff]
      %v4034 = vld [vmem:[#allocation4 + $0x7d] sm:$0xff]
      %v4035 = vpack.c.bf16 %v4020, %v4019
      %v4036 = vpack.c.bf16 %v4022, %v4021
      %v4037 = vpack.c.bf16 %v4024, %v4023
      %v4038 = vpack.c.bf16 %v4026, %v4025
      %v4039 = vpack.c.bf16 %v4028, %v4027
      %v4040 = vpack.c.bf16 %v4030, %v4029
      %v4041 = vpack.c.bf16 %v4032, %v4031
      %v4042 = vpack.c.bf16 %v4034, %v4033
      %v4044 = vsel %vm3726, %v4018, 0
      %v4047 = vsel %vm3726, %v4035, 0
      %v4050 = vsel %vm3726, %v4036, 0
      %v4053 = vsel %vm3726, %v4037, 0
      %v4056 = vsel %vm3726, %v4038, 0
      %v4059 = vsel %vm3726, %v4039, 0
      %v4062 = vsel %vm3726, %v4040, 0
      %v4065 = vsel %vm3726, %v4041, 0
      %v4068 = vsel %vm3726, %v4042, 0
      %4070 = vmatpush.bf16.xpose.msra.mxu0 %v4068
      %4071 = vmatpush.bf16.xpose.msra.mxu0 %v4065
      %4072 = vmatpush.bf16.xpose.msra.mxu0 %v4062
      %4073 = vmatpush.bf16.xpose.msra.mxu0 %v4059
      %4074 = vmatpush.bf16.xpose.msra.mxu0 %v4056
      %4075 = vmatpush.bf16.xpose.msra.mxu0 %v4053
      %4076 = vmatpush.bf16.xpose.msra.mxu0 %v4050
      %4077 = vmatpush.bf16.xpose.msra.mxu0 %v4047
      %4078 = vmatmul.bf16.gmra.mxu0 %v4044
      %v4079 = vpop.f32.mrf.mxu0
      %v4080 = vadd.f32 0.0, %v4079
      %v4081 = vpop.f32.mrf.mxu0
      %4082 = vdwg.mxu0
      %v4083 = vadd.f32 %v4016, %v4080
      %s4084 = scalar_lea.vmem %s59, 10
      %v4085 = vld [vmem:[%s4084] sm:$0x3]
      %v4086 = vld [vmem:[#allocation4 + $0x6] sm:$0xff]
      %v4087 = vld [vmem:[#allocation4 + $0xe] sm:$0xff]
      %v4088 = vld [vmem:[#allocation4 + $0x16] sm:$0xff]
      %v4089 = vld [vmem:[#allocation4 + $0x1e] sm:$0xff]
      %v4090 = vld [vmem:[#allocation4 + $0x26] sm:$0xff]
      %v4091 = vld [vmem:[#allocation4 + $0x2e] sm:$0xff]
      %v4092 = vld [vmem:[#allocation4 + $0x36] sm:$0xff]
      %v4093 = vld [vmem:[#allocation4 + $0x3e] sm:$0xff]
      %v4094 = vld [vmem:[#allocation4 + $0x46] sm:$0xff]
      %v4095 = vld [vmem:[#allocation4 + $0x4e] sm:$0xff]
      %v4096 = vld [vmem:[#allocation4 + $0x56] sm:$0xff]
      %v4097 = vld [vmem:[#allocation4 + $0x5e] sm:$0xff]
      %v4098 = vld [vmem:[#allocation4 + $0x66] sm:$0xff]
      %v4099 = vld [vmem:[#allocation4 + $0x6e] sm:$0xff]
      %v4100 = vld [vmem:[#allocation4 + $0x76] sm:$0xff]
      %v4101 = vld [vmem:[#allocation4 + $0x7e] sm:$0xff]
      %v4102 = vpack.c.bf16 %v4087, %v4086
      %v4103 = vpack.c.bf16 %v4089, %v4088
      %v4104 = vpack.c.bf16 %v4091, %v4090
      %v4105 = vpack.c.bf16 %v4093, %v4092
      %v4106 = vpack.c.bf16 %v4095, %v4094
      %v4107 = vpack.c.bf16 %v4097, %v4096
      %v4108 = vpack.c.bf16 %v4099, %v4098
      %v4109 = vpack.c.bf16 %v4101, %v4100
      %v4111 = vsel %vm3726, %v4085, 0
      %v4114 = vsel %vm3726, %v4102, 0
      %v4117 = vsel %vm3726, %v4103, 0
      %v4120 = vsel %vm3726, %v4104, 0
      %v4123 = vsel %vm3726, %v4105, 0
      %v4126 = vsel %vm3726, %v4106, 0
      %v4129 = vsel %vm3726, %v4107, 0
      %v4132 = vsel %vm3726, %v4108, 0
      %v4135 = vsel %vm3726, %v4109, 0
      %4137 = vmatpush.bf16.xpose.msra.mxu0 %v4135
      %4138 = vmatpush.bf16.xpose.msra.mxu0 %v4132
      %4139 = vmatpush.bf16.xpose.msra.mxu0 %v4129
      %4140 = vmatpush.bf16.xpose.msra.mxu0 %v4126
      %4141 = vmatpush.bf16.xpose.msra.mxu0 %v4123
      %4142 = vmatpush.bf16.xpose.msra.mxu0 %v4120
      %4143 = vmatpush.bf16.xpose.msra.mxu0 %v4117
      %4144 = vmatpush.bf16.xpose.msra.mxu0 %v4114
      %4145 = vmatmul.bf16.gmra.mxu0 %v4111
      %v4146 = vpop.f32.mrf.mxu0
      %v4147 = vadd.f32 0.0, %v4146
      %v4148 = vpop.f32.mrf.mxu0
      %4149 = vdwg.mxu0
      %v4150 = vadd.f32 %v4083, %v4147
      %s4151 = scalar_lea.vmem %s59, 12
      %v4152 = vld [vmem:[%s4151] sm:$0x3]
      %v4153 = vld [vmem:[#allocation4 + $0x7] sm:$0xff]
      %v4154 = vld [vmem:[#allocation4 + $0xf] sm:$0xff]
      %v4155 = vld [vmem:[#allocation4 + $0x17] sm:$0xff]
      %v4156 = vld [vmem:[#allocation4 + $0x1f] sm:$0xff]
      %v4157 = vld [vmem:[#allocation4 + $0x27] sm:$0xff]
      %v4158 = vld [vmem:[#allocation4 + $0x2f] sm:$0xff]
      %v4159 = vld [vmem:[#allocation4 + $0x37] sm:$0xff]
      %v4160 = vld [vmem:[#allocation4 + $0x3f] sm:$0xff]
      %v4161 = vld [vmem:[#allocation4 + $0x47] sm:$0xff]
      %v4162 = vld [vmem:[#allocation4 + $0x4f] sm:$0xff]
      %v4163 = vld [vmem:[#allocation4 + $0x57] sm:$0xff]
      %v4164 = vld [vmem:[#allocation4 + $0x5f] sm:$0xff]
      %v4165 = vld [vmem:[#allocation4 + $0x67] sm:$0xff]
      %v4166 = vld [vmem:[#allocation4 + $0x6f] sm:$0xff]
      %v4167 = vld [vmem:[#allocation4 + $0x77] sm:$0xff]
      %v4168 = vld [vmem:[#allocation4 + $0x7f] sm:$0xff]
      %v4169 = vpack.c.bf16 %v4154, %v4153
      %v4170 = vpack.c.bf16 %v4156, %v4155
      %v4171 = vpack.c.bf16 %v4158, %v4157
      %v4172 = vpack.c.bf16 %v4160, %v4159
      %v4173 = vpack.c.bf16 %v4162, %v4161
      %v4174 = vpack.c.bf16 %v4164, %v4163
      %v4175 = vpack.c.bf16 %v4166, %v4165
      %v4176 = vpack.c.bf16 %v4168, %v4167
      %v4178 = vsel %vm3726, %v4152, 0
      %v4181 = vsel %vm3726, %v4169, 0
      %v4184 = vsel %vm3726, %v4170, 0
      %v4187 = vsel %vm3726, %v4171, 0
      %v4190 = vsel %vm3726, %v4172, 0
      %v4193 = vsel %vm3726, %v4173, 0
      %v4196 = vsel %vm3726, %v4174, 0
      %v4199 = vsel %vm3726, %v4175, 0
      %v4202 = vsel %vm3726, %v4176, 0
      %4204 = vmatpush.bf16.xpose.msra.mxu0 %v4202
      %4205 = vmatpush.bf16.xpose.msra.mxu0 %v4199
      %4206 = vmatpush.bf16.xpose.msra.mxu0 %v4196
      %4207 = vmatpush.bf16.xpose.msra.mxu0 %v4193
      %4208 = vmatpush.bf16.xpose.msra.mxu0 %v4190
      %4209 = vmatpush.bf16.xpose.msra.mxu0 %v4187
      %4210 = vmatpush.bf16.xpose.msra.mxu0 %v4184
      %4211 = vmatpush.bf16.xpose.msra.mxu0 %v4181
      %4212 = vmatmul.bf16.gmra.mxu0 %v4178
      %v4213 = vpop.f32.mrf.mxu0
      %v4214 = vadd.f32 0.0, %v4213
      %v4215 = vpop.f32.mrf.mxu0
      %4216 = vdwg.mxu0
      %v4217 = vadd.f32 %v4150, %v4214
      %s4218 = scalar_lea.vmem %s59, 14
      %v4219 = vld [vmem:[%s4218] sm:$0x3]
      %v4220 = vld [vmem:[#allocation4 + $0x8] sm:$0xff]
      %v4221 = vld [vmem:[#allocation4 + $0x10] sm:$0xff]
      %v4222 = vld [vmem:[#allocation4 + $0x18] sm:$0xff]
      %v4223 = vld [vmem:[#allocation4 + $0x20] sm:$0xff]
      %v4224 = vld [vmem:[#allocation4 + $0x28] sm:$0xff]
      %v4225 = vld [vmem:[#allocation4 + $0x30] sm:$0xff]
      %v4226 = vld [vmem:[#allocation4 + $0x38] sm:$0xff]
      %v4227 = vld [vmem:[#allocation4 + $0x40] sm:$0xff]
      %v4228 = vld [vmem:[#allocation4 + $0x48] sm:$0xff]
      %v4229 = vld [vmem:[#allocation4 + $0x50] sm:$0xff]
      %v4230 = vld [vmem:[#allocation4 + $0x58] sm:$0xff]
      %v4231 = vld [vmem:[#allocation4 + $0x60] sm:$0xff]
      %v4232 = vld [vmem:[#allocation4 + $0x68] sm:$0xff]
      %v4233 = vld [vmem:[#allocation4 + $0x70] sm:$0xff]
      %v4234 = vld [vmem:[#allocation4 + $0x78] sm:$0xff]
      %v4235 = vld [vmem:[#allocation4 + $0x80] sm:$0xff]
      %v4236 = vpack.c.bf16 %v4221, %v4220
      %v4237 = vpack.c.bf16 %v4223, %v4222
      %v4238 = vpack.c.bf16 %v4225, %v4224
      %v4239 = vpack.c.bf16 %v4227, %v4226
      %v4240 = vpack.c.bf16 %v4229, %v4228
      %v4241 = vpack.c.bf16 %v4231, %v4230
      %v4242 = vpack.c.bf16 %v4233, %v4232
      %v4243 = vpack.c.bf16 %v4235, %v4234
      %v4245 = vsel %vm3726, %v4219, 0
      %v4248 = vsel %vm3726, %v4236, 0
      %v4251 = vsel %vm3726, %v4237, 0
      %v4254 = vsel %vm3726, %v4238, 0
      %v4257 = vsel %vm3726, %v4239, 0
      %v4260 = vsel %vm3726, %v4240, 0
      %v4263 = vsel %vm3726, %v4241, 0
      %v4266 = vsel %vm3726, %v4242, 0
      %v4269 = vsel %vm3726, %v4243, 0
      %4271 = vmatpush.bf16.xpose.msra.mxu0 %v4269
      %4272 = vmatpush.bf16.xpose.msra.mxu0 %v4266
      %4273 = vmatpush.bf16.xpose.msra.mxu0 %v4263
      %4274 = vmatpush.bf16.xpose.msra.mxu0 %v4260
      %4275 = vmatpush.bf16.xpose.msra.mxu0 %v4257
      %4276 = vmatpush.bf16.xpose.msra.mxu0 %v4254
      %4277 = vmatpush.bf16.xpose.msra.mxu0 %v4251
      %4278 = vmatpush.bf16.xpose.msra.mxu0 %v4248
      %4279 = vmatmul.bf16.gmra.mxu0 %v4245
      %v4280 = vpop.f32.mrf.mxu0
      %v4281 = vadd.f32 0.0, %v4280
      %v4282 = vpop.f32.mrf.mxu0
      %4283 = vdwg.mxu0
      %v4284 = vadd.f32 %v4217, %v4281
      %s4285 = scalar_lea.vmem %s59, 16
      %v4286 = vld [vmem:[%s4285] sm:$0x3]
      %v4287 = vld [vmem:[#allocation4 + $0x9] sm:$0xff]
      %v4288 = vld [vmem:[#allocation4 + $0x11] sm:$0xff]
      %v4289 = vld [vmem:[#allocation4 + $0x19] sm:$0xff]
      %v4290 = vld [vmem:[#allocation4 + $0x21] sm:$0xff]
      %v4291 = vld [vmem:[#allocation4 + $0x29] sm:$0xff]
      %v4292 = vld [vmem:[#allocation4 + $0x31] sm:$0xff]
      %v4293 = vld [vmem:[#allocation4 + $0x39] sm:$0xff]
      %v4294 = vld [vmem:[#allocation4 + $0x41] sm:$0xff]
      %v4295 = vld [vmem:[#allocation4 + $0x49] sm:$0xff]
      %v4296 = vld [vmem:[#allocation4 + $0x51] sm:$0xff]
      %v4297 = vld [vmem:[#allocation4 + $0x59] sm:$0xff]
      %v4298 = vld [vmem:[#allocation4 + $0x61] sm:$0xff]
      %v4299 = vld [vmem:[#allocation4 + $0x69] sm:$0xff]
      %v4300 = vld [vmem:[#allocation4 + $0x71] sm:$0xff]
      %v4301 = vld [vmem:[#allocation4 + $0x79] sm:$0xff]
      %v4302 = vld [vmem:[#allocation4 + $0x81] sm:$0xff]
      %v4303 = vpack.c.bf16 %v4288, %v4287
      %v4304 = vpack.c.bf16 %v4290, %v4289
      %v4305 = vpack.c.bf16 %v4292, %v4291
      %v4306 = vpack.c.bf16 %v4294, %v4293
      %v4307 = vpack.c.bf16 %v4296, %v4295
      %v4308 = vpack.c.bf16 %v4298, %v4297
      %v4309 = vpack.c.bf16 %v4300, %v4299
      %v4310 = vpack.c.bf16 %v4302, %v4301
      %v4312 = vsel %vm3726, %v4286, 0
      %v4315 = vsel %vm3726, %v4303, 0
      %v4318 = vsel %vm3726, %v4304, 0
      %v4321 = vsel %vm3726, %v4305, 0
      %v4324 = vsel %vm3726, %v4306, 0
      %v4327 = vsel %vm3726, %v4307, 0
      %v4330 = vsel %vm3726, %v4308, 0
      %v4333 = vsel %vm3726, %v4309, 0
      %v4336 = vsel %vm3726, %v4310, 0
      %4338 = vmatpush.bf16.xpose.msra.mxu0 %v4336
      %4339 = vmatpush.bf16.xpose.msra.mxu0 %v4333
      %4340 = vmatpush.bf16.xpose.msra.mxu0 %v4330
      %4341 = vmatpush.bf16.xpose.msra.mxu0 %v4327
      %4342 = vmatpush.bf16.xpose.msra.mxu0 %v4324
      %4343 = vmatpush.bf16.xpose.msra.mxu0 %v4321
      %4344 = vmatpush.bf16.xpose.msra.mxu0 %v4318
      %4345 = vmatpush.bf16.xpose.msra.mxu0 %v4315
      %4346 = vmatmul.bf16.gmra.mxu0 %v4312
      %v4347 = vpop.f32.mrf.mxu0
      %v4348 = vadd.f32 0.0, %v4347
      %v4349 = vpop.f32.mrf.mxu0
      %4350 = vdwg.mxu0
      %v4351 = vadd.f32 %v4284, %v4348
      %s4352 = scalar_lea.vmem %s59, 18
      %v4353 = vld [vmem:[%s4352] sm:$0x3]
      %v4354 = vld [vmem:[#allocation4 + $0xa] sm:$0xff]
      %v4355 = vld [vmem:[#allocation4 + $0x12] sm:$0xff]
      %v4356 = vld [vmem:[#allocation4 + $0x1a] sm:$0xff]
      %v4357 = vld [vmem:[#allocation4 + $0x22] sm:$0xff]
      %v4358 = vld [vmem:[#allocation4 + $0x2a] sm:$0xff]
      %v4359 = vld [vmem:[#allocation4 + $0x32] sm:$0xff]
      %v4360 = vld [vmem:[#allocation4 + $0x3a] sm:$0xff]
      %v4361 = vld [vmem:[#allocation4 + $0x42] sm:$0xff]
      %v4362 = vld [vmem:[#allocation4 + $0x4a] sm:$0xff]
      %v4363 = vld [vmem:[#allocation4 + $0x52] sm:$0xff]
      %v4364 = vld [vmem:[#allocation4 + $0x5a] sm:$0xff]
      %v4365 = vld [vmem:[#allocation4 + $0x62] sm:$0xff]
      %v4366 = vld [vmem:[#allocation4 + $0x6a] sm:$0xff]
      %v4367 = vld [vmem:[#allocation4 + $0x72] sm:$0xff]
      %v4368 = vld [vmem:[#allocation4 + $0x7a] sm:$0xff]
      %v4369 = vld [vmem:[#allocation4 + $0x82] sm:$0xff]
      %v4370 = vpack.c.bf16 %v4355, %v4354
      %v4371 = vpack.c.bf16 %v4357, %v4356
      %v4372 = vpack.c.bf16 %v4359, %v4358
      %v4373 = vpack.c.bf16 %v4361, %v4360
      %v4374 = vpack.c.bf16 %v4363, %v4362
      %v4375 = vpack.c.bf16 %v4365, %v4364
      %v4376 = vpack.c.bf16 %v4367, %v4366
      %v4377 = vpack.c.bf16 %v4369, %v4368
      %v4379 = vsel %vm3726, %v4353, 0
      %v4382 = vsel %vm3726, %v4370, 0
      %v4385 = vsel %vm3726, %v4371, 0
      %v4388 = vsel %vm3726, %v4372, 0
      %v4391 = vsel %vm3726, %v4373, 0
      %v4394 = vsel %vm3726, %v4374, 0
      %v4397 = vsel %vm3726, %v4375, 0
      %v4400 = vsel %vm3726, %v4376, 0
      %v4403 = vsel %vm3726, %v4377, 0
      %4405 = vmatpush.bf16.xpose.msra.mxu0 %v4403
      %4406 = vmatpush.bf16.xpose.msra.mxu0 %v4400
      %4407 = vmatpush.bf16.xpose.msra.mxu0 %v4397
      %4408 = vmatpush.bf16.xpose.msra.mxu0 %v4394
      %4409 = vmatpush.bf16.xpose.msra.mxu0 %v4391
      %4410 = vmatpush.bf16.xpose.msra.mxu0 %v4388
      %4411 = vmatpush.bf16.xpose.msra.mxu0 %v4385
      %4412 = vmatpush.bf16.xpose.msra.mxu0 %v4382
      %4413 = vmatmul.bf16.gmra.mxu0 %v4379
      %v4414 = vpop.f32.mrf.mxu0
      %v4415 = vadd.f32 0.0, %v4414
      %v4416 = vpop.f32.mrf.mxu0
      %4417 = vdwg.mxu0
      %v4418 = vadd.f32 %v4351, %v4415
      %s4419 = scalar_lea.vmem %s59, 20
      %v4420 = vld [vmem:[%s4419] sm:$0x3]
      %v4421 = vld [vmem:[#allocation4 + $0xb] sm:$0xff]
      %v4422 = vld [vmem:[#allocation4 + $0x13] sm:$0xff]
      %v4423 = vld [vmem:[#allocation4 + $0x1b] sm:$0xff]
      %v4424 = vld [vmem:[#allocation4 + $0x23] sm:$0xff]
      %v4425 = vld [vmem:[#allocation4 + $0x2b] sm:$0xff]
      %v4426 = vld [vmem:[#allocation4 + $0x33] sm:$0xff]
      %v4427 = vld [vmem:[#allocation4 + $0x3b] sm:$0xff]
      %v4428 = vld [vmem:[#allocation4 + $0x43] sm:$0xff]
      %v4429 = vld [vmem:[#allocation4 + $0x4b] sm:$0xff]
      %v4430 = vld [vmem:[#allocation4 + $0x53] sm:$0xff]
      %v4431 = vld [vmem:[#allocation4 + $0x5b] sm:$0xff]
      %v4432 = vld [vmem:[#allocation4 + $0x63] sm:$0xff]
      %v4433 = vld [vmem:[#allocation4 + $0x6b] sm:$0xff]
      %v4434 = vld [vmem:[#allocation4 + $0x73] sm:$0xff]
      %v4435 = vld [vmem:[#allocation4 + $0x7b] sm:$0xff]
      %v4436 = vld [vmem:[#allocation4 + $0x83] sm:$0xff]
      %v4437 = vpack.c.bf16 %v4422, %v4421
      %v4438 = vpack.c.bf16 %v4424, %v4423
      %v4439 = vpack.c.bf16 %v4426, %v4425
      %v4440 = vpack.c.bf16 %v4428, %v4427
      %v4441 = vpack.c.bf16 %v4430, %v4429
      %v4442 = vpack.c.bf16 %v4432, %v4431
      %v4443 = vpack.c.bf16 %v4434, %v4433
      %v4444 = vpack.c.bf16 %v4436, %v4435
      %v4446 = vsel %vm3726, %v4420, 0
      %v4449 = vsel %vm3726, %v4437, 0
      %v4452 = vsel %vm3726, %v4438, 0
      %v4455 = vsel %vm3726, %v4439, 0
      %v4458 = vsel %vm3726, %v4440, 0
      %v4461 = vsel %vm3726, %v4441, 0
      %v4464 = vsel %vm3726, %v4442, 0
      %v4467 = vsel %vm3726, %v4443, 0
      %v4470 = vsel %vm3726, %v4444, 0
      %4472 = vmatpush.bf16.xpose.msra.mxu0 %v4470
      %4473 = vmatpush.bf16.xpose.msra.mxu0 %v4467
      %4474 = vmatpush.bf16.xpose.msra.mxu0 %v4464
      %4475 = vmatpush.bf16.xpose.msra.mxu0 %v4461
      %4476 = vmatpush.bf16.xpose.msra.mxu0 %v4458
      %4477 = vmatpush.bf16.xpose.msra.mxu0 %v4455
      %4478 = vmatpush.bf16.xpose.msra.mxu0 %v4452
      %4479 = vmatpush.bf16.xpose.msra.mxu0 %v4449
      %4480 = vmatmul.bf16.gmra.mxu0 %v4446
      %v4481 = vpop.f32.mrf.mxu0
      %v4482 = vadd.f32 0.0, %v4481
      %v4483 = vpop.f32.mrf.mxu0
      %4484 = vdwg.mxu0
      %v4485 = vadd.f32 %v4418, %v4482
      %s4486 = scalar_lea.vmem %s59, 22
      %v4487 = vld [vmem:[%s4486] sm:$0x3]
      %v4488 = vld [vmem:[#allocation4 + $0xc] sm:$0xff]
      %v4489 = vld [vmem:[#allocation4 + $0x14] sm:$0xff]
      %v4490 = vld [vmem:[#allocation4 + $0x1c] sm:$0xff]
      %v4491 = vld [vmem:[#allocation4 + $0x24] sm:$0xff]
      %v4492 = vld [vmem:[#allocation4 + $0x2c] sm:$0xff]
      %v4493 = vld [vmem:[#allocation4 + $0x34] sm:$0xff]
      %v4494 = vld [vmem:[#allocation4 + $0x3c] sm:$0xff]
      %v4495 = vld [vmem:[#allocation4 + $0x44] sm:$0xff]
      %v4496 = vld [vmem:[#allocation4 + $0x4c] sm:$0xff]
      %v4497 = vld [vmem:[#allocation4 + $0x54] sm:$0xff]
      %v4498 = vld [vmem:[#allocation4 + $0x5c] sm:$0xff]
      %v4499 = vld [vmem:[#allocation4 + $0x64] sm:$0xff]
      %v4500 = vld [vmem:[#allocation4 + $0x6c] sm:$0xff]
      %v4501 = vld [vmem:[#allocation4 + $0x74] sm:$0xff]
      %v4502 = vld [vmem:[#allocation4 + $0x7c] sm:$0xff]
      %v4503 = vld [vmem:[#allocation4 + $0x84] sm:$0xff]
      %v4504 = vpack.c.bf16 %v4489, %v4488
      %v4505 = vpack.c.bf16 %v4491, %v4490
      %v4506 = vpack.c.bf16 %v4493, %v4492
      %v4507 = vpack.c.bf16 %v4495, %v4494
      %v4508 = vpack.c.bf16 %v4497, %v4496
      %v4509 = vpack.c.bf16 %v4499, %v4498
      %v4510 = vpack.c.bf16 %v4501, %v4500
      %v4511 = vpack.c.bf16 %v4503, %v4502
      %v4513 = vsel %vm3726, %v4487, 0
      %v4516 = vsel %vm3726, %v4504, 0
      %v4519 = vsel %vm3726, %v4505, 0
      %v4522 = vsel %vm3726, %v4506, 0
      %v4525 = vsel %vm3726, %v4507, 0
      %v4528 = vsel %vm3726, %v4508, 0
      %v4531 = vsel %vm3726, %v4509, 0
      %v4534 = vsel %vm3726, %v4510, 0
      %v4537 = vsel %vm3726, %v4511, 0
      %4539 = vmatpush.bf16.xpose.msra.mxu0 %v4537
      %4540 = vmatpush.bf16.xpose.msra.mxu0 %v4534
      %4541 = vmatpush.bf16.xpose.msra.mxu0 %v4531
      %4542 = vmatpush.bf16.xpose.msra.mxu0 %v4528
      %4543 = vmatpush.bf16.xpose.msra.mxu0 %v4525
      %4544 = vmatpush.bf16.xpose.msra.mxu0 %v4522
      %4545 = vmatpush.bf16.xpose.msra.mxu0 %v4519
      %4546 = vmatpush.bf16.xpose.msra.mxu0 %v4516
      %4547 = vmatmul.bf16.gmra.mxu0 %v4513
      %v4548 = vpop.f32.mrf.mxu0
      %v4549 = vadd.f32 0.0, %v4548
      %v4550 = vpop.f32.mrf.mxu0
      %4551 = vdwg.mxu0
      %v4552 = vadd.f32 %v4485, %v4549
      %v4553 = vxor.u32 %v4552, 2147483648
      %v4554 = vmul.f32 %v4553, 1.442695
      %v4555 = vpow.pop %v4554
      %v4556 = vadd.f32 %v4555, 1.0
      %v4557 = vrcp.pop %v4556
      %v4558 = vmul.f32 %v4556, %v4557
      %v4559 = vsub.f32 1.0, %v4558
      %v4560 = vmul.f32 %v4557, %v4559
      %v4561 = vadd.f32 %v4557, %v4560
      %vm4562 = vweird.f32 %v4556
      %vm4563 = vweird.f32 %v4557
      %vm4564 = vmor %vm4562, %vm4563
      %v4565 = vsel %vm4564, %v4557, %v4561
      %v4566 = vand.u32 2147483647, %v4556
      %vm4567 = vcmp.eq.f32.partialorder %v4566, 8.507059e+37
      %v4568 = vand.u32 %v4556, 2147483648
      %v4569 = vor.u32 1.1754944e-38, %v4568
      %v4570 = vsel %vm4567, %v4569, %v4565
      %v4571 = vmul.f32 1.0, %v4570
      %v4573 = vrot.slane %v4571, 7
      %v4575 = vmul.f32 %v4571, %v4573
      %v4576 = vrot.slane %v4571, 6
      %v4578 = vmul.f32 %v4571, %v4576
      %vm4579 = vcmask 1040384
      %v4580 = vsel %vm4579, %v4571, %v4575
      %vm4581 = vcmask 1041408
      %v4582 = vsel %vm4581, %v4580, %v4578
      %4583 = vst [vmem:[%s956] sm:$0x7] %v4582
      %p4584 = scmp.lt.s32.totalorder %s74, 1
      %s4585 = scalar_select %p4584, %s74, 1
      %s4586 = smul.addr %s4585, 4
      %s4587 = scalar_lea.vmem %s63, %s4586
      // Predicated region
      $region145: #{heimdall_detector_picker.1} parent=143 // pred_check
        %p4588 = pneg %p748
      $region146: #{heimdall_detector_picker.1} parent=143 // pred_check_branch
        %4590 = sbr.rel (%p4588) target = $region148
      $region147: #{heimdall_detector_picker.1} parent=143 // pred_region
        _
      $region148: #{heimdall_detector_picker.1} parent=143 // pred_fallthru
        _
    $region144: #{heimdall_detector_picker.1} parent=5 // pred_fallthru
      _
    %p4591 = scmp.le.s32.totalorder 2, %s69
    // Predicated region
    $region149: #{heimdall_detector_picker.1} parent=5 // pred_check
      %p4592 = pneg %p4591
    $region150: #{heimdall_detector_picker.1} parent=5 // pred_check_branch
      %4594 = sbr.rel (%p4592) target = $region152
    $region151: #{heimdall_detector_picker.1} parent=5 // pred_region
      %s4595 = ssub.s32 %s69, 2
      // Predicated region
      $region153: #{heimdall_detector_picker.1} parent=151 // pred_check
        %p4596 = pneg %p754
      $region154: #{heimdall_detector_picker.1} parent=151 // pred_check_branch
        %4598 = sbr.rel (%p4596) target = $region156
      $region155: #{heimdall_detector_picker.1} parent=151 // pred_region
        %p4599 = scmp.lt.s32.totalorder %s75, 1
        %s4600 = scalar_select %p4599, %s75, 1
        %s4601 = smul.addr %s4600, 4
        %s4602 = scalar_lea.vmem %s63, %s4601
      $region156: #{heimdall_detector_picker.1} parent=151 // pred_fallthru
        _
    $region152: #{heimdall_detector_picker.1} parent=5 // pred_fallthru
      _
  $region6: #{heimdall_detector_picker.1} parent=0 // loop_footer
    %s73 = sadd.s32 1, %s69
  $region7: #{heimdall_detector_picker.1} parent=0 // loop_footer_branch
    %68 = sbr.rel target = $region3
  $region8: #{heimdall_detector_picker.1} parent=0 // loop_exit
    _

</llo_original>
